<compile_context>
chip_gen: v5e
topology: v5e:2x2
jax: 0.10.0
libtpu: 0.0.40
codegen_flags: <defaults>
</compile_context>

<pallas_src>
import functools

import numpy as np
import jax
import jax.numpy as jnp
from jax.experimental import pallas as pl
from jax.experimental.pallas import tpu as pltpu


# ----------------------------------------------------------------------------
# Parameter construction (deterministic, matches the torch module's __init__)
# ----------------------------------------------------------------------------
def _hann_periodic(n):
    """scipy.signal.get_window('hann', n, fftbins=True)."""
    i = np.arange(n)
    return (0.5 - 0.5 * np.cos(2.0 * np.pi * i / n)).astype(np.float32)


def _irfft_basis(n_fft):
    """Real cos / sin bases so that irfft(X)[n] = Re(X) @ cosb + Im(X) @ sinb."""
    n_freq = n_fft // 2 + 1
    k = np.arange(n_freq, dtype=np.float64)[:, None]
    n = np.arange(n_fft, dtype=np.float64)[None, :]
    ang = 2.0 * np.pi * k * n / n_fft
    scale = np.full((n_freq, 1), 2.0)
    scale[0, 0] = 1.0
    scale[-1, 0] = 1.0
    cosb = (scale * np.cos(ang) / n_fft).astype(np.float64)
    sinb = (-scale * np.sin(ang) / n_fft).astype(np.float64)
    # c2r convention: imaginary parts of DC and Nyquist bins do not contribute.
    sinb[0, :] = 0.0
    sinb[-1, :] = 0.0
    return cosb, sinb


def _round_up(x, m):
    return ((x + m - 1) // m) * m


# ----------------------------------------------------------------------------
# Pallas kernel: fused (irfft + window) matmul  ->  hop-fold overlap-add
# ----------------------------------------------------------------------------
def _istft_kernel(mag_ref, phase_ref, basis_ref, inv_env_ref, out_ref, *,
                  n_fft, hop, n_frames, bb):
    T = n_frames
    R = n_fft // hop                 # frame length in hops (4 for the defaults)
    trim = (n_fft // 2) // hop       # center=True trim, in hops (2)
    rows = T - 1                     # output rows on the hop grid
    fp = mag_ref.shape[-1]           # lane-aligned (zero-padded) freq width

    mag = mag_ref[...].reshape(bb * T, fp)
    ph = phase_ref[...].reshape(bb * T, fp)

    # mag * exp(i*phase) -> [real | imag], lane-aligned contraction K = 2*fp
    x = jnp.concatenate([mag * jnp.cos(ph), mag * jnp.sin(ph)], axis=-1)

    # Windowed inverse rFFT of every frame: a single fused MXU matmul
    # (the Hann window is folded into the basis at construction time).
    frames = jnp.dot(x, basis_ref[...],
                     preferred_element_type=jnp.float32)       # (bb*T, n_fft)

    # Hop-fold overlap-add, already trimmed for center=True:
    #   out[j, :] = sum_k frames[j + trim - k, k*hop:(k+1)*hop]
    acc = None
    for k in range(R):
        lo = max(0, k - trim)                 # first valid output row
        hi = min(rows, T - trim + k)          # one past last valid output row
        if lo >= hi:
            continue
        t_lo, t_hi = lo + trim - k, hi + trim - k
        slab = frames[:, k * hop:(k + 1) * hop].reshape(bb, T, hop)[:, t_lo:t_hi]
        parts = []
        if lo > 0:
            parts.append(jnp.zeros((bb, lo, hop), jnp.float32))
        parts.append(slab)
        if rows - hi > 0:
            parts.append(jnp.zeros((bb, rows - hi, hop), jnp.float32))
        slab = jnp.concatenate(parts, axis=1) if len(parts) > 1 else parts[0]
        acc = slab if acc is None else acc + slab

    # Normalize by the window-squared OLA envelope; one dense (rows, hop) store.
    out_ref[...] = acc * inv_env_ref[...]


# ----------------------------------------------------------------------------
# Wrapper mirroring TorchSTFT
# ----------------------------------------------------------------------------
class PallasTorchSTFT:
    """Non-learnable iSTFT, Pallas TPU implementation of TorchSTFT.inverse."""

    def __init__(self, filter_length=800, hop_length=200, win_length=800, window='hann'):
        assert window == 'hann'
        # TODO(synk): zero-padding of the window when win_length < filter_length
        # is not implemented (defaults have win_length == filter_length).
        assert win_length == filter_length
        # Hop-fold OLA requirements (hold for the 800/200 defaults).
        # TODO(synk): fall back to a generic overlap-add when hop does not
        # divide n_fft and n_fft//2.
        assert filter_length % hop_length == 0
        assert (filter_length // 2) % hop_length == 0

        self.filter_length = filter_length
        self.hop_length = hop_length
        self.win_length = win_length

        n_fft = filter_length
        n_freq = n_fft // 2 + 1
        self.n_freq = n_freq
        self.freq_pad = _round_up(n_freq, 128)          # lane-aligned K/2

        win = _hann_periodic(win_length)
        self.window = jnp.asarray(win)                   # kept for reference use

        cosb, sinb = _irfft_basis(n_fft)
        # Fold the synthesis window into the bases and stack [cos; sin],
        # zero-padded to a lane-aligned contraction width 2 * freq_pad.
        basis = np.zeros((2 * self.freq_pad, n_fft), np.float32)
        basis[:n_freq] = (cosb * win[None, :].astype(np.float64)).astype(np.float32)
        basis[self.freq_pad:self.freq_pad + n_freq] = \
            (sinb * win[None, :].astype(np.float64)).astype(np.float32)
        self.basis = jnp.asarray(basis)                  # (2*freq_pad, n_fft)

    def forward(self):
        # Same as the torch module: forward is a no-op.
        pass

    @staticmethod
    def _pick_batch_block(B, T):
        """Amortize batch into matmul M (~256 rows) but keep >=2 grid points."""
        target_m = 256
        bb = max(1, target_m // max(T, 1))
        if B >= 2:
            bb = min(bb, max(1, B // 2))      # leave >=2 parallel grid points
        bb = min(bb, B)
        while B % bb != 0:
            bb -= 1
        return max(bb, 1)

    def inverse(self, magnitude, phase):
        """magnitude, phase: (B, F, T) float32 -> (B, 1, (T-1)*hop) float32."""
        n_fft, hop = self.filter_length, self.hop_length
        B, F, T = magnitude.shape
        assert F == self.n_freq
        assert T >= 2
        out_len = (T - 1) * hop
        full_len = n_fft + (T - 1) * hop
        fp = self.freq_pad

        # window-squared overlap-add envelope (parameter-only, data independent)
        w2 = np.asarray(_hann_periodic(self.win_length), np.float64) ** 2
        env = np.zeros(full_len, np.float64)
        for t in range(T):
            env[t * hop: t * hop + n_fft] += w2
        env_trim = env[n_fft // 2: n_fft // 2 + out_len]
        # torch.istft raises if the envelope is ~0 anywhere; mirror that check.
        assert env_trim.min() > 1e-11, "window OLA envelope is (near) zero"
        inv_env = jnp.asarray((1.0 / env_trim).astype(np.float32).reshape(T - 1, hop))

        # (B, F, T) -> (B, T, F) with freq zero-padded to a lane-aligned width.
        # TODO(synk): if the producer can emit (B, T, F) directly, drop this
        # transpose pass (it is one extra HBM read+write of mag/phase).
        pad = ((0, 0), (0, 0), (0, fp - F))
        mag_bt = jnp.pad(jnp.transpose(magnitude, (0, 2, 1)).astype(jnp.float32), pad)
        ph_bt = jnp.pad(jnp.transpose(phase, (0, 2, 1)).astype(jnp.float32), pad)

        bb = self._pick_batch_block(B, T)
        grid = (B // bb,)

        # VMEM budget (bytes): double-buffered inputs/basis/output + live values.
        # TODO(synk): for very long audio (T in the thousands) add a frame-chunk
        # grid axis with an (n_fft - hop) halo so blocks fit v7x's 64 MiB VMEM.
        est = 4 * (2 * 2 * bb * T * fp            # mag + phase, double-buffered
                   + 2 * 2 * fp * n_fft           # basis, double-buffered
                   + 2 * bb * (T - 1) * hop       # output, double-buffered
                   + 3 * bb * T * n_fft)          # live intermediates (x, frames, acc)
        vmem_limit = int(min(max(2 * est, 32 * 1024 * 1024), 56 * 1024 * 1024))

        kernel = functools.partial(_istft_kernel, n_fft=n_fft, hop=hop,
                                   n_frames=T, bb=bb)

        out2d = pl.pallas_call(
            kernel,
            out_shape=jax.ShapeDtypeStruct((B, T - 1, hop), jnp.float32),
            grid_spec=pltpu.PrefetchScalarGridSpec(
                num_scalar_prefetch=0,
                grid=grid,
                in_specs=[
                    pl.BlockSpec((bb, T, fp), lambda b: (b, 0, 0)),       # magnitude
                    pl.BlockSpec((bb, T, fp), lambda b: (b, 0, 0)),       # phase
                    pl.BlockSpec((2 * fp, n_fft), lambda b: (0, 0)),      # windowed basis
                    pl.BlockSpec((T - 1, hop), lambda b: (0, 0)),         # 1/envelope
                ],
                out_specs=pl.BlockSpec((bb, T - 1, hop), lambda b: (b, 0, 0)),
            ),
            compiler_params=pltpu.CompilerParams(
                dimension_semantics=("parallel",),
                vmem_limit_bytes=vmem_limit),
        )(mag_bt, ph_bt, self.basis, inv_env)

        # Row-major (T-1, hop) is already the flat signal: free metadata reshape.
        return out2d.reshape(B, 1, out_len)


# ----------------------------------------------------------------------------
# Pure-numpy reference (istft with center=True, hann window)
# ----------------------------------------------------------------------------
def _reference_istft(mag, phase, window, n_fft, hop):
    mag = np.asarray(mag, dtype=np.float64)
    phase = np.asarray(phase, dtype=np.float64)
    window = np.asarray(window, dtype=np.float64)
    spec = mag * np.exp(1j * phase)                      # (B, F, T)
    frames = np.fft.irfft(spec, n=n_fft, axis=1)         # (B, n_fft, T)
    frames = frames * window[None, :, None]
    B, _, T = mag.shape
    full_len = n_fft + (T - 1) * hop
    out = np.zeros((B, full_len))
    env = np.zeros(full_len)
    for t in range(T):
        out[:, t * hop: t * hop + n_fft] += frames[:, :, t]
        env[t * hop: t * hop + n_fft] += window ** 2
    s, L = n_fft // 2, (T - 1) * hop
    y = out[:, s:s + L] / env[s:s + L]
    return y[:, None, :]                                 # (B, 1, L)


if __name__ == "__main__":
    key = jax.random.PRNGKey(0)
    k1, k2 = jax.random.split(key)

    B, T = 2, 12                                         # small frame count
    stft = PallasTorchSTFT(filter_length=800, hop_length=200, win_length=800)
    F = stft.filter_length // 2 + 1                      # 401 freq bins

    magnitude = jax.random.uniform(k1, (B, F, T), dtype=jnp.float32)
    phase = jax.random.uniform(k2, (B, F, T), dtype=jnp.float32,
                               minval=-np.pi, maxval=np.pi)

    out = stft.inverse(magnitude, phase)
    out = jax.block_until_ready(out)

    expected_len = (T - 1) * stft.hop_length
    assert out.shape == (B, 1, expected_len), out.shape

    ref = _reference_istft(magnitude, phase, stft.window,
                           stft.filter_length, stft.hop_length)
    np.testing.assert_allclose(np.asarray(out), ref, rtol=1e-3, atol=1e-3)

    print("KERNEL_OK")
</pallas_src>

<mosaic_0001>
module attributes {stable_mosaic.version = 11 : i64} {
  func.func @_istft_kernel(%arg0: i32, %arg1: memref<1x12x512xf32, #tpu.memory_space<vmem>>, %arg2: memref<1x12x512xf32, #tpu.memory_space<vmem>>, %arg3: memref<1024x800xf32, #tpu.memory_space<vmem>>, %arg4: memref<11x200xf32, #tpu.memory_space<vmem>>, %arg5: memref<1x11x200xf32, #tpu.memory_space<vmem>>) attributes {dimension_semantics = [#tpu.dimension_semantics<parallel>], iteration_bounds = array<i64: 2>, scalar_prefetch = 0 : i64, scratch_operands = 0 : i64, tpu.core_type = #tpu.core_type<tc>, window_params = [{transform_indices = @transform_0, window_bounds = array<i64: 1, 12, 512>}, {transform_indices = @transform_1, window_bounds = array<i64: 1, 12, 512>}, {pipeline_mode = #tpu.pipeline_mode<synchronous>, transform_indices = @transform_2, window_bounds = array<i64: 1024, 800>}, {pipeline_mode = #tpu.pipeline_mode<synchronous>, transform_indices = @transform_3, window_bounds = array<i64: 11, 200>}, {transform_indices = @transform_4, window_bounds = array<i64: 1, 11, 200>}]} {
    %c0 = arith.constant 0 : index
    %c0_0 = arith.constant 0 : index
    %c0_1 = arith.constant 0 : index
    %0 = vector.load %arg1[%c0, %c0_0, %c0_1] : memref<1x12x512xf32, #tpu.memory_space<vmem>>, vector<1x12x512xf32>
    %1 = vector.shape_cast %0 : vector<1x12x512xf32> to vector<12x512xf32>
    %c0_2 = arith.constant 0 : index
    %c0_3 = arith.constant 0 : index
    %c0_4 = arith.constant 0 : index
    %2 = vector.load %arg2[%c0_2, %c0_3, %c0_4] : memref<1x12x512xf32, #tpu.memory_space<vmem>>, vector<1x12x512xf32>
    %3 = vector.shape_cast %2 : vector<1x12x512xf32> to vector<12x512xf32>
    %4 = math.cos %3 : vector<12x512xf32>
    %5 = arith.mulf %1, %4 : vector<12x512xf32>
    %6 = math.sin %3 : vector<12x512xf32>
    %7 = arith.mulf %1, %6 : vector<12x512xf32>
    %8 = tpu.concatenate %5, %7 in 1 : vector<12x512xf32>, vector<12x512xf32> -> vector<12x1024xf32>
    %c0_5 = arith.constant 0 : index
    %c0_6 = arith.constant 0 : index
    %9 = vector.load %arg3[%c0_5, %c0_6] : memref<1024x800xf32, #tpu.memory_space<vmem>>, vector<1024x800xf32>
    %cst = arith.constant dense<0.000000e+00> : vector<12x800xf32>
    %10 = tpu.matmul %8, %9, %cst {dimension_numbers = #tpu.dot_dimension_numbers<[1], [0], [0], [1], [0, 0, 1, 1], [], []>} : vector<12x1024xf32>, vector<1024x800xf32>, vector<12x800xf32> -> vector<12x800xf32>
    %11 = vector.extract_strided_slice %10 {offsets = [0, 0], sizes = [12, 200], strides = [1, 1]} : vector<12x800xf32> to vector<12x200xf32>
    %12 = vector.shape_cast %11 : vector<12x200xf32> to vector<1x12x200xf32>
    %13 = vector.extract_strided_slice %12 {offsets = [0, 2, 0], sizes = [1, 10, 200], strides = [1, 1, 1]} : vector<1x12x200xf32> to vector<1x10x200xf32>
    %cst_7 = arith.constant 0.000000e+00 : f32
    %14 = vector.broadcast %cst_7 : f32 to vector<1x1x200xf32>
    %15 = tpu.concatenate %13, %14 in 1 : vector<1x10x200xf32>, vector<1x1x200xf32> -> vector<1x11x200xf32>
    %16 = vector.extract_strided_slice %10 {offsets = [0, 200], sizes = [12, 200], strides = [1, 1]} : vector<12x800xf32> to vector<12x200xf32>
    %17 = vector.shape_cast %16 : vector<12x200xf32> to vector<1x12x200xf32>
    %18 = vector.extract_strided_slice %17 {offsets = [0, 1, 0], sizes = [1, 11, 200], strides = [1, 1, 1]} : vector<1x12x200xf32> to vector<1x11x200xf32>
    %19 = arith.addf %15, %18 : vector<1x11x200xf32>
    %20 = vector.extract_strided_slice %10 {offsets = [0, 400], sizes = [12, 200], strides = [1, 1]} : vector<12x800xf32> to vector<12x200xf32>
    %21 = vector.shape_cast %20 : vector<12x200xf32> to vector<1x12x200xf32>
    %22 = vector.extract_strided_slice %21 {offsets = [0, 0, 0], sizes = [1, 11, 200], strides = [1, 1, 1]} : vector<1x12x200xf32> to vector<1x11x200xf32>
    %23 = arith.addf %19, %22 : vector<1x11x200xf32>
    %24 = vector.extract_strided_slice %10 {offsets = [0, 600], sizes = [12, 200], strides = [1, 1]} : vector<12x800xf32> to vector<12x200xf32>
    %25 = vector.shape_cast %24 : vector<12x200xf32> to vector<1x12x200xf32>
    %26 = vector.extract_strided_slice %25 {offsets = [0, 0, 0], sizes = [1, 10, 200], strides = [1, 1, 1]} : vector<1x12x200xf32> to vector<1x10x200xf32>
    %cst_8 = arith.constant 0.000000e+00 : f32
    %27 = vector.broadcast %cst_8 : f32 to vector<1x1x200xf32>
    %28 = tpu.concatenate %27, %26 in 1 : vector<1x1x200xf32>, vector<1x10x200xf32> -> vector<1x11x200xf32>
    %29 = arith.addf %23, %28 : vector<1x11x200xf32>
    %c0_9 = arith.constant 0 : index
    %c0_10 = arith.constant 0 : index
    %30 = vector.load %arg4[%c0_9, %c0_10] : memref<11x200xf32, #tpu.memory_space<vmem>>, vector<11x200xf32>
    %31 = vector.shape_cast %30 : vector<11x200xf32> to vector<1x11x200xf32>
    %32 = arith.mulf %29, %31 : vector<1x11x200xf32>
    %c0_11 = arith.constant 0 : index
    %c0_12 = arith.constant 0 : index
    %c0_13 = arith.constant 0 : index
    %33 = vector.load %arg5[%c0_11, %c0_12, %c0_13] : memref<1x11x200xf32, #tpu.memory_space<vmem>>, vector<1x11x200xf32>
    tpu.vector_store %arg5[%c0_11, %c0_12, %c0_13], %32 {strides = array<i32>} : memref<1x11x200xf32, #tpu.memory_space<vmem>>, vector<1x11x200xf32>,
    return
  }
  func.func @transform_0(%arg0: i32) -> (i32, i32, i32) {
    %c0_i32 = arith.constant 0 : i32
    %c0_i32_0 = arith.constant 0 : i32
    %c0_i32_1 = arith.constant 0 : i32
    return %arg0, %c0_i32, %c0_i32_0 : i32, i32, i32
  }
  func.func @transform_1(%arg0: i32) -> (i32, i32, i32) {
    %c0_i32 = arith.constant 0 : i32
    %c0_i32_0 = arith.constant 0 : i32
    %c0_i32_1 = arith.constant 0 : i32
    return %arg0, %c0_i32, %c0_i32_0 : i32, i32, i32
  }
  func.func @transform_2(%arg0: i32) -> (i32, i32) {
    %c0_i32 = arith.constant 0 : i32
    %c0_i32_0 = arith.constant 0 : i32
    %c0_i32_1 = arith.constant 0 : i32
    return %c0_i32, %c0_i32_0 : i32, i32
  }
  func.func @transform_3(%arg0: i32) -> (i32, i32) {
    %c0_i32 = arith.constant 0 : i32
    %c0_i32_0 = arith.constant 0 : i32
    %c0_i32_1 = arith.constant 0 : i32
    return %c0_i32, %c0_i32_0 : i32, i32
  }
  func.func @transform_4(%arg0: i32) -> (i32, i32, i32) {
    %c0_i32 = arith.constant 0 : i32
    %c0_i32_0 = arith.constant 0 : i32
    %c0_i32_1 = arith.constant 0 : i32
    return %arg0, %c0_i32, %c0_i32_0 : i32, i32, i32
  }
}

</mosaic_0001>

<llo_original>
// kernel: tpu_custom_call.1
$region0: #{tpu_custom_call.1}
  #allocation0 [shape = 'u32[]', space=smem, size = 0x4, offset = 0x4, fixed_abs, tag = 'smem constant byte address 0x4 - core index']
  #allocation1 [shape = 'u32[72,128]{1,0:T(1,128)}', space=vmem, size = 0x9000, scoped, tag = 'internal scratch']
  %s0 = inlined_call_operand.vmem [shape: f32[2,12,512], index: 0, kind: input, shape index: {}]
  %s1 = inlined_call_operand.vmem [shape: f32[2,12,512], index: 1, kind: input, shape index: {}]
  %s2 = inlined_call_operand.vmem [shape: f32[1024,800], index: 2, kind: input, shape index: {}]
  %s3 = inlined_call_operand.vmem [shape: f32[11,200], index: 3, kind: input, shape index: {}]
  %s4 = inlined_call_operand.vmem [shape: f32[2,11,200], index: 4, kind: output, shape index: {}]
  %s5 = sld [smem:[#allocation0]]
  $region49: #{tpu_custom_call.1} parent=0
    _
  %s7 = ssub.s32 1, %s5
  %s8 = scalar_select 0, %s7, %s5
  loop: start=0, step=1, limit=4
  $region2: #{tpu_custom_call.1} parent=0 // loop_pre_header
    _
  $region3: #{tpu_custom_call.1} parent=0 // loop_header
    %s10 = sphi 0, %s14
    %p11 = scmp.ge.s32.totalorder %s10, 4
    %s20 = sphi 0, %s22
    %s23 = sphi 0, %s20
    %s24 = sphi 0, %s23
    %s40 = sphi 0, %s24
    %s46 = sphi 0, %s48
    %s49 = sphi 0, %s46
    %s50 = sphi 0, %s49
    %s66 = sphi 0, %s50
    %s70 = sphi 0, %s70
    %s72 = sphi 0, %s70
    %s73 = sphi 0, %s72
    %s87 = sphi 0, %s73
    %s91 = sphi 0, %s91
    %s93 = sphi 0, %s91
    %s94 = sphi 0, %s93
    %s108 = sphi 0, %s94
    %s114 = sphi 0, %s116
    %s117 = sphi 0, %s114
    %s118 = sphi 0, %s117
    %s134 = sphi 0, %s118
  $region4: #{tpu_custom_call.1} parent=0 // loop_header_branch
    %13 = sbr.rel (%p11) target = $region8
  $region5: #{tpu_custom_call.1} parent=0 // loop_body
    %s15 = ssub.s32 %s10, 1
    %s16 = ssub.s32 %s10, 2
    %s17 = sadd.s32 %s10, 1
    %s18 = ssub.s32 %s10, %s17
    %p19 = scmp.eq.s32.totalorder %s18, 0
    %s21 = sadd.s32 %s20, 1
    %s22 = scalar_select %p19, %s20, %s21
    %p25 = pneg %p19
    %p26 = scmp.eq.s32.totalorder %s10, 1
    %p27 = por %p25, %p26
    %p28 = scmp.ne.s32.totalorder %s20, %s23
    %p29 = scmp.eq.s32.totalorder %s10, 0
    %p30 = por %p28, %p29
    %p31 = scmp.ne.s32.totalorder %s20, %s23
    %p32 = scmp.eq.s32.totalorder %s15, 1
    %p33 = por %p31, %p32
    %p34 = scmp.ne.s32.totalorder %s23, %s24
    %p35 = scmp.eq.s32.totalorder %s15, 0
    %p36 = por %p34, %p35
    %p37 = scmp.ne.s32.totalorder %s23, %s24
    %p38 = scmp.eq.s32.totalorder %s16, 1
    %p39 = por %p37, %p38
    %p41 = scmp.ne.s32.totalorder %s24, %s40
    %p42 = scmp.eq.s32.totalorder %s16, 0
    %p43 = por %p41, %p42
    %s44 = ssub.s32 %s10, %s17
    %p45 = scmp.eq.s32.totalorder %s44, 0
    %s47 = sadd.s32 %s46, 1
    %s48 = scalar_select %p45, %s46, %s47
    %p51 = pneg %p45
    %p52 = scmp.eq.s32.totalorder %s10, 1
    %p53 = por %p51, %p52
    %p54 = scmp.ne.s32.totalorder %s46, %s49
    %p55 = scmp.eq.s32.totalorder %s10, 0
    %p56 = por %p54, %p55
    %p57 = scmp.ne.s32.totalorder %s46, %s49
    %p58 = scmp.eq.s32.totalorder %s15, 1
    %p59 = por %p57, %p58
    %p60 = scmp.ne.s32.totalorder %s49, %s50
    %p61 = scmp.eq.s32.totalorder %s15, 0
    %p62 = por %p60, %p61
    %p63 = scmp.ne.s32.totalorder %s49, %s50
    %p64 = scmp.eq.s32.totalorder %s16, 1
    %p65 = por %p63, %p64
    %p67 = scmp.ne.s32.totalorder %s50, %s66
    %p68 = scmp.eq.s32.totalorder %s16, 0
    %p69 = por %p67, %p68
    %s71 = sadd.s32 %s70, 1
    %p74 = scmp.eq.s32.totalorder %s10, 1
    %p75 = scmp.ne.s32.totalorder %s70, %s72
    %p76 = scmp.eq.s32.totalorder %s10, 0
    %p77 = por %p75, %p76
    %p78 = scmp.ne.s32.totalorder %s70, %s72
    %p79 = scmp.eq.s32.totalorder %s15, 1
    %p80 = por %p78, %p79
    %p81 = scmp.ne.s32.totalorder %s72, %s73
    %p82 = scmp.eq.s32.totalorder %s15, 0
    %p83 = por %p81, %p82
    %p84 = scmp.ne.s32.totalorder %s72, %s73
    %p85 = scmp.eq.s32.totalorder %s16, 1
    %p86 = por %p84, %p85
    %p88 = scmp.ne.s32.totalorder %s73, %s87
    %p89 = scmp.eq.s32.totalorder %s16, 0
    %p90 = por %p88, %p89
    %s92 = sadd.s32 %s91, 1
    %p95 = scmp.eq.s32.totalorder %s10, 1
    %p96 = scmp.ne.s32.totalorder %s91, %s93
    %p97 = scmp.eq.s32.totalorder %s10, 0
    %p98 = por %p96, %p97
    %p99 = scmp.ne.s32.totalorder %s91, %s93
    %p100 = scmp.eq.s32.totalorder %s15, 1
    %p101 = por %p99, %p100
    %p102 = scmp.ne.s32.totalorder %s93, %s94
    %p103 = scmp.eq.s32.totalorder %s15, 0
    %p104 = por %p102, %p103
    %p105 = scmp.ne.s32.totalorder %s93, %s94
    %p106 = scmp.eq.s32.totalorder %s16, 1
    %p107 = por %p105, %p106
    %p109 = scmp.ne.s32.totalorder %s94, %s108
    %p110 = scmp.eq.s32.totalorder %s16, 0
    %p111 = por %p109, %p110
    %s112 = ssub.s32 %s10, %s17
    %p113 = scmp.eq.s32.totalorder %s112, 0
    %s115 = sadd.s32 %s114, 1
    %s116 = scalar_select %p113, %s114, %s115
    %p119 = pneg %p113
    %p120 = scmp.eq.s32.totalorder %s10, 1
    %p121 = por %p119, %p120
    %p122 = scmp.ne.s32.totalorder %s114, %s117
    %p123 = scmp.eq.s32.totalorder %s10, 0
    %p124 = por %p122, %p123
    %p125 = scmp.ne.s32.totalorder %s114, %s117
    %p126 = scmp.eq.s32.totalorder %s15, 1
    %p127 = por %p125, %p126
    %p128 = scmp.ne.s32.totalorder %s117, %s118
    %p129 = scmp.eq.s32.totalorder %s15, 0
    %p130 = por %p128, %p129
    %p131 = scmp.ne.s32.totalorder %s117, %s118
    %p132 = scmp.eq.s32.totalorder %s16, 1
    %p133 = por %p131, %p132
    %p135 = scmp.ne.s32.totalorder %s118, %s134
    %p136 = scmp.eq.s32.totalorder %s16, 0
    %p137 = por %p135, %p136
    %p138 = scmp.le.s32.totalorder 1, %s10
    %p139 = scmp.lt.s32.totalorder %s10, 3
    %p140 = pnand %p138, %p139
    %p141 = pneg %p140
    // Predicated region
    $region9: #{tpu_custom_call.1} parent=5 // pred_check
      _
    $region10: #{tpu_custom_call.1} parent=5 // pred_check_branch
      %143 = sbr.rel (%p140) target = $region12
    $region11: #{tpu_custom_call.1} parent=5 // pred_region
      %s144 = ssub.s32 %s10, 1
      // Predicated region
      $region13: #{tpu_custom_call.1} parent=11 // pred_check
        %p145 = pneg %p83
      $region14: #{tpu_custom_call.1} parent=11 // pred_check_branch
        %147 = sbr.rel (%p145) target = $region16
      $region15: #{tpu_custom_call.1} parent=11 // pred_region
        _
      $region16: #{tpu_custom_call.1} parent=11 // pred_fallthru
        _
      // Predicated region
      $region17: #{tpu_custom_call.1} parent=11 // pred_check
        %p148 = pneg %p104
      $region18: #{tpu_custom_call.1} parent=11 // pred_check_branch
        %150 = sbr.rel (%p148) target = $region20
      $region19: #{tpu_custom_call.1} parent=11 // pred_region
        _
      $region20: #{tpu_custom_call.1} parent=11 // pred_fallthru
        _
    $region12: #{tpu_custom_call.1} parent=5 // pred_fallthru
      _
    %p151 = scmp.lt.s32.totalorder %s10, 2
    // Predicated region
    $region21: #{tpu_custom_call.1} parent=5 // pred_check
      %p152 = pneg %p151
    $region22: #{tpu_custom_call.1} parent=5 // pred_check_branch
      %154 = sbr.rel (%p152) target = $region24
    $region23: #{tpu_custom_call.1} parent=5 // pred_region
      // Predicated region
      $region25: #{tpu_custom_call.1} parent=23 // pred_check
        %p155 = pneg %p30
      $region26: #{tpu_custom_call.1} parent=23 // pred_check_branch
        %157 = sbr.rel (%p155) target = $region28
      $region27: #{tpu_custom_call.1} parent=23 // pred_region
        %p158 = scmp.lt.s32.totalorder %s10, 1
        %s159 = scalar_select %p158, %s10, 1
        %s160 = smul.addr %s159, 8
        %s161 = smul.addr %s160, 8
        %s162 = scalar_lea.vmem %s0, %s161
      $region28: #{tpu_custom_call.1} parent=23 // pred_fallthru
        _
      // Predicated region
      $region29: #{tpu_custom_call.1} parent=23 // pred_check
        %p163 = pneg %p56
      $region30: #{tpu_custom_call.1} parent=23 // pred_check_branch
        %165 = sbr.rel (%p163) target = $region32
      $region31: #{tpu_custom_call.1} parent=23 // pred_region
        %p166 = scmp.lt.s32.totalorder %s10, 1
        %s167 = scalar_select %p166, %s10, 1
        %s168 = smul.addr %s167, 8
        %s169 = smul.addr %s168, 8
        %s170 = scalar_lea.vmem %s1, %s169
      $region32: #{tpu_custom_call.1} parent=23 // pred_fallthru
        _
    $region24: #{tpu_custom_call.1} parent=5 // pred_fallthru
      _
    %p171 = scmp.le.s32.totalorder 1, %s10
    %p172 = scmp.lt.s32.totalorder %s10, 3
    %p173 = pnand %p171, %p172
    %p174 = pneg %p173
    // Predicated region
    $region33: #{tpu_custom_call.1} parent=5 // pred_check
      _
    $region34: #{tpu_custom_call.1} parent=5 // pred_check_branch
      %176 = sbr.rel (%p173) target = $region36
    $region35: #{tpu_custom_call.1} parent=5 // pred_region
      %s177 = ssub.s32 %s10, 1
      %p178 = scmp.lt.s32.totalorder %s15, 1
      %s179 = scalar_select %p178, %s15, 1
      %s180 = smul.addr %s179, 8
      %s181 = smul.addr %s180, 8
      %s182 = scalar_lea.vmem %s0, %s181
      %p183 = pneg %p36
      %p184 = pneg %p33
      %p185 = scmp.lt.s32.totalorder %s15, 1
      %s186 = scalar_select %p185, %s15, 1
      %s187 = smul.addr %s186, 8
      %s188 = smul.addr %s187, 8
      %s189 = scalar_lea.vmem %s1, %s188
      %p190 = pneg %p62
      %p191 = pneg %p59
      %p192 = pneg %p83
      %p193 = pneg %p80
      %p194 = pneg %p104
      %p195 = pneg %p101
      %p196 = pneg %p130
      %p197 = pneg %p127
      %p198 = scmp.lt.s32.totalorder %s15, 1
      %s199 = scalar_select %p198, %s15, 1
      %s200 = smul.addr %s199, 4
      %s201 = smul.addr %s200, 8
      %s202 = scalar_lea.vmem %s4, %s201
      %p203 = scmp.lt.s32.totalorder %s15, 1
      %s204 = scalar_select %p203, %s15, 1
      %s205 = smul.addr %s204, 8
      %s206 = smul.addr %s205, 8
      %s207 = scalar_lea.vmem %s0, %s206
      %p208 = scmp.lt.s32.totalorder %s15, 1
      %s209 = scalar_select %p208, %s15, 1
      %s210 = smul.addr %s209, 8
      %s211 = smul.addr %s210, 8
      %s212 = scalar_lea.vmem %s1, %s211
      %p213 = scmp.lt.s32.totalorder %s15, 1
      %s214 = scalar_select %p213, %s15, 1
      %s215 = smul.addr %s214, 4
      %s216 = smul.addr %s215, 8
      %s217 = scalar_lea.vmem %s4, %s216
      %v218 = vld [vmem:[%s207] sm:$0xff]
      %v219 = vld [vmem:[%s207 + $0x8] sm:$0xff]
      %v220 = vld [vmem:[%s207 + $0x10] sm:$0xff]
      %v221 = vld [vmem:[%s207 + $0x18] sm:$0xff]
      %v222 = vld [vmem:[%s207 + $0x20] sm:$0xf]
      %v223 = vld [vmem:[%s207 + $0x28] sm:$0xf]
      %v224 = vld [vmem:[%s207 + $0x30] sm:$0xf]
      %v225 = vld [vmem:[%s207 + $0x38] sm:$0xf]
      %v226 = vld [vmem:[%s212] sm:$0xff]
      %v227 = vld [vmem:[%s212 + $0x8] sm:$0xff]
      %v228 = vld [vmem:[%s212 + $0x10] sm:$0xff]
      %v229 = vld [vmem:[%s212 + $0x18] sm:$0xff]
      %v230 = vld [vmem:[%s212 + $0x20] sm:$0xf]
      %v231 = vld [vmem:[%s212 + $0x28] sm:$0xf]
      %v232 = vld [vmem:[%s212 + $0x30] sm:$0xf]
      %v233 = vld [vmem:[%s212 + $0x38] sm:$0xf]
      %v234 = vand.u32 2147483647, %v226
      %vm235 = vcmp.le.f32.partialorder %v234, 0.7853982
      %vm236 = vcmp.lt.s32.totalorder %v226, 0
      %v237 = vand.u32 %v226, 2139095040
      %v238 = vshrl.u32 %v237, 23
      %v239 = vsub.s32 %v238, 127
      %v240 = vand.u32 2147483647, %v226
      %v241 = vand.u32 %v240, 8388607
      %v242 = vor.u32 %v241, 8388608
      %v243 = vsub.s32 0, %v242
      %v244 = vadd.s32 %v239, 1
      %vm245 = vcmp.gt.s32.totalorder %v244, 0
      %v246 = vsel %vm245, %v244, 0
      %v247 = vshrl.u32 %v246, 5
      %v248 = vand.u32 %v246, 31
      %v249 = vsub.s32 32, %v248
      %v250 = vshrl.u32 683565275, %v249
      %v251 = vshll.u32 683565275, %v248
      %v252 = vshrl.u32 2475754826, %v249
      %v253 = vor.u32 %v251, %v252
      %v254 = vshll.u32 2475754826, %v248
      %v255 = vshrl.u32 2131351028, %v249
      %v256 = vor.u32 %v254, %v255
      %v257 = vshll.u32 2131351028, %v248
      %v258 = vshrl.u32 2102212464, %v249
      %v259 = vor.u32 %v257, %v258
      %v260 = vshll.u32 2102212464, %v248
      %v261 = vshrl.u32 920167782, %v249
      %v262 = vor.u32 %v260, %v261
      %v263 = vshll.u32 920167782, %v248
      %v264 = vshrl.u32 1326507024, %v249
      %v265 = vor.u32 %v263, %v264
      %vm266 = vcmp.lt.s32.totalorder %v247, 1
      %vm267 = vcmp.lt.s32.totalorder %v247, 2
      %vm268 = vcmp.lt.s32.totalorder %v247, 3
      %vm269 = vcmp.lt.s32.totalorder %v247, 4
      %v270 = vsel %vm266, %v250, %v253
      %v271 = vsel %vm269, %v259, 2102212464
      %v272 = vsel %vm268, %v256, %v271
      %v273 = vsel %vm267, %v270, %v272
      %v274 = vsel %vm266, %v253, %v256
      %v275 = vsel %vm269, %v262, 920167782
      %v276 = vsel %vm268, %v259, %v275
      %v277 = vsel %vm267, %v274, %v276
      %v278 = vsel %vm266, %v256, %v259
      %v279 = vsel %vm269, %v265, 1326507024
      %v280 = vsel %vm268, %v262, %v279
      %v281 = vsel %vm267, %v278, %v280
      %v282 = vshll.u32 %v242, 8
      %v283 = vand.u32 %v282, 65535
      %v284 = vshrl.u32 %v282, 16
      %v285 = vand.u32 %v281, 65535
      %v286 = vshrl.u32 %v281, 16
      %v287 = vmul.u32 %v283, %v285
      %v288 = vmul.u32 %v283, %v286
      %v289 = vmul.u32 %v284, %v285
      %v290 = vmul.u32 %v284, %v286
      %v291 = vshll.u32 %v288, 16
      %v292 = vshrl.u32 %v288, 16
      %v293 = vshll.u32 %v289, 16
      %v294 = vshrl.u32 %v289, 16
      %vm295 = vc.u32 %v287, %v291
      %v296 = vsel %vm295, 1, 0
      %v297 = vadd.s32 %v287, %v291
      %v298 = vadd.s32 %v290, %v296
      %vm299 = vc.u32 %v297, %v293
      %v300 = vsel %vm299, 1, 0
      %v301 = vadd.s32 %v297, %v293
      %v302 = vadd.s32 %v298, %v300
      %v303 = vadd.s32 %v302, %v292
      %v304 = vadd.s32 %v303, %v294
      %v305 = vand.u32 %v282, 65535
      %v306 = vshrl.u32 %v282, 16
      %v307 = vand.u32 %v277, 65535
      %v308 = vshrl.u32 %v277, 16
      %v309 = vmul.u32 %v305, %v307
      %v310 = vmul.u32 %v305, %v308
      %v311 = vmul.u32 %v306, %v307
      %v312 = vmul.u32 %v306, %v308
      %v313 = vshll.u32 %v310, 16
      %v314 = vshrl.u32 %v310, 16
      %v315 = vshll.u32 %v311, 16
      %v316 = vshrl.u32 %v311, 16
      %vm317 = vc.u32 %v309, %v313
      %v318 = vsel %vm317, 1, 0
      %v319 = vadd.s32 %v309, %v313
      %v320 = vadd.s32 %v312, %v318
      %vm321 = vc.u32 %v319, %v315
      %v322 = vsel %vm321, 1, 0
      %v323 = vadd.s32 %v319, %v315
      %v324 = vadd.s32 %v320, %v322
      %v325 = vadd.s32 %v324, %v314
      %v326 = vadd.s32 %v325, %v316
      %v327 = vmul.u32 %v282, %v273
      %v328 = vadd.s32 %v304, %v323
      %vm329 = vc.u32 %v304, %v323
      %v330 = vadd.s32 %v326, 1
      %v331 = vsel %vm329, %v330, %v326
      %v332 = vadd.s32 %v327, %v331
      %v333 = vadd.s32 %v332, 536870912
      %v334 = vshrl.u32 %v333, 30
      %v335 = vshll.u32 %v334, 30
      %v336 = vsub.s32 %v332, %v335
      %vm337 = vcmp.lt.s32.totalorder %v336, 0
      %v338 = vsub.s32 0, %v336
      %v339 = vsel %vm337, %v338, %v336
      %v340 = vclz %v339
      %v341 = vsub.s32 %v340, 2
      %vm342 = vcmp.gt.s32.totalorder 0, %v341
      %v343 = vsel %vm342, 0, %v341
      %v344 = vsub.s32 32, %v343
      %v345 = vshll.u32 %v336, %v343
      %v346 = vshrl.u32 %v328, %v344
      %v347 = vor.u32 %v345, %v346
      %v348 = vsub.s32 4294967266, %v343
      %v349 = vadd.s32 %v348, 127
      %v350 = vshll.u32 %v349, 23
      %v351 = vor.u32 4788187, %v350
      %v352 = vand.u32 2147483647, %v351
      %v354 = vcvt.s32.f32 %v347
      %v355 = vmul.f32 %v354, %v352
      %v356 = vxor.u32 %v355, 2147483648
      %v357 = vsel %vm236, %v356, %v355
      %v358 = vsub.s32 4, %v334
      %v359 = vsel %vm236, %v358, %v334
      %v360 = vsel %vm235, %v226, %v357
      %v361 = vsel %vm235, 0, %v359
      %v362 = vmul.f32 %v360, %v360
      %v363 = vmul.f32 %v362, -0.001358992
      %v364 = vadd.f32 %v363, 0.041655596
      %v365 = vmul.f32 %v362, %v364
      %v366 = vadd.f32 %v365, -0.4999988
      %v367 = vmul.f32 %v362, %v366
      %v368 = vadd.f32 1.0, %v367
      %v369 = vmul.f32 %v360, %v360
      %v370 = vmul.f32 %v369, -0.00019511016
      %v371 = vadd.f32 %v370, 0.008332121
      %v372 = vmul.f32 %v369, %v371
      %v373 = vadd.f32 %v372, -0.16666654
      %v374 = vmul.f32 %v369, %v373
      %v375 = vadd.f32 %v374, 1.0
      %v376 = vmul.f32 %v375, %v360
      %vm377 = vweird.f32 %v226
      %v378 = vand.u32 %v361, 3
      %vm379 = vcmp.lt.s32.totalorder %v378, 2
      %vm380 = vcmp.eq.s32.totalorder %v378, 0
      %v381 = vxor.u32 %v376, 2147483648
      %v382 = vsel %vm380, %v368, %v381
      %vm383 = vcmp.eq.s32.totalorder %v378, 2
      %v384 = vxor.u32 %v368, 2147483648
      %v385 = vsel %vm383, %v384, %v376
      %v386 = vsel %vm379, %v382, %v385
      %v387 = vsel %vm377, nan, %v386
      %v388 = vand.u32 2147483647, %v227
      %vm389 = vcmp.le.f32.partialorder %v388, 0.7853982
      %vm390 = vcmp.lt.s32.totalorder %v227, 0
      %v391 = vand.u32 %v227, 2139095040
      %v392 = vshrl.u32 %v391, 23
      %v393 = vsub.s32 %v392, 127
      %v394 = vand.u32 2147483647, %v227
      %v395 = vand.u32 %v394, 8388607
      %v396 = vor.u32 %v395, 8388608
      %v397 = vsub.s32 0, %v396
      %v398 = vadd.s32 %v393, 1
      %vm399 = vcmp.gt.s32.totalorder %v398, 0
      %v400 = vsel %vm399, %v398, 0
      %v401 = vshrl.u32 %v400, 5
      %v402 = vand.u32 %v400, 31
      %v403 = vsub.s32 32, %v402
      %v404 = vshrl.u32 683565275, %v403
      %v405 = vshll.u32 683565275, %v402
      %v406 = vshrl.u32 2475754826, %v403
      %v407 = vor.u32 %v405, %v406
      %v408 = vshll.u32 2475754826, %v402
      %v409 = vshrl.u32 2131351028, %v403
      %v410 = vor.u32 %v408, %v409
      %v411 = vshll.u32 2131351028, %v402
      %v412 = vshrl.u32 2102212464, %v403
      %v413 = vor.u32 %v411, %v412
      %v414 = vshll.u32 2102212464, %v402
      %v415 = vshrl.u32 920167782, %v403
      %v416 = vor.u32 %v414, %v415
      %v417 = vshll.u32 920167782, %v402
      %v418 = vshrl.u32 1326507024, %v403
      %v419 = vor.u32 %v417, %v418
      %vm420 = vcmp.lt.s32.totalorder %v401, 1
      %vm421 = vcmp.lt.s32.totalorder %v401, 2
      %vm422 = vcmp.lt.s32.totalorder %v401, 3
      %vm423 = vcmp.lt.s32.totalorder %v401, 4
      %v424 = vsel %vm420, %v404, %v407
      %v425 = vsel %vm423, %v413, 2102212464
      %v426 = vsel %vm422, %v410, %v425
      %v427 = vsel %vm421, %v424, %v426
      %v428 = vsel %vm420, %v407, %v410
      %v429 = vsel %vm423, %v416, 920167782
      %v430 = vsel %vm422, %v413, %v429
      %v431 = vsel %vm421, %v428, %v430
      %v432 = vsel %vm420, %v410, %v413
      %v433 = vsel %vm423, %v419, 1326507024
      %v434 = vsel %vm422, %v416, %v433
      %v435 = vsel %vm421, %v432, %v434
      %v436 = vshll.u32 %v396, 8
      %v437 = vand.u32 %v436, 65535
      %v438 = vshrl.u32 %v436, 16
      %v439 = vand.u32 %v435, 65535
      %v440 = vshrl.u32 %v435, 16
      %v441 = vmul.u32 %v437, %v439
      %v442 = vmul.u32 %v437, %v440
      %v443 = vmul.u32 %v438, %v439
      %v444 = vmul.u32 %v438, %v440
      %v445 = vshll.u32 %v442, 16
      %v446 = vshrl.u32 %v442, 16
      %v447 = vshll.u32 %v443, 16
      %v448 = vshrl.u32 %v443, 16
      %vm449 = vc.u32 %v441, %v445
      %v450 = vsel %vm449, 1, 0
      %v451 = vadd.s32 %v441, %v445
      %v452 = vadd.s32 %v444, %v450
      %vm453 = vc.u32 %v451, %v447
      %v454 = vsel %vm453, 1, 0
      %v455 = vadd.s32 %v451, %v447
      %v456 = vadd.s32 %v452, %v454
      %v457 = vadd.s32 %v456, %v446
      %v458 = vadd.s32 %v457, %v448
      %v459 = vand.u32 %v436, 65535
      %v460 = vshrl.u32 %v436, 16
      %v461 = vand.u32 %v431, 65535
      %v462 = vshrl.u32 %v431, 16
      %v463 = vmul.u32 %v459, %v461
      %v464 = vmul.u32 %v459, %v462
      %v465 = vmul.u32 %v460, %v461
      %v466 = vmul.u32 %v460, %v462
      %v467 = vshll.u32 %v464, 16
      %v468 = vshrl.u32 %v464, 16
      %v469 = vshll.u32 %v465, 16
      %v470 = vshrl.u32 %v465, 16
      %vm471 = vc.u32 %v463, %v467
      %v472 = vsel %vm471, 1, 0
      %v473 = vadd.s32 %v463, %v467
      %v474 = vadd.s32 %v466, %v472
      %vm475 = vc.u32 %v473, %v469
      %v476 = vsel %vm475, 1, 0
      %v477 = vadd.s32 %v473, %v469
      %v478 = vadd.s32 %v474, %v476
      %v479 = vadd.s32 %v478, %v468
      %v480 = vadd.s32 %v479, %v470
      %v481 = vmul.u32 %v436, %v427
      %v482 = vadd.s32 %v458, %v477
      %vm483 = vc.u32 %v458, %v477
      %v484 = vadd.s32 %v480, 1
      %v485 = vsel %vm483, %v484, %v480
      %v486 = vadd.s32 %v481, %v485
      %v487 = vadd.s32 %v486, 536870912
      %v488 = vshrl.u32 %v487, 30
      %v489 = vshll.u32 %v488, 30
      %v490 = vsub.s32 %v486, %v489
      %vm491 = vcmp.lt.s32.totalorder %v490, 0
      %v492 = vsub.s32 0, %v490
      %v493 = vsel %vm491, %v492, %v490
      %v494 = vclz %v493
      %v495 = vsub.s32 %v494, 2
      %vm496 = vcmp.gt.s32.totalorder 0, %v495
      %v497 = vsel %vm496, 0, %v495
      %v498 = vsub.s32 32, %v497
      %v499 = vshll.u32 %v490, %v497
      %v500 = vshrl.u32 %v482, %v498
      %v501 = vor.u32 %v499, %v500
      %v502 = vsub.s32 4294967266, %v497
      %v503 = vadd.s32 %v502, 127
      %v504 = vshll.u32 %v503, 23
      %v505 = vor.u32 4788187, %v504
      %v506 = vand.u32 2147483647, %v505
      %v508 = vcvt.s32.f32 %v501
      %v509 = vmul.f32 %v508, %v506
      %v510 = vxor.u32 %v509, 2147483648
      %v511 = vsel %vm390, %v510, %v509
      %v512 = vsub.s32 4, %v488
      %v513 = vsel %vm390, %v512, %v488
      %v514 = vsel %vm389, %v227, %v511
      %v515 = vsel %vm389, 0, %v513
      %v516 = vmul.f32 %v514, %v514
      %v517 = vmul.f32 %v516, -0.001358992
      %v518 = vadd.f32 %v517, 0.041655596
      %v519 = vmul.f32 %v516, %v518
      %v520 = vadd.f32 %v519, -0.4999988
      %v521 = vmul.f32 %v516, %v520
      %v522 = vadd.f32 1.0, %v521
      %v523 = vmul.f32 %v514, %v514
      %v524 = vmul.f32 %v523, -0.00019511016
      %v525 = vadd.f32 %v524, 0.008332121
      %v526 = vmul.f32 %v523, %v525
      %v527 = vadd.f32 %v526, -0.16666654
      %v528 = vmul.f32 %v523, %v527
      %v529 = vadd.f32 %v528, 1.0
      %v530 = vmul.f32 %v529, %v514
      %vm531 = vweird.f32 %v227
      %v532 = vand.u32 %v515, 3
      %vm533 = vcmp.lt.s32.totalorder %v532, 2
      %vm534 = vcmp.eq.s32.totalorder %v532, 0
      %v535 = vxor.u32 %v530, 2147483648
      %v536 = vsel %vm534, %v522, %v535
      %vm537 = vcmp.eq.s32.totalorder %v532, 2
      %v538 = vxor.u32 %v522, 2147483648
      %v539 = vsel %vm537, %v538, %v530
      %v540 = vsel %vm533, %v536, %v539
      %v541 = vsel %vm531, nan, %v540
      %v542 = vand.u32 2147483647, %v228
      %vm543 = vcmp.le.f32.partialorder %v542, 0.7853982
      %vm544 = vcmp.lt.s32.totalorder %v228, 0
      %v545 = vand.u32 %v228, 2139095040
      %v546 = vshrl.u32 %v545, 23
      %v547 = vsub.s32 %v546, 127
      %v548 = vand.u32 2147483647, %v228
      %v549 = vand.u32 %v548, 8388607
      %v550 = vor.u32 %v549, 8388608
      %v551 = vsub.s32 0, %v550
      %v552 = vadd.s32 %v547, 1
      %vm553 = vcmp.gt.s32.totalorder %v552, 0
      %v554 = vsel %vm553, %v552, 0
      %v555 = vshrl.u32 %v554, 5
      %v556 = vand.u32 %v554, 31
      %v557 = vsub.s32 32, %v556
      %v558 = vshrl.u32 683565275, %v557
      %v559 = vshll.u32 683565275, %v556
      %v560 = vshrl.u32 2475754826, %v557
      %v561 = vor.u32 %v559, %v560
      %v562 = vshll.u32 2475754826, %v556
      %v563 = vshrl.u32 2131351028, %v557
      %v564 = vor.u32 %v562, %v563
      %v565 = vshll.u32 2131351028, %v556
      %v566 = vshrl.u32 2102212464, %v557
      %v567 = vor.u32 %v565, %v566
      %v568 = vshll.u32 2102212464, %v556
      %v569 = vshrl.u32 920167782, %v557
      %v570 = vor.u32 %v568, %v569
      %v571 = vshll.u32 920167782, %v556
      %v572 = vshrl.u32 1326507024, %v557
      %v573 = vor.u32 %v571, %v572
      %vm574 = vcmp.lt.s32.totalorder %v555, 1
      %vm575 = vcmp.lt.s32.totalorder %v555, 2
      %vm576 = vcmp.lt.s32.totalorder %v555, 3
      %vm577 = vcmp.lt.s32.totalorder %v555, 4
      %v578 = vsel %vm574, %v558, %v561
      %v579 = vsel %vm577, %v567, 2102212464
      %v580 = vsel %vm576, %v564, %v579
      %v581 = vsel %vm575, %v578, %v580
      %v582 = vsel %vm574, %v561, %v564
      %v583 = vsel %vm577, %v570, 920167782
      %v584 = vsel %vm576, %v567, %v583
      %v585 = vsel %vm575, %v582, %v584
      %v586 = vsel %vm574, %v564, %v567
      %v587 = vsel %vm577, %v573, 1326507024
      %v588 = vsel %vm576, %v570, %v587
      %v589 = vsel %vm575, %v586, %v588
      %v590 = vshll.u32 %v550, 8
      %v591 = vand.u32 %v590, 65535
      %v592 = vshrl.u32 %v590, 16
      %v593 = vand.u32 %v589, 65535
      %v594 = vshrl.u32 %v589, 16
      %v595 = vmul.u32 %v591, %v593
      %v596 = vmul.u32 %v591, %v594
      %v597 = vmul.u32 %v592, %v593
      %v598 = vmul.u32 %v592, %v594
      %v599 = vshll.u32 %v596, 16
      %v600 = vshrl.u32 %v596, 16
      %v601 = vshll.u32 %v597, 16
      %v602 = vshrl.u32 %v597, 16
      %vm603 = vc.u32 %v595, %v599
      %v604 = vsel %vm603, 1, 0
      %v605 = vadd.s32 %v595, %v599
      %v606 = vadd.s32 %v598, %v604
      %vm607 = vc.u32 %v605, %v601
      %v608 = vsel %vm607, 1, 0
      %v609 = vadd.s32 %v605, %v601
      %v610 = vadd.s32 %v606, %v608
      %v611 = vadd.s32 %v610, %v600
      %v612 = vadd.s32 %v611, %v602
      %v613 = vand.u32 %v590, 65535
      %v614 = vshrl.u32 %v590, 16
      %v615 = vand.u32 %v585, 65535
      %v616 = vshrl.u32 %v585, 16
      %v617 = vmul.u32 %v613, %v615
      %v618 = vmul.u32 %v613, %v616
      %v619 = vmul.u32 %v614, %v615
      %v620 = vmul.u32 %v614, %v616
      %v621 = vshll.u32 %v618, 16
      %v622 = vshrl.u32 %v618, 16
      %v623 = vshll.u32 %v619, 16
      %v624 = vshrl.u32 %v619, 16
      %vm625 = vc.u32 %v617, %v621
      %v626 = vsel %vm625, 1, 0
      %v627 = vadd.s32 %v617, %v621
      %v628 = vadd.s32 %v620, %v626
      %vm629 = vc.u32 %v627, %v623
      %v630 = vsel %vm629, 1, 0
      %v631 = vadd.s32 %v627, %v623
      %v632 = vadd.s32 %v628, %v630
      %v633 = vadd.s32 %v632, %v622
      %v634 = vadd.s32 %v633, %v624
      %v635 = vmul.u32 %v590, %v581
      %v636 = vadd.s32 %v612, %v631
      %vm637 = vc.u32 %v612, %v631
      %v638 = vadd.s32 %v634, 1
      %v639 = vsel %vm637, %v638, %v634
      %v640 = vadd.s32 %v635, %v639
      %v641 = vadd.s32 %v640, 536870912
      %v642 = vshrl.u32 %v641, 30
      %v643 = vshll.u32 %v642, 30
      %v644 = vsub.s32 %v640, %v643
      %vm645 = vcmp.lt.s32.totalorder %v644, 0
      %v646 = vsub.s32 0, %v644
      %v647 = vsel %vm645, %v646, %v644
      %v648 = vclz %v647
      %v649 = vsub.s32 %v648, 2
      %vm650 = vcmp.gt.s32.totalorder 0, %v649
      %v651 = vsel %vm650, 0, %v649
      %v652 = vsub.s32 32, %v651
      %v653 = vshll.u32 %v644, %v651
      %v654 = vshrl.u32 %v636, %v652
      %v655 = vor.u32 %v653, %v654
      %v656 = vsub.s32 4294967266, %v651
      %v657 = vadd.s32 %v656, 127
      %v658 = vshll.u32 %v657, 23
      %v659 = vor.u32 4788187, %v658
      %v660 = vand.u32 2147483647, %v659
      %v662 = vcvt.s32.f32 %v655
      %v663 = vmul.f32 %v662, %v660
      %v664 = vxor.u32 %v663, 2147483648
      %v665 = vsel %vm544, %v664, %v663
      %v666 = vsub.s32 4, %v642
      %v667 = vsel %vm544, %v666, %v642
      %v668 = vsel %vm543, %v228, %v665
      %v669 = vsel %vm543, 0, %v667
      %v670 = vmul.f32 %v668, %v668
      %v671 = vmul.f32 %v670, -0.001358992
      %v672 = vadd.f32 %v671, 0.041655596
      %v673 = vmul.f32 %v670, %v672
      %v674 = vadd.f32 %v673, -0.4999988
      %v675 = vmul.f32 %v670, %v674
      %v676 = vadd.f32 1.0, %v675
      %v677 = vmul.f32 %v668, %v668
      %v678 = vmul.f32 %v677, -0.00019511016
      %v679 = vadd.f32 %v678, 0.008332121
      %v680 = vmul.f32 %v677, %v679
      %v681 = vadd.f32 %v680, -0.16666654
      %v682 = vmul.f32 %v677, %v681
      %v683 = vadd.f32 %v682, 1.0
      %v684 = vmul.f32 %v683, %v668
      %vm685 = vweird.f32 %v228
      %v686 = vand.u32 %v669, 3
      %vm687 = vcmp.lt.s32.totalorder %v686, 2
      %vm688 = vcmp.eq.s32.totalorder %v686, 0
      %v689 = vxor.u32 %v684, 2147483648
      %v690 = vsel %vm688, %v676, %v689
      %vm691 = vcmp.eq.s32.totalorder %v686, 2
      %v692 = vxor.u32 %v676, 2147483648
      %v693 = vsel %vm691, %v692, %v684
      %v694 = vsel %vm687, %v690, %v693
      %v695 = vsel %vm685, nan, %v694
      %v696 = vand.u32 2147483647, %v229
      %vm697 = vcmp.le.f32.partialorder %v696, 0.7853982
      %vm698 = vcmp.lt.s32.totalorder %v229, 0
      %v699 = vand.u32 %v229, 2139095040
      %v700 = vshrl.u32 %v699, 23
      %v701 = vsub.s32 %v700, 127
      %v702 = vand.u32 2147483647, %v229
      %v703 = vand.u32 %v702, 8388607
      %v704 = vor.u32 %v703, 8388608
      %v705 = vsub.s32 0, %v704
      %v706 = vadd.s32 %v701, 1
      %vm707 = vcmp.gt.s32.totalorder %v706, 0
      %v708 = vsel %vm707, %v706, 0
      %v709 = vshrl.u32 %v708, 5
      %v710 = vand.u32 %v708, 31
      %v711 = vsub.s32 32, %v710
      %v712 = vshrl.u32 683565275, %v711
      %v713 = vshll.u32 683565275, %v710
      %v714 = vshrl.u32 2475754826, %v711
      %v715 = vor.u32 %v713, %v714
      %v716 = vshll.u32 2475754826, %v710
      %v717 = vshrl.u32 2131351028, %v711
      %v718 = vor.u32 %v716, %v717
      %v719 = vshll.u32 2131351028, %v710
      %v720 = vshrl.u32 2102212464, %v711
      %v721 = vor.u32 %v719, %v720
      %v722 = vshll.u32 2102212464, %v710
      %v723 = vshrl.u32 920167782, %v711
      %v724 = vor.u32 %v722, %v723
      %v725 = vshll.u32 920167782, %v710
      %v726 = vshrl.u32 1326507024, %v711
      %v727 = vor.u32 %v725, %v726
      %vm728 = vcmp.lt.s32.totalorder %v709, 1
      %vm729 = vcmp.lt.s32.totalorder %v709, 2
      %vm730 = vcmp.lt.s32.totalorder %v709, 3
      %vm731 = vcmp.lt.s32.totalorder %v709, 4
      %v732 = vsel %vm728, %v712, %v715
      %v733 = vsel %vm731, %v721, 2102212464
      %v734 = vsel %vm730, %v718, %v733
      %v735 = vsel %vm729, %v732, %v734
      %v736 = vsel %vm728, %v715, %v718
      %v737 = vsel %vm731, %v724, 920167782
      %v738 = vsel %vm730, %v721, %v737
      %v739 = vsel %vm729, %v736, %v738
      %v740 = vsel %vm728, %v718, %v721
      %v741 = vsel %vm731, %v727, 1326507024
      %v742 = vsel %vm730, %v724, %v741
      %v743 = vsel %vm729, %v740, %v742
      %v744 = vshll.u32 %v704, 8
      %v745 = vand.u32 %v744, 65535
      %v746 = vshrl.u32 %v744, 16
      %v747 = vand.u32 %v743, 65535
      %v748 = vshrl.u32 %v743, 16
      %v749 = vmul.u32 %v745, %v747
      %v750 = vmul.u32 %v745, %v748
      %v751 = vmul.u32 %v746, %v747
      %v752 = vmul.u32 %v746, %v748
      %v753 = vshll.u32 %v750, 16
      %v754 = vshrl.u32 %v750, 16
      %v755 = vshll.u32 %v751, 16
      %v756 = vshrl.u32 %v751, 16
      %vm757 = vc.u32 %v749, %v753
      %v758 = vsel %vm757, 1, 0
      %v759 = vadd.s32 %v749, %v753
      %v760 = vadd.s32 %v752, %v758
      %vm761 = vc.u32 %v759, %v755
      %v762 = vsel %vm761, 1, 0
      %v763 = vadd.s32 %v759, %v755
      %v764 = vadd.s32 %v760, %v762
      %v765 = vadd.s32 %v764, %v754
      %v766 = vadd.s32 %v765, %v756
      %v767 = vand.u32 %v744, 65535
      %v768 = vshrl.u32 %v744, 16
      %v769 = vand.u32 %v739, 65535
      %v770 = vshrl.u32 %v739, 16
      %v771 = vmul.u32 %v767, %v769
      %v772 = vmul.u32 %v767, %v770
      %v773 = vmul.u32 %v768, %v769
      %v774 = vmul.u32 %v768, %v770
      %v775 = vshll.u32 %v772, 16
      %v776 = vshrl.u32 %v772, 16
      %v777 = vshll.u32 %v773, 16
      %v778 = vshrl.u32 %v773, 16
      %vm779 = vc.u32 %v771, %v775
      %v780 = vsel %vm779, 1, 0
      %v781 = vadd.s32 %v771, %v775
      %v782 = vadd.s32 %v774, %v780
      %vm783 = vc.u32 %v781, %v777
      %v784 = vsel %vm783, 1, 0
      %v785 = vadd.s32 %v781, %v777
      %v786 = vadd.s32 %v782, %v784
      %v787 = vadd.s32 %v786, %v776
      %v788 = vadd.s32 %v787, %v778
      %v789 = vmul.u32 %v744, %v735
      %v790 = vadd.s32 %v766, %v785
      %vm791 = vc.u32 %v766, %v785
      %v792 = vadd.s32 %v788, 1
      %v793 = vsel %vm791, %v792, %v788
      %v794 = vadd.s32 %v789, %v793
      %v795 = vadd.s32 %v794, 536870912
      %v796 = vshrl.u32 %v795, 30
      %v797 = vshll.u32 %v796, 30
      %v798 = vsub.s32 %v794, %v797
      %vm799 = vcmp.lt.s32.totalorder %v798, 0
      %v800 = vsub.s32 0, %v798
      %v801 = vsel %vm799, %v800, %v798
      %v802 = vclz %v801
      %v803 = vsub.s32 %v802, 2
      %vm804 = vcmp.gt.s32.totalorder 0, %v803
      %v805 = vsel %vm804, 0, %v803
      %v806 = vsub.s32 32, %v805
      %v807 = vshll.u32 %v798, %v805
      %v808 = vshrl.u32 %v790, %v806
      %v809 = vor.u32 %v807, %v808
      %v810 = vsub.s32 4294967266, %v805
      %v811 = vadd.s32 %v810, 127
      %v812 = vshll.u32 %v811, 23
      %v813 = vor.u32 4788187, %v812
      %v814 = vand.u32 2147483647, %v813
      %v816 = vcvt.s32.f32 %v809
      %v817 = vmul.f32 %v816, %v814
      %v818 = vxor.u32 %v817, 2147483648
      %v819 = vsel %vm698, %v818, %v817
      %v820 = vsub.s32 4, %v796
      %v821 = vsel %vm698, %v820, %v796
      %v822 = vsel %vm697, %v229, %v819
      %v823 = vsel %vm697, 0, %v821
      %v824 = vmul.f32 %v822, %v822
      %v825 = vmul.f32 %v824, -0.001358992
      %v826 = vadd.f32 %v825, 0.041655596
      %v827 = vmul.f32 %v824, %v826
      %v828 = vadd.f32 %v827, -0.4999988
      %v829 = vmul.f32 %v824, %v828
      %v830 = vadd.f32 1.0, %v829
      %v831 = vmul.f32 %v822, %v822
      %v832 = vmul.f32 %v831, -0.00019511016
      %v833 = vadd.f32 %v832, 0.008332121
      %v834 = vmul.f32 %v831, %v833
      %v835 = vadd.f32 %v834, -0.16666654
      %v836 = vmul.f32 %v831, %v835
      %v837 = vadd.f32 %v836, 1.0
      %v838 = vmul.f32 %v837, %v822
      %vm839 = vweird.f32 %v229
      %v840 = vand.u32 %v823, 3
      %vm841 = vcmp.lt.s32.totalorder %v840, 2
      %vm842 = vcmp.eq.s32.totalorder %v840, 0
      %v843 = vxor.u32 %v838, 2147483648
      %v844 = vsel %vm842, %v830, %v843
      %vm845 = vcmp.eq.s32.totalorder %v840, 2
      %v846 = vxor.u32 %v830, 2147483648
      %v847 = vsel %vm845, %v846, %v838
      %v848 = vsel %vm841, %v844, %v847
      %v849 = vsel %vm839, nan, %v848
      %v850 = vand.u32 2147483647, %v230
      %vm851 = vcmp.le.f32.partialorder %v850, 0.7853982
      %vm852 = vcmp.lt.s32.totalorder %v230, 0
      %v853 = vand.u32 %v230, 2139095040
      %v854 = vshrl.u32 %v853, 23
      %v855 = vsub.s32 %v854, 127
      %v856 = vand.u32 2147483647, %v230
      %v857 = vand.u32 %v856, 8388607
      %v858 = vor.u32 %v857, 8388608
      %v859 = vsub.s32 0, %v858
      %v860 = vadd.s32 %v855, 1
      %vm861 = vcmp.gt.s32.totalorder %v860, 0
      %v862 = vsel %vm861, %v860, 0
      %v863 = vshrl.u32 %v862, 5
      %v864 = vand.u32 %v862, 31
      %v865 = vsub.s32 32, %v864
      %v866 = vshrl.u32 683565275, %v865
      %v867 = vshll.u32 683565275, %v864
      %v868 = vshrl.u32 2475754826, %v865
      %v869 = vor.u32 %v867, %v868
      %v870 = vshll.u32 2475754826, %v864
      %v871 = vshrl.u32 2131351028, %v865
      %v872 = vor.u32 %v870, %v871
      %v873 = vshll.u32 2131351028, %v864
      %v874 = vshrl.u32 2102212464, %v865
      %v875 = vor.u32 %v873, %v874
      %v876 = vshll.u32 2102212464, %v864
      %v877 = vshrl.u32 920167782, %v865
      %v878 = vor.u32 %v876, %v877
      %v879 = vshll.u32 920167782, %v864
      %v880 = vshrl.u32 1326507024, %v865
      %v881 = vor.u32 %v879, %v880
      %vm882 = vcmp.lt.s32.totalorder %v863, 1
      %vm883 = vcmp.lt.s32.totalorder %v863, 2
      %vm884 = vcmp.lt.s32.totalorder %v863, 3
      %vm885 = vcmp.lt.s32.totalorder %v863, 4
      %v886 = vsel %vm882, %v866, %v869
      %v887 = vsel %vm885, %v875, 2102212464
      %v888 = vsel %vm884, %v872, %v887
      %v889 = vsel %vm883, %v886, %v888
      %v890 = vsel %vm882, %v869, %v872
      %v891 = vsel %vm885, %v878, 920167782
      %v892 = vsel %vm884, %v875, %v891
      %v893 = vsel %vm883, %v890, %v892
      %v894 = vsel %vm882, %v872, %v875
      %v895 = vsel %vm885, %v881, 1326507024
      %v896 = vsel %vm884, %v878, %v895
      %v897 = vsel %vm883, %v894, %v896
      %v898 = vshll.u32 %v858, 8
      %v899 = vand.u32 %v898, 65535
      %v900 = vshrl.u32 %v898, 16
      %v901 = vand.u32 %v897, 65535
      %v902 = vshrl.u32 %v897, 16
      %v903 = vmul.u32 %v899, %v901
      %v904 = vmul.u32 %v899, %v902
      %v905 = vmul.u32 %v900, %v901
      %v906 = vmul.u32 %v900, %v902
      %v907 = vshll.u32 %v904, 16
      %v908 = vshrl.u32 %v904, 16
      %v909 = vshll.u32 %v905, 16
      %v910 = vshrl.u32 %v905, 16
      %vm911 = vc.u32 %v903, %v907
      %v912 = vsel %vm911, 1, 0
      %v913 = vadd.s32 %v903, %v907
      %v914 = vadd.s32 %v906, %v912
      %vm915 = vc.u32 %v913, %v909
      %v916 = vsel %vm915, 1, 0
      %v917 = vadd.s32 %v913, %v909
      %v918 = vadd.s32 %v914, %v916
      %v919 = vadd.s32 %v918, %v908
      %v920 = vadd.s32 %v919, %v910
      %v921 = vand.u32 %v898, 65535
      %v922 = vshrl.u32 %v898, 16
      %v923 = vand.u32 %v893, 65535
      %v924 = vshrl.u32 %v893, 16
      %v925 = vmul.u32 %v921, %v923
      %v926 = vmul.u32 %v921, %v924
      %v927 = vmul.u32 %v922, %v923
      %v928 = vmul.u32 %v922, %v924
      %v929 = vshll.u32 %v926, 16
      %v930 = vshrl.u32 %v926, 16
      %v931 = vshll.u32 %v927, 16
      %v932 = vshrl.u32 %v927, 16
      %vm933 = vc.u32 %v925, %v929
      %v934 = vsel %vm933, 1, 0
      %v935 = vadd.s32 %v925, %v929
      %v936 = vadd.s32 %v928, %v934
      %vm937 = vc.u32 %v935, %v931
      %v938 = vsel %vm937, 1, 0
      %v939 = vadd.s32 %v935, %v931
      %v940 = vadd.s32 %v936, %v938
      %v941 = vadd.s32 %v940, %v930
      %v942 = vadd.s32 %v941, %v932
      %v943 = vmul.u32 %v898, %v889
      %v944 = vadd.s32 %v920, %v939
      %vm945 = vc.u32 %v920, %v939
      %v946 = vadd.s32 %v942, 1
      %v947 = vsel %vm945, %v946, %v942
      %v948 = vadd.s32 %v943, %v947
      %v949 = vadd.s32 %v948, 536870912
      %v950 = vshrl.u32 %v949, 30
      %v951 = vshll.u32 %v950, 30
      %v952 = vsub.s32 %v948, %v951
      %vm953 = vcmp.lt.s32.totalorder %v952, 0
      %v954 = vsub.s32 0, %v952
      %v955 = vsel %vm953, %v954, %v952
      %v956 = vclz %v955
      %v957 = vsub.s32 %v956, 2
      %vm958 = vcmp.gt.s32.totalorder 0, %v957
      %v959 = vsel %vm958, 0, %v957
      %v960 = vsub.s32 32, %v959
      %v961 = vshll.u32 %v952, %v959
      %v962 = vshrl.u32 %v944, %v960
      %v963 = vor.u32 %v961, %v962
      %v964 = vsub.s32 4294967266, %v959
      %v965 = vadd.s32 %v964, 127
      %v966 = vshll.u32 %v965, 23
      %v967 = vor.u32 4788187, %v966
      %v968 = vand.u32 2147483647, %v967
      %v970 = vcvt.s32.f32 %v963
      %v971 = vmul.f32 %v970, %v968
      %v972 = vxor.u32 %v971, 2147483648
      %v973 = vsel %vm852, %v972, %v971
      %v974 = vsub.s32 4, %v950
      %v975 = vsel %vm852, %v974, %v950
      %v976 = vsel %vm851, %v230, %v973
      %v977 = vsel %vm851, 0, %v975
      %v978 = vmul.f32 %v976, %v976
      %v979 = vmul.f32 %v978, -0.001358992
      %v980 = vadd.f32 %v979, 0.041655596
      %v981 = vmul.f32 %v978, %v980
      %v982 = vadd.f32 %v981, -0.4999988
      %v983 = vmul.f32 %v978, %v982
      %v984 = vadd.f32 1.0, %v983
      %v985 = vmul.f32 %v976, %v976
      %v986 = vmul.f32 %v985, -0.00019511016
      %v987 = vadd.f32 %v986, 0.008332121
      %v988 = vmul.f32 %v985, %v987
      %v989 = vadd.f32 %v988, -0.16666654
      %v990 = vmul.f32 %v985, %v989
      %v991 = vadd.f32 %v990, 1.0
      %v992 = vmul.f32 %v991, %v976
      %vm993 = vweird.f32 %v230
      %v994 = vand.u32 %v977, 3
      %vm995 = vcmp.lt.s32.totalorder %v994, 2
      %vm996 = vcmp.eq.s32.totalorder %v994, 0
      %v997 = vxor.u32 %v992, 2147483648
      %v998 = vsel %vm996, %v984, %v997
      %vm999 = vcmp.eq.s32.totalorder %v994, 2
      %v1000 = vxor.u32 %v984, 2147483648
      %v1001 = vsel %vm999, %v1000, %v992
      %v1002 = vsel %vm995, %v998, %v1001
      %v1003 = vsel %vm993, nan, %v1002
      %v1004 = vand.u32 2147483647, %v231
      %vm1005 = vcmp.le.f32.partialorder %v1004, 0.7853982
      %vm1006 = vcmp.lt.s32.totalorder %v231, 0
      %v1007 = vand.u32 %v231, 2139095040
      %v1008 = vshrl.u32 %v1007, 23
      %v1009 = vsub.s32 %v1008, 127
      %v1010 = vand.u32 2147483647, %v231
      %v1011 = vand.u32 %v1010, 8388607
      %v1012 = vor.u32 %v1011, 8388608
      %v1013 = vsub.s32 0, %v1012
      %v1014 = vadd.s32 %v1009, 1
      %vm1015 = vcmp.gt.s32.totalorder %v1014, 0
      %v1016 = vsel %vm1015, %v1014, 0
      %v1017 = vshrl.u32 %v1016, 5
      %v1018 = vand.u32 %v1016, 31
      %v1019 = vsub.s32 32, %v1018
      %v1020 = vshrl.u32 683565275, %v1019
      %v1021 = vshll.u32 683565275, %v1018
      %v1022 = vshrl.u32 2475754826, %v1019
      %v1023 = vor.u32 %v1021, %v1022
      %v1024 = vshll.u32 2475754826, %v1018
      %v1025 = vshrl.u32 2131351028, %v1019
      %v1026 = vor.u32 %v1024, %v1025
      %v1027 = vshll.u32 2131351028, %v1018
      %v1028 = vshrl.u32 2102212464, %v1019
      %v1029 = vor.u32 %v1027, %v1028
      %v1030 = vshll.u32 2102212464, %v1018
      %v1031 = vshrl.u32 920167782, %v1019
      %v1032 = vor.u32 %v1030, %v1031
      %v1033 = vshll.u32 920167782, %v1018
      %v1034 = vshrl.u32 1326507024, %v1019
      %v1035 = vor.u32 %v1033, %v1034
      %vm1036 = vcmp.lt.s32.totalorder %v1017, 1
      %vm1037 = vcmp.lt.s32.totalorder %v1017, 2
      %vm1038 = vcmp.lt.s32.totalorder %v1017, 3
      %vm1039 = vcmp.lt.s32.totalorder %v1017, 4
      %v1040 = vsel %vm1036, %v1020, %v1023
      %v1041 = vsel %vm1039, %v1029, 2102212464
      %v1042 = vsel %vm1038, %v1026, %v1041
      %v1043 = vsel %vm1037, %v1040, %v1042
      %v1044 = vsel %vm1036, %v1023, %v1026
      %v1045 = vsel %vm1039, %v1032, 920167782
      %v1046 = vsel %vm1038, %v1029, %v1045
      %v1047 = vsel %vm1037, %v1044, %v1046
      %v1048 = vsel %vm1036, %v1026, %v1029
      %v1049 = vsel %vm1039, %v1035, 1326507024
      %v1050 = vsel %vm1038, %v1032, %v1049
      %v1051 = vsel %vm1037, %v1048, %v1050
      %v1052 = vshll.u32 %v1012, 8
      %v1053 = vand.u32 %v1052, 65535
      %v1054 = vshrl.u32 %v1052, 16
      %v1055 = vand.u32 %v1051, 65535
      %v1056 = vshrl.u32 %v1051, 16
      %v1057 = vmul.u32 %v1053, %v1055
      %v1058 = vmul.u32 %v1053, %v1056
      %v1059 = vmul.u32 %v1054, %v1055
      %v1060 = vmul.u32 %v1054, %v1056
      %v1061 = vshll.u32 %v1058, 16
      %v1062 = vshrl.u32 %v1058, 16
      %v1063 = vshll.u32 %v1059, 16
      %v1064 = vshrl.u32 %v1059, 16
      %vm1065 = vc.u32 %v1057, %v1061
      %v1066 = vsel %vm1065, 1, 0
      %v1067 = vadd.s32 %v1057, %v1061
      %v1068 = vadd.s32 %v1060, %v1066
      %vm1069 = vc.u32 %v1067, %v1063
      %v1070 = vsel %vm1069, 1, 0
      %v1071 = vadd.s32 %v1067, %v1063
      %v1072 = vadd.s32 %v1068, %v1070
      %v1073 = vadd.s32 %v1072, %v1062
      %v1074 = vadd.s32 %v1073, %v1064
      %v1075 = vand.u32 %v1052, 65535
      %v1076 = vshrl.u32 %v1052, 16
      %v1077 = vand.u32 %v1047, 65535
      %v1078 = vshrl.u32 %v1047, 16
      %v1079 = vmul.u32 %v1075, %v1077
      %v1080 = vmul.u32 %v1075, %v1078
      %v1081 = vmul.u32 %v1076, %v1077
      %v1082 = vmul.u32 %v1076, %v1078
      %v1083 = vshll.u32 %v1080, 16
      %v1084 = vshrl.u32 %v1080, 16
      %v1085 = vshll.u32 %v1081, 16
      %v1086 = vshrl.u32 %v1081, 16
      %vm1087 = vc.u32 %v1079, %v1083
      %v1088 = vsel %vm1087, 1, 0
      %v1089 = vadd.s32 %v1079, %v1083
      %v1090 = vadd.s32 %v1082, %v1088
      %vm1091 = vc.u32 %v1089, %v1085
      %v1092 = vsel %vm1091, 1, 0
      %v1093 = vadd.s32 %v1089, %v1085
      %v1094 = vadd.s32 %v1090, %v1092
      %v1095 = vadd.s32 %v1094, %v1084
      %v1096 = vadd.s32 %v1095, %v1086
      %v1097 = vmul.u32 %v1052, %v1043
      %v1098 = vadd.s32 %v1074, %v1093
      %vm1099 = vc.u32 %v1074, %v1093
      %v1100 = vadd.s32 %v1096, 1
      %v1101 = vsel %vm1099, %v1100, %v1096
      %v1102 = vadd.s32 %v1097, %v1101
      %v1103 = vadd.s32 %v1102, 536870912
      %v1104 = vshrl.u32 %v1103, 30
      %v1105 = vshll.u32 %v1104, 30
      %v1106 = vsub.s32 %v1102, %v1105
      %vm1107 = vcmp.lt.s32.totalorder %v1106, 0
      %v1108 = vsub.s32 0, %v1106
      %v1109 = vsel %vm1107, %v1108, %v1106
      %v1110 = vclz %v1109
      %v1111 = vsub.s32 %v1110, 2
      %vm1112 = vcmp.gt.s32.totalorder 0, %v1111
      %v1113 = vsel %vm1112, 0, %v1111
      %v1114 = vsub.s32 32, %v1113
      %v1115 = vshll.u32 %v1106, %v1113
      %v1116 = vshrl.u32 %v1098, %v1114
      %v1117 = vor.u32 %v1115, %v1116
      %v1118 = vsub.s32 4294967266, %v1113
      %v1119 = vadd.s32 %v1118, 127
      %v1120 = vshll.u32 %v1119, 23
      %v1121 = vor.u32 4788187, %v1120
      %v1122 = vand.u32 2147483647, %v1121
      %v1124 = vcvt.s32.f32 %v1117
      %v1125 = vmul.f32 %v1124, %v1122
      %v1126 = vxor.u32 %v1125, 2147483648
      %v1127 = vsel %vm1006, %v1126, %v1125
      %v1128 = vsub.s32 4, %v1104
      %v1129 = vsel %vm1006, %v1128, %v1104
      %v1130 = vsel %vm1005, %v231, %v1127
      %v1131 = vsel %vm1005, 0, %v1129
      %v1132 = vmul.f32 %v1130, %v1130
      %v1133 = vmul.f32 %v1132, -0.001358992
      %v1134 = vadd.f32 %v1133, 0.041655596
      %v1135 = vmul.f32 %v1132, %v1134
      %v1136 = vadd.f32 %v1135, -0.4999988
      %v1137 = vmul.f32 %v1132, %v1136
      %v1138 = vadd.f32 1.0, %v1137
      %v1139 = vmul.f32 %v1130, %v1130
      %v1140 = vmul.f32 %v1139, -0.00019511016
      %v1141 = vadd.f32 %v1140, 0.008332121
      %v1142 = vmul.f32 %v1139, %v1141
      %v1143 = vadd.f32 %v1142, -0.16666654
      %v1144 = vmul.f32 %v1139, %v1143
      %v1145 = vadd.f32 %v1144, 1.0
      %v1146 = vmul.f32 %v1145, %v1130
      %vm1147 = vweird.f32 %v231
      %v1148 = vand.u32 %v1131, 3
      %vm1149 = vcmp.lt.s32.totalorder %v1148, 2
      %vm1150 = vcmp.eq.s32.totalorder %v1148, 0
      %v1151 = vxor.u32 %v1146, 2147483648
      %v1152 = vsel %vm1150, %v1138, %v1151
      %vm1153 = vcmp.eq.s32.totalorder %v1148, 2
      %v1154 = vxor.u32 %v1138, 2147483648
      %v1155 = vsel %vm1153, %v1154, %v1146
      %v1156 = vsel %vm1149, %v1152, %v1155
      %v1157 = vsel %vm1147, nan, %v1156
      %v1158 = vand.u32 2147483647, %v232
      %vm1159 = vcmp.le.f32.partialorder %v1158, 0.7853982
      %vm1160 = vcmp.lt.s32.totalorder %v232, 0
      %v1161 = vand.u32 %v232, 2139095040
      %v1162 = vshrl.u32 %v1161, 23
      %v1163 = vsub.s32 %v1162, 127
      %v1164 = vand.u32 2147483647, %v232
      %v1165 = vand.u32 %v1164, 8388607
      %v1166 = vor.u32 %v1165, 8388608
      %v1167 = vsub.s32 0, %v1166
      %v1168 = vadd.s32 %v1163, 1
      %vm1169 = vcmp.gt.s32.totalorder %v1168, 0
      %v1170 = vsel %vm1169, %v1168, 0
      %v1171 = vshrl.u32 %v1170, 5
      %v1172 = vand.u32 %v1170, 31
      %v1173 = vsub.s32 32, %v1172
      %v1174 = vshrl.u32 683565275, %v1173
      %v1175 = vshll.u32 683565275, %v1172
      %v1176 = vshrl.u32 2475754826, %v1173
      %v1177 = vor.u32 %v1175, %v1176
      %v1178 = vshll.u32 2475754826, %v1172
      %v1179 = vshrl.u32 2131351028, %v1173
      %v1180 = vor.u32 %v1178, %v1179
      %v1181 = vshll.u32 2131351028, %v1172
      %v1182 = vshrl.u32 2102212464, %v1173
      %v1183 = vor.u32 %v1181, %v1182
      %v1184 = vshll.u32 2102212464, %v1172
      %v1185 = vshrl.u32 920167782, %v1173
      %v1186 = vor.u32 %v1184, %v1185
      %v1187 = vshll.u32 920167782, %v1172
      %v1188 = vshrl.u32 1326507024, %v1173
      %v1189 = vor.u32 %v1187, %v1188
      %vm1190 = vcmp.lt.s32.totalorder %v1171, 1
      %vm1191 = vcmp.lt.s32.totalorder %v1171, 2
      %vm1192 = vcmp.lt.s32.totalorder %v1171, 3
      %vm1193 = vcmp.lt.s32.totalorder %v1171, 4
      %v1194 = vsel %vm1190, %v1174, %v1177
      %v1195 = vsel %vm1193, %v1183, 2102212464
      %v1196 = vsel %vm1192, %v1180, %v1195
      %v1197 = vsel %vm1191, %v1194, %v1196
      %v1198 = vsel %vm1190, %v1177, %v1180
      %v1199 = vsel %vm1193, %v1186, 920167782
      %v1200 = vsel %vm1192, %v1183, %v1199
      %v1201 = vsel %vm1191, %v1198, %v1200
      %v1202 = vsel %vm1190, %v1180, %v1183
      %v1203 = vsel %vm1193, %v1189, 1326507024
      %v1204 = vsel %vm1192, %v1186, %v1203
      %v1205 = vsel %vm1191, %v1202, %v1204
      %v1206 = vshll.u32 %v1166, 8
      %v1207 = vand.u32 %v1206, 65535
      %v1208 = vshrl.u32 %v1206, 16
      %v1209 = vand.u32 %v1205, 65535
      %v1210 = vshrl.u32 %v1205, 16
      %v1211 = vmul.u32 %v1207, %v1209
      %v1212 = vmul.u32 %v1207, %v1210
      %v1213 = vmul.u32 %v1208, %v1209
      %v1214 = vmul.u32 %v1208, %v1210
      %v1215 = vshll.u32 %v1212, 16
      %v1216 = vshrl.u32 %v1212, 16
      %v1217 = vshll.u32 %v1213, 16
      %v1218 = vshrl.u32 %v1213, 16
      %vm1219 = vc.u32 %v1211, %v1215
      %v1220 = vsel %vm1219, 1, 0
      %v1221 = vadd.s32 %v1211, %v1215
      %v1222 = vadd.s32 %v1214, %v1220
      %vm1223 = vc.u32 %v1221, %v1217
      %v1224 = vsel %vm1223, 1, 0
      %v1225 = vadd.s32 %v1221, %v1217
      %v1226 = vadd.s32 %v1222, %v1224
      %v1227 = vadd.s32 %v1226, %v1216
      %v1228 = vadd.s32 %v1227, %v1218
      %v1229 = vand.u32 %v1206, 65535
      %v1230 = vshrl.u32 %v1206, 16
      %v1231 = vand.u32 %v1201, 65535
      %v1232 = vshrl.u32 %v1201, 16
      %v1233 = vmul.u32 %v1229, %v1231
      %v1234 = vmul.u32 %v1229, %v1232
      %v1235 = vmul.u32 %v1230, %v1231
      %v1236 = vmul.u32 %v1230, %v1232
      %v1237 = vshll.u32 %v1234, 16
      %v1238 = vshrl.u32 %v1234, 16
      %v1239 = vshll.u32 %v1235, 16
      %v1240 = vshrl.u32 %v1235, 16
      %vm1241 = vc.u32 %v1233, %v1237
      %v1242 = vsel %vm1241, 1, 0
      %v1243 = vadd.s32 %v1233, %v1237
      %v1244 = vadd.s32 %v1236, %v1242
      %vm1245 = vc.u32 %v1243, %v1239
      %v1246 = vsel %vm1245, 1, 0
      %v1247 = vadd.s32 %v1243, %v1239
      %v1248 = vadd.s32 %v1244, %v1246
      %v1249 = vadd.s32 %v1248, %v1238
      %v1250 = vadd.s32 %v1249, %v1240
      %v1251 = vmul.u32 %v1206, %v1197
      %v1252 = vadd.s32 %v1228, %v1247
      %vm1253 = vc.u32 %v1228, %v1247
      %v1254 = vadd.s32 %v1250, 1
      %v1255 = vsel %vm1253, %v1254, %v1250
      %v1256 = vadd.s32 %v1251, %v1255
      %v1257 = vadd.s32 %v1256, 536870912
      %v1258 = vshrl.u32 %v1257, 30
      %v1259 = vshll.u32 %v1258, 30
      %v1260 = vsub.s32 %v1256, %v1259
      %vm1261 = vcmp.lt.s32.totalorder %v1260, 0
      %v1262 = vsub.s32 0, %v1260
      %v1263 = vsel %vm1261, %v1262, %v1260
      %v1264 = vclz %v1263
      %v1265 = vsub.s32 %v1264, 2
      %vm1266 = vcmp.gt.s32.totalorder 0, %v1265
      %v1267 = vsel %vm1266, 0, %v1265
      %v1268 = vsub.s32 32, %v1267
      %v1269 = vshll.u32 %v1260, %v1267
      %v1270 = vshrl.u32 %v1252, %v1268
      %v1271 = vor.u32 %v1269, %v1270
      %v1272 = vsub.s32 4294967266, %v1267
      %v1273 = vadd.s32 %v1272, 127
      %v1274 = vshll.u32 %v1273, 23
      %v1275 = vor.u32 4788187, %v1274
      %v1276 = vand.u32 2147483647, %v1275
      %v1278 = vcvt.s32.f32 %v1271
      %v1279 = vmul.f32 %v1278, %v1276
      %v1280 = vxor.u32 %v1279, 2147483648
      %v1281 = vsel %vm1160, %v1280, %v1279
      %v1282 = vsub.s32 4, %v1258
      %v1283 = vsel %vm1160, %v1282, %v1258
      %v1284 = vsel %vm1159, %v232, %v1281
      %v1285 = vsel %vm1159, 0, %v1283
      %v1286 = vmul.f32 %v1284, %v1284
      %v1287 = vmul.f32 %v1286, -0.001358992
      %v1288 = vadd.f32 %v1287, 0.041655596
      %v1289 = vmul.f32 %v1286, %v1288
      %v1290 = vadd.f32 %v1289, -0.4999988
      %v1291 = vmul.f32 %v1286, %v1290
      %v1292 = vadd.f32 1.0, %v1291
      %v1293 = vmul.f32 %v1284, %v1284
      %v1294 = vmul.f32 %v1293, -0.00019511016
      %v1295 = vadd.f32 %v1294, 0.008332121
      %v1296 = vmul.f32 %v1293, %v1295
      %v1297 = vadd.f32 %v1296, -0.16666654
      %v1298 = vmul.f32 %v1293, %v1297
      %v1299 = vadd.f32 %v1298, 1.0
      %v1300 = vmul.f32 %v1299, %v1284
      %vm1301 = vweird.f32 %v232
      %v1302 = vand.u32 %v1285, 3
      %vm1303 = vcmp.lt.s32.totalorder %v1302, 2
      %vm1304 = vcmp.eq.s32.totalorder %v1302, 0
      %v1305 = vxor.u32 %v1300, 2147483648
      %v1306 = vsel %vm1304, %v1292, %v1305
      %vm1307 = vcmp.eq.s32.totalorder %v1302, 2
      %v1308 = vxor.u32 %v1292, 2147483648
      %v1309 = vsel %vm1307, %v1308, %v1300
      %v1310 = vsel %vm1303, %v1306, %v1309
      %v1311 = vsel %vm1301, nan, %v1310
      %v1312 = vand.u32 2147483647, %v233
      %vm1313 = vcmp.le.f32.partialorder %v1312, 0.7853982
      %vm1314 = vcmp.lt.s32.totalorder %v233, 0
      %v1315 = vand.u32 %v233, 2139095040
      %v1316 = vshrl.u32 %v1315, 23
      %v1317 = vsub.s32 %v1316, 127
      %v1318 = vand.u32 2147483647, %v233
      %v1319 = vand.u32 %v1318, 8388607
      %v1320 = vor.u32 %v1319, 8388608
      %v1321 = vsub.s32 0, %v1320
      %v1322 = vadd.s32 %v1317, 1
      %vm1323 = vcmp.gt.s32.totalorder %v1322, 0
      %v1324 = vsel %vm1323, %v1322, 0
      %v1325 = vshrl.u32 %v1324, 5
      %v1326 = vand.u32 %v1324, 31
      %v1327 = vsub.s32 32, %v1326
      %v1328 = vshrl.u32 683565275, %v1327
      %v1329 = vshll.u32 683565275, %v1326
      %v1330 = vshrl.u32 2475754826, %v1327
      %v1331 = vor.u32 %v1329, %v1330
      %v1332 = vshll.u32 2475754826, %v1326
      %v1333 = vshrl.u32 2131351028, %v1327
      %v1334 = vor.u32 %v1332, %v1333
      %v1335 = vshll.u32 2131351028, %v1326
      %v1336 = vshrl.u32 2102212464, %v1327
      %v1337 = vor.u32 %v1335, %v1336
      %v1338 = vshll.u32 2102212464, %v1326
      %v1339 = vshrl.u32 920167782, %v1327
      %v1340 = vor.u32 %v1338, %v1339
      %v1341 = vshll.u32 920167782, %v1326
      %v1342 = vshrl.u32 1326507024, %v1327
      %v1343 = vor.u32 %v1341, %v1342
      %vm1344 = vcmp.lt.s32.totalorder %v1325, 1
      %vm1345 = vcmp.lt.s32.totalorder %v1325, 2
      %vm1346 = vcmp.lt.s32.totalorder %v1325, 3
      %vm1347 = vcmp.lt.s32.totalorder %v1325, 4
      %v1348 = vsel %vm1344, %v1328, %v1331
      %v1349 = vsel %vm1347, %v1337, 2102212464
      %v1350 = vsel %vm1346, %v1334, %v1349
      %v1351 = vsel %vm1345, %v1348, %v1350
      %v1352 = vsel %vm1344, %v1331, %v1334
      %v1353 = vsel %vm1347, %v1340, 920167782
      %v1354 = vsel %vm1346, %v1337, %v1353
      %v1355 = vsel %vm1345, %v1352, %v1354
      %v1356 = vsel %vm1344, %v1334, %v1337
      %v1357 = vsel %vm1347, %v1343, 1326507024
      %v1358 = vsel %vm1346, %v1340, %v1357
      %v1359 = vsel %vm1345, %v1356, %v1358
      %v1360 = vshll.u32 %v1320, 8
      %v1361 = vand.u32 %v1360, 65535
      %v1362 = vshrl.u32 %v1360, 16
      %v1363 = vand.u32 %v1359, 65535
      %v1364 = vshrl.u32 %v1359, 16
      %v1365 = vmul.u32 %v1361, %v1363
      %v1366 = vmul.u32 %v1361, %v1364
      %v1367 = vmul.u32 %v1362, %v1363
      %v1368 = vmul.u32 %v1362, %v1364
      %v1369 = vshll.u32 %v1366, 16
      %v1370 = vshrl.u32 %v1366, 16
      %v1371 = vshll.u32 %v1367, 16
      %v1372 = vshrl.u32 %v1367, 16
      %vm1373 = vc.u32 %v1365, %v1369
      %v1374 = vsel %vm1373, 1, 0
      %v1375 = vadd.s32 %v1365, %v1369
      %v1376 = vadd.s32 %v1368, %v1374
      %vm1377 = vc.u32 %v1375, %v1371
      %v1378 = vsel %vm1377, 1, 0
      %v1379 = vadd.s32 %v1375, %v1371
      %v1380 = vadd.s32 %v1376, %v1378
      %v1381 = vadd.s32 %v1380, %v1370
      %v1382 = vadd.s32 %v1381, %v1372
      %v1383 = vand.u32 %v1360, 65535
      %v1384 = vshrl.u32 %v1360, 16
      %v1385 = vand.u32 %v1355, 65535
      %v1386 = vshrl.u32 %v1355, 16
      %v1387 = vmul.u32 %v1383, %v1385
      %v1388 = vmul.u32 %v1383, %v1386
      %v1389 = vmul.u32 %v1384, %v1385
      %v1390 = vmul.u32 %v1384, %v1386
      %v1391 = vshll.u32 %v1388, 16
      %v1392 = vshrl.u32 %v1388, 16
      %v1393 = vshll.u32 %v1389, 16
      %v1394 = vshrl.u32 %v1389, 16
      %vm1395 = vc.u32 %v1387, %v1391
      %v1396 = vsel %vm1395, 1, 0
      %v1397 = vadd.s32 %v1387, %v1391
      %v1398 = vadd.s32 %v1390, %v1396
      %vm1399 = vc.u32 %v1397, %v1393
      %v1400 = vsel %vm1399, 1, 0
      %v1401 = vadd.s32 %v1397, %v1393
      %v1402 = vadd.s32 %v1398, %v1400
      %v1403 = vadd.s32 %v1402, %v1392
      %v1404 = vadd.s32 %v1403, %v1394
      %v1405 = vmul.u32 %v1360, %v1351
      %v1406 = vadd.s32 %v1382, %v1401
      %vm1407 = vc.u32 %v1382, %v1401
      %v1408 = vadd.s32 %v1404, 1
      %v1409 = vsel %vm1407, %v1408, %v1404
      %v1410 = vadd.s32 %v1405, %v1409
      %v1411 = vadd.s32 %v1410, 536870912
      %v1412 = vshrl.u32 %v1411, 30
      %v1413 = vshll.u32 %v1412, 30
      %v1414 = vsub.s32 %v1410, %v1413
      %vm1415 = vcmp.lt.s32.totalorder %v1414, 0
      %v1416 = vsub.s32 0, %v1414
      %v1417 = vsel %vm1415, %v1416, %v1414
      %v1418 = vclz %v1417
      %v1419 = vsub.s32 %v1418, 2
      %vm1420 = vcmp.gt.s32.totalorder 0, %v1419
      %v1421 = vsel %vm1420, 0, %v1419
      %v1422 = vsub.s32 32, %v1421
      %v1423 = vshll.u32 %v1414, %v1421
      %v1424 = vshrl.u32 %v1406, %v1422
      %v1425 = vor.u32 %v1423, %v1424
      %v1426 = vsub.s32 4294967266, %v1421
      %v1427 = vadd.s32 %v1426, 127
      %v1428 = vshll.u32 %v1427, 23
      %v1429 = vor.u32 4788187, %v1428
      %v1430 = vand.u32 2147483647, %v1429
      %v1432 = vcvt.s32.f32 %v1425
      %v1433 = vmul.f32 %v1432, %v1430
      %v1434 = vxor.u32 %v1433, 2147483648
      %v1435 = vsel %vm1314, %v1434, %v1433
      %v1436 = vsub.s32 4, %v1412
      %v1437 = vsel %vm1314, %v1436, %v1412
      %v1438 = vsel %vm1313, %v233, %v1435
      %v1439 = vsel %vm1313, 0, %v1437
      %v1440 = vmul.f32 %v1438, %v1438
      %v1441 = vmul.f32 %v1440, -0.001358992
      %v1442 = vadd.f32 %v1441, 0.041655596
      %v1443 = vmul.f32 %v1440, %v1442
      %v1444 = vadd.f32 %v1443, -0.4999988
      %v1445 = vmul.f32 %v1440, %v1444
      %v1446 = vadd.f32 1.0, %v1445
      %v1447 = vmul.f32 %v1438, %v1438
      %v1448 = vmul.f32 %v1447, -0.00019511016
      %v1449 = vadd.f32 %v1448, 0.008332121
      %v1450 = vmul.f32 %v1447, %v1449
      %v1451 = vadd.f32 %v1450, -0.16666654
      %v1452 = vmul.f32 %v1447, %v1451
      %v1453 = vadd.f32 %v1452, 1.0
      %v1454 = vmul.f32 %v1453, %v1438
      %vm1455 = vweird.f32 %v233
      %v1456 = vand.u32 %v1439, 3
      %vm1457 = vcmp.lt.s32.totalorder %v1456, 2
      %vm1458 = vcmp.eq.s32.totalorder %v1456, 0
      %v1459 = vxor.u32 %v1454, 2147483648
      %v1460 = vsel %vm1458, %v1446, %v1459
      %vm1461 = vcmp.eq.s32.totalorder %v1456, 2
      %v1462 = vxor.u32 %v1446, 2147483648
      %v1463 = vsel %vm1461, %v1462, %v1454
      %v1464 = vsel %vm1457, %v1460, %v1463
      %v1465 = vsel %vm1455, nan, %v1464
      %v1466 = vmul.f32 %v218, %v387
      %v1467 = vmul.f32 %v219, %v541
      %v1468 = vmul.f32 %v220, %v695
      %v1469 = vmul.f32 %v221, %v849
      %v1470 = vmul.f32 %v222, %v1003
      %v1471 = vmul.f32 %v223, %v1157
      %v1472 = vmul.f32 %v224, %v1311
      %v1473 = vmul.f32 %v225, %v1465
      %v1474 = vand.u32 2147483647, %v226
      %vm1475 = vcmp.le.f32.partialorder %v1474, 0.7853982
      %vm1476 = vcmp.lt.s32.totalorder %v226, 0
      %v1477 = vand.u32 %v226, 2139095040
      %v1478 = vshrl.u32 %v1477, 23
      %v1479 = vsub.s32 %v1478, 127
      %v1480 = vand.u32 2147483647, %v226
      %v1481 = vand.u32 %v1480, 8388607
      %v1482 = vor.u32 %v1481, 8388608
      %v1483 = vsub.s32 0, %v1482
      %v1484 = vadd.s32 %v1479, 1
      %vm1485 = vcmp.gt.s32.totalorder %v1484, 0
      %v1486 = vsel %vm1485, %v1484, 0
      %v1487 = vshrl.u32 %v1486, 5
      %v1488 = vand.u32 %v1486, 31
      %v1489 = vsub.s32 32, %v1488
      %v1490 = vshrl.u32 683565275, %v1489
      %v1491 = vshll.u32 683565275, %v1488
      %v1492 = vshrl.u32 2475754826, %v1489
      %v1493 = vor.u32 %v1491, %v1492
      %v1494 = vshll.u32 2475754826, %v1488
      %v1495 = vshrl.u32 2131351028, %v1489
      %v1496 = vor.u32 %v1494, %v1495
      %v1497 = vshll.u32 2131351028, %v1488
      %v1498 = vshrl.u32 2102212464, %v1489
      %v1499 = vor.u32 %v1497, %v1498
      %v1500 = vshll.u32 2102212464, %v1488
      %v1501 = vshrl.u32 920167782, %v1489
      %v1502 = vor.u32 %v1500, %v1501
      %v1503 = vshll.u32 920167782, %v1488
      %v1504 = vshrl.u32 1326507024, %v1489
      %v1505 = vor.u32 %v1503, %v1504
      %vm1506 = vcmp.lt.s32.totalorder %v1487, 1
      %vm1507 = vcmp.lt.s32.totalorder %v1487, 2
      %vm1508 = vcmp.lt.s32.totalorder %v1487, 3
      %vm1509 = vcmp.lt.s32.totalorder %v1487, 4
      %v1510 = vsel %vm1506, %v1490, %v1493
      %v1511 = vsel %vm1509, %v1499, 2102212464
      %v1512 = vsel %vm1508, %v1496, %v1511
      %v1513 = vsel %vm1507, %v1510, %v1512
      %v1514 = vsel %vm1506, %v1493, %v1496
      %v1515 = vsel %vm1509, %v1502, 920167782
      %v1516 = vsel %vm1508, %v1499, %v1515
      %v1517 = vsel %vm1507, %v1514, %v1516
      %v1518 = vsel %vm1506, %v1496, %v1499
      %v1519 = vsel %vm1509, %v1505, 1326507024
      %v1520 = vsel %vm1508, %v1502, %v1519
      %v1521 = vsel %vm1507, %v1518, %v1520
      %v1522 = vshll.u32 %v1482, 8
      %v1523 = vand.u32 %v1522, 65535
      %v1524 = vshrl.u32 %v1522, 16
      %v1525 = vand.u32 %v1521, 65535
      %v1526 = vshrl.u32 %v1521, 16
      %v1527 = vmul.u32 %v1523, %v1525
      %v1528 = vmul.u32 %v1523, %v1526
      %v1529 = vmul.u32 %v1524, %v1525
      %v1530 = vmul.u32 %v1524, %v1526
      %v1531 = vshll.u32 %v1528, 16
      %v1532 = vshrl.u32 %v1528, 16
      %v1533 = vshll.u32 %v1529, 16
      %v1534 = vshrl.u32 %v1529, 16
      %vm1535 = vc.u32 %v1527, %v1531
      %v1536 = vsel %vm1535, 1, 0
      %v1537 = vadd.s32 %v1527, %v1531
      %v1538 = vadd.s32 %v1530, %v1536
      %vm1539 = vc.u32 %v1537, %v1533
      %v1540 = vsel %vm1539, 1, 0
      %v1541 = vadd.s32 %v1537, %v1533
      %v1542 = vadd.s32 %v1538, %v1540
      %v1543 = vadd.s32 %v1542, %v1532
      %v1544 = vadd.s32 %v1543, %v1534
      %v1545 = vand.u32 %v1522, 65535
      %v1546 = vshrl.u32 %v1522, 16
      %v1547 = vand.u32 %v1517, 65535
      %v1548 = vshrl.u32 %v1517, 16
      %v1549 = vmul.u32 %v1545, %v1547
      %v1550 = vmul.u32 %v1545, %v1548
      %v1551 = vmul.u32 %v1546, %v1547
      %v1552 = vmul.u32 %v1546, %v1548
      %v1553 = vshll.u32 %v1550, 16
      %v1554 = vshrl.u32 %v1550, 16
      %v1555 = vshll.u32 %v1551, 16
      %v1556 = vshrl.u32 %v1551, 16
      %vm1557 = vc.u32 %v1549, %v1553
      %v1558 = vsel %vm1557, 1, 0
      %v1559 = vadd.s32 %v1549, %v1553
      %v1560 = vadd.s32 %v1552, %v1558
      %vm1561 = vc.u32 %v1559, %v1555
      %v1562 = vsel %vm1561, 1, 0
      %v1563 = vadd.s32 %v1559, %v1555
      %v1564 = vadd.s32 %v1560, %v1562
      %v1565 = vadd.s32 %v1564, %v1554
      %v1566 = vadd.s32 %v1565, %v1556
      %v1567 = vmul.u32 %v1522, %v1513
      %v1568 = vadd.s32 %v1544, %v1563
      %vm1569 = vc.u32 %v1544, %v1563
      %v1570 = vadd.s32 %v1566, 1
      %v1571 = vsel %vm1569, %v1570, %v1566
      %v1572 = vadd.s32 %v1567, %v1571
      %v1573 = vadd.s32 %v1572, 536870912
      %v1574 = vshrl.u32 %v1573, 30
      %v1575 = vshll.u32 %v1574, 30
      %v1576 = vsub.s32 %v1572, %v1575
      %vm1577 = vcmp.lt.s32.totalorder %v1576, 0
      %v1578 = vsub.s32 0, %v1576
      %v1579 = vsel %vm1577, %v1578, %v1576
      %v1580 = vclz %v1579
      %v1581 = vsub.s32 %v1580, 2
      %vm1582 = vcmp.gt.s32.totalorder 0, %v1581
      %v1583 = vsel %vm1582, 0, %v1581
      %v1584 = vsub.s32 32, %v1583
      %v1585 = vshll.u32 %v1576, %v1583
      %v1586 = vshrl.u32 %v1568, %v1584
      %v1587 = vor.u32 %v1585, %v1586
      %v1588 = vsub.s32 4294967266, %v1583
      %v1589 = vadd.s32 %v1588, 127
      %v1590 = vshll.u32 %v1589, 23
      %v1591 = vor.u32 4788187, %v1590
      %v1592 = vand.u32 2147483647, %v1591
      %v1594 = vcvt.s32.f32 %v1587
      %v1595 = vmul.f32 %v1594, %v1592
      %v1596 = vxor.u32 %v1595, 2147483648
      %v1597 = vsel %vm1476, %v1596, %v1595
      %v1598 = vsub.s32 4, %v1574
      %v1599 = vsel %vm1476, %v1598, %v1574
      %v1600 = vsel %vm1475, %v226, %v1597
      %v1601 = vsel %vm1475, 0, %v1599
      %v1602 = vmul.f32 %v1600, %v1600
      %v1603 = vmul.f32 %v1602, -0.001358992
      %v1604 = vadd.f32 %v1603, 0.041655596
      %v1605 = vmul.f32 %v1602, %v1604
      %v1606 = vadd.f32 %v1605, -0.4999988
      %v1607 = vmul.f32 %v1602, %v1606
      %v1608 = vadd.f32 1.0, %v1607
      %v1609 = vmul.f32 %v1600, %v1600
      %v1610 = vmul.f32 %v1609, -0.00019511016
      %v1611 = vadd.f32 %v1610, 0.008332121
      %v1612 = vmul.f32 %v1609, %v1611
      %v1613 = vadd.f32 %v1612, -0.16666654
      %v1614 = vmul.f32 %v1609, %v1613
      %v1615 = vadd.f32 %v1614, 1.0
      %v1616 = vmul.f32 %v1615, %v1600
      %vm1617 = vweird.f32 %v226
      %v1618 = vadd.s32 %v1601, 3
      %v1619 = vand.u32 %v1618, 3
      %vm1620 = vcmp.lt.s32.totalorder %v1619, 2
      %vm1621 = vcmp.eq.s32.totalorder %v1619, 0
      %v1622 = vxor.u32 %v1616, 2147483648
      %v1623 = vsel %vm1621, %v1608, %v1622
      %vm1624 = vcmp.eq.s32.totalorder %v1619, 2
      %v1625 = vxor.u32 %v1608, 2147483648
      %v1626 = vsel %vm1624, %v1625, %v1616
      %v1627 = vsel %vm1620, %v1623, %v1626
      %v1628 = vsel %vm1617, nan, %v1627
      %v1629 = vand.u32 2147483647, %v227
      %vm1630 = vcmp.le.f32.partialorder %v1629, 0.7853982
      %vm1631 = vcmp.lt.s32.totalorder %v227, 0
      %v1632 = vand.u32 %v227, 2139095040
      %v1633 = vshrl.u32 %v1632, 23
      %v1634 = vsub.s32 %v1633, 127
      %v1635 = vand.u32 2147483647, %v227
      %v1636 = vand.u32 %v1635, 8388607
      %v1637 = vor.u32 %v1636, 8388608
      %v1638 = vsub.s32 0, %v1637
      %v1639 = vadd.s32 %v1634, 1
      %vm1640 = vcmp.gt.s32.totalorder %v1639, 0
      %v1641 = vsel %vm1640, %v1639, 0
      %v1642 = vshrl.u32 %v1641, 5
      %v1643 = vand.u32 %v1641, 31
      %v1644 = vsub.s32 32, %v1643
      %v1645 = vshrl.u32 683565275, %v1644
      %v1646 = vshll.u32 683565275, %v1643
      %v1647 = vshrl.u32 2475754826, %v1644
      %v1648 = vor.u32 %v1646, %v1647
      %v1649 = vshll.u32 2475754826, %v1643
      %v1650 = vshrl.u32 2131351028, %v1644
      %v1651 = vor.u32 %v1649, %v1650
      %v1652 = vshll.u32 2131351028, %v1643
      %v1653 = vshrl.u32 2102212464, %v1644
      %v1654 = vor.u32 %v1652, %v1653
      %v1655 = vshll.u32 2102212464, %v1643
      %v1656 = vshrl.u32 920167782, %v1644
      %v1657 = vor.u32 %v1655, %v1656
      %v1658 = vshll.u32 920167782, %v1643
      %v1659 = vshrl.u32 1326507024, %v1644
      %v1660 = vor.u32 %v1658, %v1659
      %vm1661 = vcmp.lt.s32.totalorder %v1642, 1
      %vm1662 = vcmp.lt.s32.totalorder %v1642, 2
      %vm1663 = vcmp.lt.s32.totalorder %v1642, 3
      %vm1664 = vcmp.lt.s32.totalorder %v1642, 4
      %v1665 = vsel %vm1661, %v1645, %v1648
      %v1666 = vsel %vm1664, %v1654, 2102212464
      %v1667 = vsel %vm1663, %v1651, %v1666
      %v1668 = vsel %vm1662, %v1665, %v1667
      %v1669 = vsel %vm1661, %v1648, %v1651
      %v1670 = vsel %vm1664, %v1657, 920167782
      %v1671 = vsel %vm1663, %v1654, %v1670
      %v1672 = vsel %vm1662, %v1669, %v1671
      %v1673 = vsel %vm1661, %v1651, %v1654
      %v1674 = vsel %vm1664, %v1660, 1326507024
      %v1675 = vsel %vm1663, %v1657, %v1674
      %v1676 = vsel %vm1662, %v1673, %v1675
      %v1677 = vshll.u32 %v1637, 8
      %v1678 = vand.u32 %v1677, 65535
      %v1679 = vshrl.u32 %v1677, 16
      %v1680 = vand.u32 %v1676, 65535
      %v1681 = vshrl.u32 %v1676, 16
      %v1682 = vmul.u32 %v1678, %v1680
      %v1683 = vmul.u32 %v1678, %v1681
      %v1684 = vmul.u32 %v1679, %v1680
      %v1685 = vmul.u32 %v1679, %v1681
      %v1686 = vshll.u32 %v1683, 16
      %v1687 = vshrl.u32 %v1683, 16
      %v1688 = vshll.u32 %v1684, 16
      %v1689 = vshrl.u32 %v1684, 16
      %vm1690 = vc.u32 %v1682, %v1686
      %v1691 = vsel %vm1690, 1, 0
      %v1692 = vadd.s32 %v1682, %v1686
      %v1693 = vadd.s32 %v1685, %v1691
      %vm1694 = vc.u32 %v1692, %v1688
      %v1695 = vsel %vm1694, 1, 0
      %v1696 = vadd.s32 %v1692, %v1688
      %v1697 = vadd.s32 %v1693, %v1695
      %v1698 = vadd.s32 %v1697, %v1687
      %v1699 = vadd.s32 %v1698, %v1689
      %v1700 = vand.u32 %v1677, 65535
      %v1701 = vshrl.u32 %v1677, 16
      %v1702 = vand.u32 %v1672, 65535
      %v1703 = vshrl.u32 %v1672, 16
      %v1704 = vmul.u32 %v1700, %v1702
      %v1705 = vmul.u32 %v1700, %v1703
      %v1706 = vmul.u32 %v1701, %v1702
      %v1707 = vmul.u32 %v1701, %v1703
      %v1708 = vshll.u32 %v1705, 16
      %v1709 = vshrl.u32 %v1705, 16
      %v1710 = vshll.u32 %v1706, 16
      %v1711 = vshrl.u32 %v1706, 16
      %vm1712 = vc.u32 %v1704, %v1708
      %v1713 = vsel %vm1712, 1, 0
      %v1714 = vadd.s32 %v1704, %v1708
      %v1715 = vadd.s32 %v1707, %v1713
      %vm1716 = vc.u32 %v1714, %v1710
      %v1717 = vsel %vm1716, 1, 0
      %v1718 = vadd.s32 %v1714, %v1710
      %v1719 = vadd.s32 %v1715, %v1717
      %v1720 = vadd.s32 %v1719, %v1709
      %v1721 = vadd.s32 %v1720, %v1711
      %v1722 = vmul.u32 %v1677, %v1668
      %v1723 = vadd.s32 %v1699, %v1718
      %vm1724 = vc.u32 %v1699, %v1718
      %v1725 = vadd.s32 %v1721, 1
      %v1726 = vsel %vm1724, %v1725, %v1721
      %v1727 = vadd.s32 %v1722, %v1726
      %v1728 = vadd.s32 %v1727, 536870912
      %v1729 = vshrl.u32 %v1728, 30
      %v1730 = vshll.u32 %v1729, 30
      %v1731 = vsub.s32 %v1727, %v1730
      %vm1732 = vcmp.lt.s32.totalorder %v1731, 0
      %v1733 = vsub.s32 0, %v1731
      %v1734 = vsel %vm1732, %v1733, %v1731
      %v1735 = vclz %v1734
      %v1736 = vsub.s32 %v1735, 2
      %vm1737 = vcmp.gt.s32.totalorder 0, %v1736
      %v1738 = vsel %vm1737, 0, %v1736
      %v1739 = vsub.s32 32, %v1738
      %v1740 = vshll.u32 %v1731, %v1738
      %v1741 = vshrl.u32 %v1723, %v1739
      %v1742 = vor.u32 %v1740, %v1741
      %v1743 = vsub.s32 4294967266, %v1738
      %v1744 = vadd.s32 %v1743, 127
      %v1745 = vshll.u32 %v1744, 23
      %v1746 = vor.u32 4788187, %v1745
      %v1747 = vand.u32 2147483647, %v1746
      %v1749 = vcvt.s32.f32 %v1742
      %v1750 = vmul.f32 %v1749, %v1747
      %v1751 = vxor.u32 %v1750, 2147483648
      %v1752 = vsel %vm1631, %v1751, %v1750
      %v1753 = vsub.s32 4, %v1729
      %v1754 = vsel %vm1631, %v1753, %v1729
      %v1755 = vsel %vm1630, %v227, %v1752
      %v1756 = vsel %vm1630, 0, %v1754
      %v1757 = vmul.f32 %v1755, %v1755
      %v1758 = vmul.f32 %v1757, -0.001358992
      %v1759 = vadd.f32 %v1758, 0.041655596
      %v1760 = vmul.f32 %v1757, %v1759
      %v1761 = vadd.f32 %v1760, -0.4999988
      %v1762 = vmul.f32 %v1757, %v1761
      %v1763 = vadd.f32 1.0, %v1762
      %v1764 = vmul.f32 %v1755, %v1755
      %v1765 = vmul.f32 %v1764, -0.00019511016
      %v1766 = vadd.f32 %v1765, 0.008332121
      %v1767 = vmul.f32 %v1764, %v1766
      %v1768 = vadd.f32 %v1767, -0.16666654
      %v1769 = vmul.f32 %v1764, %v1768
      %v1770 = vadd.f32 %v1769, 1.0
      %v1771 = vmul.f32 %v1770, %v1755
      %vm1772 = vweird.f32 %v227
      %v1773 = vadd.s32 %v1756, 3
      %v1774 = vand.u32 %v1773, 3
      %vm1775 = vcmp.lt.s32.totalorder %v1774, 2
      %vm1776 = vcmp.eq.s32.totalorder %v1774, 0
      %v1777 = vxor.u32 %v1771, 2147483648
      %v1778 = vsel %vm1776, %v1763, %v1777
      %vm1779 = vcmp.eq.s32.totalorder %v1774, 2
      %v1780 = vxor.u32 %v1763, 2147483648
      %v1781 = vsel %vm1779, %v1780, %v1771
      %v1782 = vsel %vm1775, %v1778, %v1781
      %v1783 = vsel %vm1772, nan, %v1782
      %v1784 = vand.u32 2147483647, %v228
      %vm1785 = vcmp.le.f32.partialorder %v1784, 0.7853982
      %vm1786 = vcmp.lt.s32.totalorder %v228, 0
      %v1787 = vand.u32 %v228, 2139095040
      %v1788 = vshrl.u32 %v1787, 23
      %v1789 = vsub.s32 %v1788, 127
      %v1790 = vand.u32 2147483647, %v228
      %v1791 = vand.u32 %v1790, 8388607
      %v1792 = vor.u32 %v1791, 8388608
      %v1793 = vsub.s32 0, %v1792
      %v1794 = vadd.s32 %v1789, 1
      %vm1795 = vcmp.gt.s32.totalorder %v1794, 0
      %v1796 = vsel %vm1795, %v1794, 0
      %v1797 = vshrl.u32 %v1796, 5
      %v1798 = vand.u32 %v1796, 31
      %v1799 = vsub.s32 32, %v1798
      %v1800 = vshrl.u32 683565275, %v1799
      %v1801 = vshll.u32 683565275, %v1798
      %v1802 = vshrl.u32 2475754826, %v1799
      %v1803 = vor.u32 %v1801, %v1802
      %v1804 = vshll.u32 2475754826, %v1798
      %v1805 = vshrl.u32 2131351028, %v1799
      %v1806 = vor.u32 %v1804, %v1805
      %v1807 = vshll.u32 2131351028, %v1798
      %v1808 = vshrl.u32 2102212464, %v1799
      %v1809 = vor.u32 %v1807, %v1808
      %v1810 = vshll.u32 2102212464, %v1798
      %v1811 = vshrl.u32 920167782, %v1799
      %v1812 = vor.u32 %v1810, %v1811
      %v1813 = vshll.u32 920167782, %v1798
      %v1814 = vshrl.u32 1326507024, %v1799
      %v1815 = vor.u32 %v1813, %v1814
      %vm1816 = vcmp.lt.s32.totalorder %v1797, 1
      %vm1817 = vcmp.lt.s32.totalorder %v1797, 2
      %vm1818 = vcmp.lt.s32.totalorder %v1797, 3
      %vm1819 = vcmp.lt.s32.totalorder %v1797, 4
      %v1820 = vsel %vm1816, %v1800, %v1803
      %v1821 = vsel %vm1819, %v1809, 2102212464
      %v1822 = vsel %vm1818, %v1806, %v1821
      %v1823 = vsel %vm1817, %v1820, %v1822
      %v1824 = vsel %vm1816, %v1803, %v1806
      %v1825 = vsel %vm1819, %v1812, 920167782
      %v1826 = vsel %vm1818, %v1809, %v1825
      %v1827 = vsel %vm1817, %v1824, %v1826
      %v1828 = vsel %vm1816, %v1806, %v1809
      %v1829 = vsel %vm1819, %v1815, 1326507024
      %v1830 = vsel %vm1818, %v1812, %v1829
      %v1831 = vsel %vm1817, %v1828, %v1830
      %v1832 = vshll.u32 %v1792, 8
      %v1833 = vand.u32 %v1832, 65535
      %v1834 = vshrl.u32 %v1832, 16
      %v1835 = vand.u32 %v1831, 65535
      %v1836 = vshrl.u32 %v1831, 16
      %v1837 = vmul.u32 %v1833, %v1835
      %v1838 = vmul.u32 %v1833, %v1836
      %v1839 = vmul.u32 %v1834, %v1835
      %v1840 = vmul.u32 %v1834, %v1836
      %v1841 = vshll.u32 %v1838, 16
      %v1842 = vshrl.u32 %v1838, 16
      %v1843 = vshll.u32 %v1839, 16
      %v1844 = vshrl.u32 %v1839, 16
      %vm1845 = vc.u32 %v1837, %v1841
      %v1846 = vsel %vm1845, 1, 0
      %v1847 = vadd.s32 %v1837, %v1841
      %v1848 = vadd.s32 %v1840, %v1846
      %vm1849 = vc.u32 %v1847, %v1843
      %v1850 = vsel %vm1849, 1, 0
      %v1851 = vadd.s32 %v1847, %v1843
      %v1852 = vadd.s32 %v1848, %v1850
      %v1853 = vadd.s32 %v1852, %v1842
      %v1854 = vadd.s32 %v1853, %v1844
      %v1855 = vand.u32 %v1832, 65535
      %v1856 = vshrl.u32 %v1832, 16
      %v1857 = vand.u32 %v1827, 65535
      %v1858 = vshrl.u32 %v1827, 16
      %v1859 = vmul.u32 %v1855, %v1857
      %v1860 = vmul.u32 %v1855, %v1858
      %v1861 = vmul.u32 %v1856, %v1857
      %v1862 = vmul.u32 %v1856, %v1858
      %v1863 = vshll.u32 %v1860, 16
      %v1864 = vshrl.u32 %v1860, 16
      %v1865 = vshll.u32 %v1861, 16
      %v1866 = vshrl.u32 %v1861, 16
      %vm1867 = vc.u32 %v1859, %v1863
      %v1868 = vsel %vm1867, 1, 0
      %v1869 = vadd.s32 %v1859, %v1863
      %v1870 = vadd.s32 %v1862, %v1868
      %vm1871 = vc.u32 %v1869, %v1865
      %v1872 = vsel %vm1871, 1, 0
      %v1873 = vadd.s32 %v1869, %v1865
      %v1874 = vadd.s32 %v1870, %v1872
      %v1875 = vadd.s32 %v1874, %v1864
      %v1876 = vadd.s32 %v1875, %v1866
      %v1877 = vmul.u32 %v1832, %v1823
      %v1878 = vadd.s32 %v1854, %v1873
      %vm1879 = vc.u32 %v1854, %v1873
      %v1880 = vadd.s32 %v1876, 1
      %v1881 = vsel %vm1879, %v1880, %v1876
      %v1882 = vadd.s32 %v1877, %v1881
      %v1883 = vadd.s32 %v1882, 536870912
      %v1884 = vshrl.u32 %v1883, 30
      %v1885 = vshll.u32 %v1884, 30
      %v1886 = vsub.s32 %v1882, %v1885
      %vm1887 = vcmp.lt.s32.totalorder %v1886, 0
      %v1888 = vsub.s32 0, %v1886
      %v1889 = vsel %vm1887, %v1888, %v1886
      %v1890 = vclz %v1889
      %v1891 = vsub.s32 %v1890, 2
      %vm1892 = vcmp.gt.s32.totalorder 0, %v1891
      %v1893 = vsel %vm1892, 0, %v1891
      %v1894 = vsub.s32 32, %v1893
      %v1895 = vshll.u32 %v1886, %v1893
      %v1896 = vshrl.u32 %v1878, %v1894
      %v1897 = vor.u32 %v1895, %v1896
      %v1898 = vsub.s32 4294967266, %v1893
      %v1899 = vadd.s32 %v1898, 127
      %v1900 = vshll.u32 %v1899, 23
      %v1901 = vor.u32 4788187, %v1900
      %v1902 = vand.u32 2147483647, %v1901
      %v1904 = vcvt.s32.f32 %v1897
      %v1905 = vmul.f32 %v1904, %v1902
      %v1906 = vxor.u32 %v1905, 2147483648
      %v1907 = vsel %vm1786, %v1906, %v1905
      %v1908 = vsub.s32 4, %v1884
      %v1909 = vsel %vm1786, %v1908, %v1884
      %v1910 = vsel %vm1785, %v228, %v1907
      %v1911 = vsel %vm1785, 0, %v1909
      %v1912 = vmul.f32 %v1910, %v1910
      %v1913 = vmul.f32 %v1912, -0.001358992
      %v1914 = vadd.f32 %v1913, 0.041655596
      %v1915 = vmul.f32 %v1912, %v1914
      %v1916 = vadd.f32 %v1915, -0.4999988
      %v1917 = vmul.f32 %v1912, %v1916
      %v1918 = vadd.f32 1.0, %v1917
      %v1919 = vmul.f32 %v1910, %v1910
      %v1920 = vmul.f32 %v1919, -0.00019511016
      %v1921 = vadd.f32 %v1920, 0.008332121
      %v1922 = vmul.f32 %v1919, %v1921
      %v1923 = vadd.f32 %v1922, -0.16666654
      %v1924 = vmul.f32 %v1919, %v1923
      %v1925 = vadd.f32 %v1924, 1.0
      %v1926 = vmul.f32 %v1925, %v1910
      %vm1927 = vweird.f32 %v228
      %v1928 = vadd.s32 %v1911, 3
      %v1929 = vand.u32 %v1928, 3
      %vm1930 = vcmp.lt.s32.totalorder %v1929, 2
      %vm1931 = vcmp.eq.s32.totalorder %v1929, 0
      %v1932 = vxor.u32 %v1926, 2147483648
      %v1933 = vsel %vm1931, %v1918, %v1932
      %vm1934 = vcmp.eq.s32.totalorder %v1929, 2
      %v1935 = vxor.u32 %v1918, 2147483648
      %v1936 = vsel %vm1934, %v1935, %v1926
      %v1937 = vsel %vm1930, %v1933, %v1936
      %v1938 = vsel %vm1927, nan, %v1937
      %v1939 = vand.u32 2147483647, %v229
      %vm1940 = vcmp.le.f32.partialorder %v1939, 0.7853982
      %vm1941 = vcmp.lt.s32.totalorder %v229, 0
      %v1942 = vand.u32 %v229, 2139095040
      %v1943 = vshrl.u32 %v1942, 23
      %v1944 = vsub.s32 %v1943, 127
      %v1945 = vand.u32 2147483647, %v229
      %v1946 = vand.u32 %v1945, 8388607
      %v1947 = vor.u32 %v1946, 8388608
      %v1948 = vsub.s32 0, %v1947
      %v1949 = vadd.s32 %v1944, 1
      %vm1950 = vcmp.gt.s32.totalorder %v1949, 0
      %v1951 = vsel %vm1950, %v1949, 0
      %v1952 = vshrl.u32 %v1951, 5
      %v1953 = vand.u32 %v1951, 31
      %v1954 = vsub.s32 32, %v1953
      %v1955 = vshrl.u32 683565275, %v1954
      %v1956 = vshll.u32 683565275, %v1953
      %v1957 = vshrl.u32 2475754826, %v1954
      %v1958 = vor.u32 %v1956, %v1957
      %v1959 = vshll.u32 2475754826, %v1953
      %v1960 = vshrl.u32 2131351028, %v1954
      %v1961 = vor.u32 %v1959, %v1960
      %v1962 = vshll.u32 2131351028, %v1953
      %v1963 = vshrl.u32 2102212464, %v1954
      %v1964 = vor.u32 %v1962, %v1963
      %v1965 = vshll.u32 2102212464, %v1953
      %v1966 = vshrl.u32 920167782, %v1954
      %v1967 = vor.u32 %v1965, %v1966
      %v1968 = vshll.u32 920167782, %v1953
      %v1969 = vshrl.u32 1326507024, %v1954
      %v1970 = vor.u32 %v1968, %v1969
      %vm1971 = vcmp.lt.s32.totalorder %v1952, 1
      %vm1972 = vcmp.lt.s32.totalorder %v1952, 2
      %vm1973 = vcmp.lt.s32.totalorder %v1952, 3
      %vm1974 = vcmp.lt.s32.totalorder %v1952, 4
      %v1975 = vsel %vm1971, %v1955, %v1958
      %v1976 = vsel %vm1974, %v1964, 2102212464
      %v1977 = vsel %vm1973, %v1961, %v1976
      %v1978 = vsel %vm1972, %v1975, %v1977
      %v1979 = vsel %vm1971, %v1958, %v1961
      %v1980 = vsel %vm1974, %v1967, 920167782
      %v1981 = vsel %vm1973, %v1964, %v1980
      %v1982 = vsel %vm1972, %v1979, %v1981
      %v1983 = vsel %vm1971, %v1961, %v1964
      %v1984 = vsel %vm1974, %v1970, 1326507024
      %v1985 = vsel %vm1973, %v1967, %v1984
      %v1986 = vsel %vm1972, %v1983, %v1985
      %v1987 = vshll.u32 %v1947, 8
      %v1988 = vand.u32 %v1987, 65535
      %v1989 = vshrl.u32 %v1987, 16
      %v1990 = vand.u32 %v1986, 65535
      %v1991 = vshrl.u32 %v1986, 16
      %v1992 = vmul.u32 %v1988, %v1990
      %v1993 = vmul.u32 %v1988, %v1991
      %v1994 = vmul.u32 %v1989, %v1990
      %v1995 = vmul.u32 %v1989, %v1991
      %v1996 = vshll.u32 %v1993, 16
      %v1997 = vshrl.u32 %v1993, 16
      %v1998 = vshll.u32 %v1994, 16
      %v1999 = vshrl.u32 %v1994, 16
      %vm2000 = vc.u32 %v1992, %v1996
      %v2001 = vsel %vm2000, 1, 0
      %v2002 = vadd.s32 %v1992, %v1996
      %v2003 = vadd.s32 %v1995, %v2001
      %vm2004 = vc.u32 %v2002, %v1998
      %v2005 = vsel %vm2004, 1, 0
      %v2006 = vadd.s32 %v2002, %v1998
      %v2007 = vadd.s32 %v2003, %v2005
      %v2008 = vadd.s32 %v2007, %v1997
      %v2009 = vadd.s32 %v2008, %v1999
      %v2010 = vand.u32 %v1987, 65535
      %v2011 = vshrl.u32 %v1987, 16
      %v2012 = vand.u32 %v1982, 65535
      %v2013 = vshrl.u32 %v1982, 16
      %v2014 = vmul.u32 %v2010, %v2012
      %v2015 = vmul.u32 %v2010, %v2013
      %v2016 = vmul.u32 %v2011, %v2012
      %v2017 = vmul.u32 %v2011, %v2013
      %v2018 = vshll.u32 %v2015, 16
      %v2019 = vshrl.u32 %v2015, 16
      %v2020 = vshll.u32 %v2016, 16
      %v2021 = vshrl.u32 %v2016, 16
      %vm2022 = vc.u32 %v2014, %v2018
      %v2023 = vsel %vm2022, 1, 0
      %v2024 = vadd.s32 %v2014, %v2018
      %v2025 = vadd.s32 %v2017, %v2023
      %vm2026 = vc.u32 %v2024, %v2020
      %v2027 = vsel %vm2026, 1, 0
      %v2028 = vadd.s32 %v2024, %v2020
      %v2029 = vadd.s32 %v2025, %v2027
      %v2030 = vadd.s32 %v2029, %v2019
      %v2031 = vadd.s32 %v2030, %v2021
      %v2032 = vmul.u32 %v1987, %v1978
      %v2033 = vadd.s32 %v2009, %v2028
      %vm2034 = vc.u32 %v2009, %v2028
      %v2035 = vadd.s32 %v2031, 1
      %v2036 = vsel %vm2034, %v2035, %v2031
      %v2037 = vadd.s32 %v2032, %v2036
      %v2038 = vadd.s32 %v2037, 536870912
      %v2039 = vshrl.u32 %v2038, 30
      %v2040 = vshll.u32 %v2039, 30
      %v2041 = vsub.s32 %v2037, %v2040
      %vm2042 = vcmp.lt.s32.totalorder %v2041, 0
      %v2043 = vsub.s32 0, %v2041
      %v2044 = vsel %vm2042, %v2043, %v2041
      %v2045 = vclz %v2044
      %v2046 = vsub.s32 %v2045, 2
      %vm2047 = vcmp.gt.s32.totalorder 0, %v2046
      %v2048 = vsel %vm2047, 0, %v2046
      %v2049 = vsub.s32 32, %v2048
      %v2050 = vshll.u32 %v2041, %v2048
      %v2051 = vshrl.u32 %v2033, %v2049
      %v2052 = vor.u32 %v2050, %v2051
      %v2053 = vsub.s32 4294967266, %v2048
      %v2054 = vadd.s32 %v2053, 127
      %v2055 = vshll.u32 %v2054, 23
      %v2056 = vor.u32 4788187, %v2055
      %v2057 = vand.u32 2147483647, %v2056
      %v2059 = vcvt.s32.f32 %v2052
      %v2060 = vmul.f32 %v2059, %v2057
      %v2061 = vxor.u32 %v2060, 2147483648
      %v2062 = vsel %vm1941, %v2061, %v2060
      %v2063 = vsub.s32 4, %v2039
      %v2064 = vsel %vm1941, %v2063, %v2039
      %v2065 = vsel %vm1940, %v229, %v2062
      %v2066 = vsel %vm1940, 0, %v2064
      %v2067 = vmul.f32 %v2065, %v2065
      %v2068 = vmul.f32 %v2067, -0.001358992
      %v2069 = vadd.f32 %v2068, 0.041655596
      %v2070 = vmul.f32 %v2067, %v2069
      %v2071 = vadd.f32 %v2070, -0.4999988
      %v2072 = vmul.f32 %v2067, %v2071
      %v2073 = vadd.f32 1.0, %v2072
      %v2074 = vmul.f32 %v2065, %v2065
      %v2075 = vmul.f32 %v2074, -0.00019511016
      %v2076 = vadd.f32 %v2075, 0.008332121
      %v2077 = vmul.f32 %v2074, %v2076
      %v2078 = vadd.f32 %v2077, -0.16666654
      %v2079 = vmul.f32 %v2074, %v2078
      %v2080 = vadd.f32 %v2079, 1.0
      %v2081 = vmul.f32 %v2080, %v2065
      %vm2082 = vweird.f32 %v229
      %v2083 = vadd.s32 %v2066, 3
      %v2084 = vand.u32 %v2083, 3
      %vm2085 = vcmp.lt.s32.totalorder %v2084, 2
      %vm2086 = vcmp.eq.s32.totalorder %v2084, 0
      %v2087 = vxor.u32 %v2081, 2147483648
      %v2088 = vsel %vm2086, %v2073, %v2087
      %vm2089 = vcmp.eq.s32.totalorder %v2084, 2
      %v2090 = vxor.u32 %v2073, 2147483648
      %v2091 = vsel %vm2089, %v2090, %v2081
      %v2092 = vsel %vm2085, %v2088, %v2091
      %v2093 = vsel %vm2082, nan, %v2092
      %v2094 = vand.u32 2147483647, %v230
      %vm2095 = vcmp.le.f32.partialorder %v2094, 0.7853982
      %vm2096 = vcmp.lt.s32.totalorder %v230, 0
      %v2097 = vand.u32 %v230, 2139095040
      %v2098 = vshrl.u32 %v2097, 23
      %v2099 = vsub.s32 %v2098, 127
      %v2100 = vand.u32 2147483647, %v230
      %v2101 = vand.u32 %v2100, 8388607
      %v2102 = vor.u32 %v2101, 8388608
      %v2103 = vsub.s32 0, %v2102
      %v2104 = vadd.s32 %v2099, 1
      %vm2105 = vcmp.gt.s32.totalorder %v2104, 0
      %v2106 = vsel %vm2105, %v2104, 0
      %v2107 = vshrl.u32 %v2106, 5
      %v2108 = vand.u32 %v2106, 31
      %v2109 = vsub.s32 32, %v2108
      %v2110 = vshrl.u32 683565275, %v2109
      %v2111 = vshll.u32 683565275, %v2108
      %v2112 = vshrl.u32 2475754826, %v2109
      %v2113 = vor.u32 %v2111, %v2112
      %v2114 = vshll.u32 2475754826, %v2108
      %v2115 = vshrl.u32 2131351028, %v2109
      %v2116 = vor.u32 %v2114, %v2115
      %v2117 = vshll.u32 2131351028, %v2108
      %v2118 = vshrl.u32 2102212464, %v2109
      %v2119 = vor.u32 %v2117, %v2118
      %v2120 = vshll.u32 2102212464, %v2108
      %v2121 = vshrl.u32 920167782, %v2109
      %v2122 = vor.u32 %v2120, %v2121
      %v2123 = vshll.u32 920167782, %v2108
      %v2124 = vshrl.u32 1326507024, %v2109
      %v2125 = vor.u32 %v2123, %v2124
      %vm2126 = vcmp.lt.s32.totalorder %v2107, 1
      %vm2127 = vcmp.lt.s32.totalorder %v2107, 2
      %vm2128 = vcmp.lt.s32.totalorder %v2107, 3
      %vm2129 = vcmp.lt.s32.totalorder %v2107, 4
      %v2130 = vsel %vm2126, %v2110, %v2113
      %v2131 = vsel %vm2129, %v2119, 2102212464
      %v2132 = vsel %vm2128, %v2116, %v2131
      %v2133 = vsel %vm2127, %v2130, %v2132
      %v2134 = vsel %vm2126, %v2113, %v2116
      %v2135 = vsel %vm2129, %v2122, 920167782
      %v2136 = vsel %vm2128, %v2119, %v2135
      %v2137 = vsel %vm2127, %v2134, %v2136
      %v2138 = vsel %vm2126, %v2116, %v2119
      %v2139 = vsel %vm2129, %v2125, 1326507024
      %v2140 = vsel %vm2128, %v2122, %v2139
      %v2141 = vsel %vm2127, %v2138, %v2140
      %v2142 = vshll.u32 %v2102, 8
      %v2143 = vand.u32 %v2142, 65535
      %v2144 = vshrl.u32 %v2142, 16
      %v2145 = vand.u32 %v2141, 65535
      %v2146 = vshrl.u32 %v2141, 16
      %v2147 = vmul.u32 %v2143, %v2145
      %v2148 = vmul.u32 %v2143, %v2146
      %v2149 = vmul.u32 %v2144, %v2145
      %v2150 = vmul.u32 %v2144, %v2146
      %v2151 = vshll.u32 %v2148, 16
      %v2152 = vshrl.u32 %v2148, 16
      %v2153 = vshll.u32 %v2149, 16
      %v2154 = vshrl.u32 %v2149, 16
      %vm2155 = vc.u32 %v2147, %v2151
      %v2156 = vsel %vm2155, 1, 0
      %v2157 = vadd.s32 %v2147, %v2151
      %v2158 = vadd.s32 %v2150, %v2156
      %vm2159 = vc.u32 %v2157, %v2153
      %v2160 = vsel %vm2159, 1, 0
      %v2161 = vadd.s32 %v2157, %v2153
      %v2162 = vadd.s32 %v2158, %v2160
      %v2163 = vadd.s32 %v2162, %v2152
      %v2164 = vadd.s32 %v2163, %v2154
      %v2165 = vand.u32 %v2142, 65535
      %v2166 = vshrl.u32 %v2142, 16
      %v2167 = vand.u32 %v2137, 65535
      %v2168 = vshrl.u32 %v2137, 16
      %v2169 = vmul.u32 %v2165, %v2167
      %v2170 = vmul.u32 %v2165, %v2168
      %v2171 = vmul.u32 %v2166, %v2167
      %v2172 = vmul.u32 %v2166, %v2168
      %v2173 = vshll.u32 %v2170, 16
      %v2174 = vshrl.u32 %v2170, 16
      %v2175 = vshll.u32 %v2171, 16
      %v2176 = vshrl.u32 %v2171, 16
      %vm2177 = vc.u32 %v2169, %v2173
      %v2178 = vsel %vm2177, 1, 0
      %v2179 = vadd.s32 %v2169, %v2173
      %v2180 = vadd.s32 %v2172, %v2178
      %vm2181 = vc.u32 %v2179, %v2175
      %v2182 = vsel %vm2181, 1, 0
      %v2183 = vadd.s32 %v2179, %v2175
      %v2184 = vadd.s32 %v2180, %v2182
      %v2185 = vadd.s32 %v2184, %v2174
      %v2186 = vadd.s32 %v2185, %v2176
      %v2187 = vmul.u32 %v2142, %v2133
      %v2188 = vadd.s32 %v2164, %v2183
      %vm2189 = vc.u32 %v2164, %v2183
      %v2190 = vadd.s32 %v2186, 1
      %v2191 = vsel %vm2189, %v2190, %v2186
      %v2192 = vadd.s32 %v2187, %v2191
      %v2193 = vadd.s32 %v2192, 536870912
      %v2194 = vshrl.u32 %v2193, 30
      %v2195 = vshll.u32 %v2194, 30
      %v2196 = vsub.s32 %v2192, %v2195
      %vm2197 = vcmp.lt.s32.totalorder %v2196, 0
      %v2198 = vsub.s32 0, %v2196
      %v2199 = vsel %vm2197, %v2198, %v2196
      %v2200 = vclz %v2199
      %v2201 = vsub.s32 %v2200, 2
      %vm2202 = vcmp.gt.s32.totalorder 0, %v2201
      %v2203 = vsel %vm2202, 0, %v2201
      %v2204 = vsub.s32 32, %v2203
      %v2205 = vshll.u32 %v2196, %v2203
      %v2206 = vshrl.u32 %v2188, %v2204
      %v2207 = vor.u32 %v2205, %v2206
      %v2208 = vsub.s32 4294967266, %v2203
      %v2209 = vadd.s32 %v2208, 127
      %v2210 = vshll.u32 %v2209, 23
      %v2211 = vor.u32 4788187, %v2210
      %v2212 = vand.u32 2147483647, %v2211
      %v2214 = vcvt.s32.f32 %v2207
      %v2215 = vmul.f32 %v2214, %v2212
      %v2216 = vxor.u32 %v2215, 2147483648
      %v2217 = vsel %vm2096, %v2216, %v2215
      %v2218 = vsub.s32 4, %v2194
      %v2219 = vsel %vm2096, %v2218, %v2194
      %v2220 = vsel %vm2095, %v230, %v2217
      %v2221 = vsel %vm2095, 0, %v2219
      %v2222 = vmul.f32 %v2220, %v2220
      %v2223 = vmul.f32 %v2222, -0.001358992
      %v2224 = vadd.f32 %v2223, 0.041655596
      %v2225 = vmul.f32 %v2222, %v2224
      %v2226 = vadd.f32 %v2225, -0.4999988
      %v2227 = vmul.f32 %v2222, %v2226
      %v2228 = vadd.f32 1.0, %v2227
      %v2229 = vmul.f32 %v2220, %v2220
      %v2230 = vmul.f32 %v2229, -0.00019511016
      %v2231 = vadd.f32 %v2230, 0.008332121
      %v2232 = vmul.f32 %v2229, %v2231
      %v2233 = vadd.f32 %v2232, -0.16666654
      %v2234 = vmul.f32 %v2229, %v2233
      %v2235 = vadd.f32 %v2234, 1.0
      %v2236 = vmul.f32 %v2235, %v2220
      %vm2237 = vweird.f32 %v230
      %v2238 = vadd.s32 %v2221, 3
      %v2239 = vand.u32 %v2238, 3
      %vm2240 = vcmp.lt.s32.totalorder %v2239, 2
      %vm2241 = vcmp.eq.s32.totalorder %v2239, 0
      %v2242 = vxor.u32 %v2236, 2147483648
      %v2243 = vsel %vm2241, %v2228, %v2242
      %vm2244 = vcmp.eq.s32.totalorder %v2239, 2
      %v2245 = vxor.u32 %v2228, 2147483648
      %v2246 = vsel %vm2244, %v2245, %v2236
      %v2247 = vsel %vm2240, %v2243, %v2246
      %v2248 = vsel %vm2237, nan, %v2247
      %v2249 = vand.u32 2147483647, %v231
      %vm2250 = vcmp.le.f32.partialorder %v2249, 0.7853982
      %vm2251 = vcmp.lt.s32.totalorder %v231, 0
      %v2252 = vand.u32 %v231, 2139095040
      %v2253 = vshrl.u32 %v2252, 23
      %v2254 = vsub.s32 %v2253, 127
      %v2255 = vand.u32 2147483647, %v231
      %v2256 = vand.u32 %v2255, 8388607
      %v2257 = vor.u32 %v2256, 8388608
      %v2258 = vsub.s32 0, %v2257
      %v2259 = vadd.s32 %v2254, 1
      %vm2260 = vcmp.gt.s32.totalorder %v2259, 0
      %v2261 = vsel %vm2260, %v2259, 0
      %v2262 = vshrl.u32 %v2261, 5
      %v2263 = vand.u32 %v2261, 31
      %v2264 = vsub.s32 32, %v2263
      %v2265 = vshrl.u32 683565275, %v2264
      %v2266 = vshll.u32 683565275, %v2263
      %v2267 = vshrl.u32 2475754826, %v2264
      %v2268 = vor.u32 %v2266, %v2267
      %v2269 = vshll.u32 2475754826, %v2263
      %v2270 = vshrl.u32 2131351028, %v2264
      %v2271 = vor.u32 %v2269, %v2270
      %v2272 = vshll.u32 2131351028, %v2263
      %v2273 = vshrl.u32 2102212464, %v2264
      %v2274 = vor.u32 %v2272, %v2273
      %v2275 = vshll.u32 2102212464, %v2263
      %v2276 = vshrl.u32 920167782, %v2264
      %v2277 = vor.u32 %v2275, %v2276
      %v2278 = vshll.u32 920167782, %v2263
      %v2279 = vshrl.u32 1326507024, %v2264
      %v2280 = vor.u32 %v2278, %v2279
      %vm2281 = vcmp.lt.s32.totalorder %v2262, 1
      %vm2282 = vcmp.lt.s32.totalorder %v2262, 2
      %vm2283 = vcmp.lt.s32.totalorder %v2262, 3
      %vm2284 = vcmp.lt.s32.totalorder %v2262, 4
      %v2285 = vsel %vm2281, %v2265, %v2268
      %v2286 = vsel %vm2284, %v2274, 2102212464
      %v2287 = vsel %vm2283, %v2271, %v2286
      %v2288 = vsel %vm2282, %v2285, %v2287
      %v2289 = vsel %vm2281, %v2268, %v2271
      %v2290 = vsel %vm2284, %v2277, 920167782
      %v2291 = vsel %vm2283, %v2274, %v2290
      %v2292 = vsel %vm2282, %v2289, %v2291
      %v2293 = vsel %vm2281, %v2271, %v2274
      %v2294 = vsel %vm2284, %v2280, 1326507024
      %v2295 = vsel %vm2283, %v2277, %v2294
      %v2296 = vsel %vm2282, %v2293, %v2295
      %v2297 = vshll.u32 %v2257, 8
      %v2298 = vand.u32 %v2297, 65535
      %v2299 = vshrl.u32 %v2297, 16
      %v2300 = vand.u32 %v2296, 65535
      %v2301 = vshrl.u32 %v2296, 16
      %v2302 = vmul.u32 %v2298, %v2300
      %v2303 = vmul.u32 %v2298, %v2301
      %v2304 = vmul.u32 %v2299, %v2300
      %v2305 = vmul.u32 %v2299, %v2301
      %v2306 = vshll.u32 %v2303, 16
      %v2307 = vshrl.u32 %v2303, 16
      %v2308 = vshll.u32 %v2304, 16
      %v2309 = vshrl.u32 %v2304, 16
      %vm2310 = vc.u32 %v2302, %v2306
      %v2311 = vsel %vm2310, 1, 0
      %v2312 = vadd.s32 %v2302, %v2306
      %v2313 = vadd.s32 %v2305, %v2311
      %vm2314 = vc.u32 %v2312, %v2308
      %v2315 = vsel %vm2314, 1, 0
      %v2316 = vadd.s32 %v2312, %v2308
      %v2317 = vadd.s32 %v2313, %v2315
      %v2318 = vadd.s32 %v2317, %v2307
      %v2319 = vadd.s32 %v2318, %v2309
      %v2320 = vand.u32 %v2297, 65535
      %v2321 = vshrl.u32 %v2297, 16
      %v2322 = vand.u32 %v2292, 65535
      %v2323 = vshrl.u32 %v2292, 16
      %v2324 = vmul.u32 %v2320, %v2322
      %v2325 = vmul.u32 %v2320, %v2323
      %v2326 = vmul.u32 %v2321, %v2322
      %v2327 = vmul.u32 %v2321, %v2323
      %v2328 = vshll.u32 %v2325, 16
      %v2329 = vshrl.u32 %v2325, 16
      %v2330 = vshll.u32 %v2326, 16
      %v2331 = vshrl.u32 %v2326, 16
      %vm2332 = vc.u32 %v2324, %v2328
      %v2333 = vsel %vm2332, 1, 0
      %v2334 = vadd.s32 %v2324, %v2328
      %v2335 = vadd.s32 %v2327, %v2333
      %vm2336 = vc.u32 %v2334, %v2330
      %v2337 = vsel %vm2336, 1, 0
      %v2338 = vadd.s32 %v2334, %v2330
      %v2339 = vadd.s32 %v2335, %v2337
      %v2340 = vadd.s32 %v2339, %v2329
      %v2341 = vadd.s32 %v2340, %v2331
      %v2342 = vmul.u32 %v2297, %v2288
      %v2343 = vadd.s32 %v2319, %v2338
      %vm2344 = vc.u32 %v2319, %v2338
      %v2345 = vadd.s32 %v2341, 1
      %v2346 = vsel %vm2344, %v2345, %v2341
      %v2347 = vadd.s32 %v2342, %v2346
      %v2348 = vadd.s32 %v2347, 536870912
      %v2349 = vshrl.u32 %v2348, 30
      %v2350 = vshll.u32 %v2349, 30
      %v2351 = vsub.s32 %v2347, %v2350
      %vm2352 = vcmp.lt.s32.totalorder %v2351, 0
      %v2353 = vsub.s32 0, %v2351
      %v2354 = vsel %vm2352, %v2353, %v2351
      %v2355 = vclz %v2354
      %v2356 = vsub.s32 %v2355, 2
      %vm2357 = vcmp.gt.s32.totalorder 0, %v2356
      %v2358 = vsel %vm2357, 0, %v2356
      %v2359 = vsub.s32 32, %v2358
      %v2360 = vshll.u32 %v2351, %v2358
      %v2361 = vshrl.u32 %v2343, %v2359
      %v2362 = vor.u32 %v2360, %v2361
      %v2363 = vsub.s32 4294967266, %v2358
      %v2364 = vadd.s32 %v2363, 127
      %v2365 = vshll.u32 %v2364, 23
      %v2366 = vor.u32 4788187, %v2365
      %v2367 = vand.u32 2147483647, %v2366
      %v2369 = vcvt.s32.f32 %v2362
      %v2370 = vmul.f32 %v2369, %v2367
      %v2371 = vxor.u32 %v2370, 2147483648
      %v2372 = vsel %vm2251, %v2371, %v2370
      %v2373 = vsub.s32 4, %v2349
      %v2374 = vsel %vm2251, %v2373, %v2349
      %v2375 = vsel %vm2250, %v231, %v2372
      %v2376 = vsel %vm2250, 0, %v2374
      %v2377 = vmul.f32 %v2375, %v2375
      %v2378 = vmul.f32 %v2377, -0.001358992
      %v2379 = vadd.f32 %v2378, 0.041655596
      %v2380 = vmul.f32 %v2377, %v2379
      %v2381 = vadd.f32 %v2380, -0.4999988
      %v2382 = vmul.f32 %v2377, %v2381
      %v2383 = vadd.f32 1.0, %v2382
      %v2384 = vmul.f32 %v2375, %v2375
      %v2385 = vmul.f32 %v2384, -0.00019511016
      %v2386 = vadd.f32 %v2385, 0.008332121
      %v2387 = vmul.f32 %v2384, %v2386
      %v2388 = vadd.f32 %v2387, -0.16666654
      %v2389 = vmul.f32 %v2384, %v2388
      %v2390 = vadd.f32 %v2389, 1.0
      %v2391 = vmul.f32 %v2390, %v2375
      %vm2392 = vweird.f32 %v231
      %v2393 = vadd.s32 %v2376, 3
      %v2394 = vand.u32 %v2393, 3
      %vm2395 = vcmp.lt.s32.totalorder %v2394, 2
      %vm2396 = vcmp.eq.s32.totalorder %v2394, 0
      %v2397 = vxor.u32 %v2391, 2147483648
      %v2398 = vsel %vm2396, %v2383, %v2397
      %vm2399 = vcmp.eq.s32.totalorder %v2394, 2
      %v2400 = vxor.u32 %v2383, 2147483648
      %v2401 = vsel %vm2399, %v2400, %v2391
      %v2402 = vsel %vm2395, %v2398, %v2401
      %v2403 = vsel %vm2392, nan, %v2402
      %v2404 = vand.u32 2147483647, %v232
      %vm2405 = vcmp.le.f32.partialorder %v2404, 0.7853982
      %vm2406 = vcmp.lt.s32.totalorder %v232, 0
      %v2407 = vand.u32 %v232, 2139095040
      %v2408 = vshrl.u32 %v2407, 23
      %v2409 = vsub.s32 %v2408, 127
      %v2410 = vand.u32 2147483647, %v232
      %v2411 = vand.u32 %v2410, 8388607
      %v2412 = vor.u32 %v2411, 8388608
      %v2413 = vsub.s32 0, %v2412
      %v2414 = vadd.s32 %v2409, 1
      %vm2415 = vcmp.gt.s32.totalorder %v2414, 0
      %v2416 = vsel %vm2415, %v2414, 0
      %v2417 = vshrl.u32 %v2416, 5
      %v2418 = vand.u32 %v2416, 31
      %v2419 = vsub.s32 32, %v2418
      %v2420 = vshrl.u32 683565275, %v2419
      %v2421 = vshll.u32 683565275, %v2418
      %v2422 = vshrl.u32 2475754826, %v2419
      %v2423 = vor.u32 %v2421, %v2422
      %v2424 = vshll.u32 2475754826, %v2418
      %v2425 = vshrl.u32 2131351028, %v2419
      %v2426 = vor.u32 %v2424, %v2425
      %v2427 = vshll.u32 2131351028, %v2418
      %v2428 = vshrl.u32 2102212464, %v2419
      %v2429 = vor.u32 %v2427, %v2428
      %v2430 = vshll.u32 2102212464, %v2418
      %v2431 = vshrl.u32 920167782, %v2419
      %v2432 = vor.u32 %v2430, %v2431
      %v2433 = vshll.u32 920167782, %v2418
      %v2434 = vshrl.u32 1326507024, %v2419
      %v2435 = vor.u32 %v2433, %v2434
      %vm2436 = vcmp.lt.s32.totalorder %v2417, 1
      %vm2437 = vcmp.lt.s32.totalorder %v2417, 2
      %vm2438 = vcmp.lt.s32.totalorder %v2417, 3
      %vm2439 = vcmp.lt.s32.totalorder %v2417, 4
      %v2440 = vsel %vm2436, %v2420, %v2423
      %v2441 = vsel %vm2439, %v2429, 2102212464
      %v2442 = vsel %vm2438, %v2426, %v2441
      %v2443 = vsel %vm2437, %v2440, %v2442
      %v2444 = vsel %vm2436, %v2423, %v2426
      %v2445 = vsel %vm2439, %v2432, 920167782
      %v2446 = vsel %vm2438, %v2429, %v2445
      %v2447 = vsel %vm2437, %v2444, %v2446
      %v2448 = vsel %vm2436, %v2426, %v2429
      %v2449 = vsel %vm2439, %v2435, 1326507024
      %v2450 = vsel %vm2438, %v2432, %v2449
      %v2451 = vsel %vm2437, %v2448, %v2450
      %v2452 = vshll.u32 %v2412, 8
      %v2453 = vand.u32 %v2452, 65535
      %v2454 = vshrl.u32 %v2452, 16
      %v2455 = vand.u32 %v2451, 65535
      %v2456 = vshrl.u32 %v2451, 16
      %v2457 = vmul.u32 %v2453, %v2455
      %v2458 = vmul.u32 %v2453, %v2456
      %v2459 = vmul.u32 %v2454, %v2455
      %v2460 = vmul.u32 %v2454, %v2456
      %v2461 = vshll.u32 %v2458, 16
      %v2462 = vshrl.u32 %v2458, 16
      %v2463 = vshll.u32 %v2459, 16
      %v2464 = vshrl.u32 %v2459, 16
      %vm2465 = vc.u32 %v2457, %v2461
      %v2466 = vsel %vm2465, 1, 0
      %v2467 = vadd.s32 %v2457, %v2461
      %v2468 = vadd.s32 %v2460, %v2466
      %vm2469 = vc.u32 %v2467, %v2463
      %v2470 = vsel %vm2469, 1, 0
      %v2471 = vadd.s32 %v2467, %v2463
      %v2472 = vadd.s32 %v2468, %v2470
      %v2473 = vadd.s32 %v2472, %v2462
      %v2474 = vadd.s32 %v2473, %v2464
      %v2475 = vand.u32 %v2452, 65535
      %v2476 = vshrl.u32 %v2452, 16
      %v2477 = vand.u32 %v2447, 65535
      %v2478 = vshrl.u32 %v2447, 16
      %v2479 = vmul.u32 %v2475, %v2477
      %v2480 = vmul.u32 %v2475, %v2478
      %v2481 = vmul.u32 %v2476, %v2477
      %v2482 = vmul.u32 %v2476, %v2478
      %v2483 = vshll.u32 %v2480, 16
      %v2484 = vshrl.u32 %v2480, 16
      %v2485 = vshll.u32 %v2481, 16
      %v2486 = vshrl.u32 %v2481, 16
      %vm2487 = vc.u32 %v2479, %v2483
      %v2488 = vsel %vm2487, 1, 0
      %v2489 = vadd.s32 %v2479, %v2483
      %v2490 = vadd.s32 %v2482, %v2488
      %vm2491 = vc.u32 %v2489, %v2485
      %v2492 = vsel %vm2491, 1, 0
      %v2493 = vadd.s32 %v2489, %v2485
      %v2494 = vadd.s32 %v2490, %v2492
      %v2495 = vadd.s32 %v2494, %v2484
      %v2496 = vadd.s32 %v2495, %v2486
      %v2497 = vmul.u32 %v2452, %v2443
      %v2498 = vadd.s32 %v2474, %v2493
      %vm2499 = vc.u32 %v2474, %v2493
      %v2500 = vadd.s32 %v2496, 1
      %v2501 = vsel %vm2499, %v2500, %v2496
      %v2502 = vadd.s32 %v2497, %v2501
      %v2503 = vadd.s32 %v2502, 536870912
      %v2504 = vshrl.u32 %v2503, 30
      %v2505 = vshll.u32 %v2504, 30
      %v2506 = vsub.s32 %v2502, %v2505
      %vm2507 = vcmp.lt.s32.totalorder %v2506, 0
      %v2508 = vsub.s32 0, %v2506
      %v2509 = vsel %vm2507, %v2508, %v2506
      %v2510 = vclz %v2509
      %v2511 = vsub.s32 %v2510, 2
      %vm2512 = vcmp.gt.s32.totalorder 0, %v2511
      %v2513 = vsel %vm2512, 0, %v2511
      %v2514 = vsub.s32 32, %v2513
      %v2515 = vshll.u32 %v2506, %v2513
      %v2516 = vshrl.u32 %v2498, %v2514
      %v2517 = vor.u32 %v2515, %v2516
      %v2518 = vsub.s32 4294967266, %v2513
      %v2519 = vadd.s32 %v2518, 127
      %v2520 = vshll.u32 %v2519, 23
      %v2521 = vor.u32 4788187, %v2520
      %v2522 = vand.u32 2147483647, %v2521
      %v2524 = vcvt.s32.f32 %v2517
      %v2525 = vmul.f32 %v2524, %v2522
      %v2526 = vxor.u32 %v2525, 2147483648
      %v2527 = vsel %vm2406, %v2526, %v2525
      %v2528 = vsub.s32 4, %v2504
      %v2529 = vsel %vm2406, %v2528, %v2504
      %v2530 = vsel %vm2405, %v232, %v2527
      %v2531 = vsel %vm2405, 0, %v2529
      %v2532 = vmul.f32 %v2530, %v2530
      %v2533 = vmul.f32 %v2532, -0.001358992
      %v2534 = vadd.f32 %v2533, 0.041655596
      %v2535 = vmul.f32 %v2532, %v2534
      %v2536 = vadd.f32 %v2535, -0.4999988
      %v2537 = vmul.f32 %v2532, %v2536
      %v2538 = vadd.f32 1.0, %v2537
      %v2539 = vmul.f32 %v2530, %v2530
      %v2540 = vmul.f32 %v2539, -0.00019511016
      %v2541 = vadd.f32 %v2540, 0.008332121
      %v2542 = vmul.f32 %v2539, %v2541
      %v2543 = vadd.f32 %v2542, -0.16666654
      %v2544 = vmul.f32 %v2539, %v2543
      %v2545 = vadd.f32 %v2544, 1.0
      %v2546 = vmul.f32 %v2545, %v2530
      %vm2547 = vweird.f32 %v232
      %v2548 = vadd.s32 %v2531, 3
      %v2549 = vand.u32 %v2548, 3
      %vm2550 = vcmp.lt.s32.totalorder %v2549, 2
      %vm2551 = vcmp.eq.s32.totalorder %v2549, 0
      %v2552 = vxor.u32 %v2546, 2147483648
      %v2553 = vsel %vm2551, %v2538, %v2552
      %vm2554 = vcmp.eq.s32.totalorder %v2549, 2
      %v2555 = vxor.u32 %v2538, 2147483648
      %v2556 = vsel %vm2554, %v2555, %v2546
      %v2557 = vsel %vm2550, %v2553, %v2556
      %v2558 = vsel %vm2547, nan, %v2557
      %v2559 = vand.u32 2147483647, %v233
      %vm2560 = vcmp.le.f32.partialorder %v2559, 0.7853982
      %vm2561 = vcmp.lt.s32.totalorder %v233, 0
      %v2562 = vand.u32 %v233, 2139095040
      %v2563 = vshrl.u32 %v2562, 23
      %v2564 = vsub.s32 %v2563, 127
      %v2565 = vand.u32 2147483647, %v233
      %v2566 = vand.u32 %v2565, 8388607
      %v2567 = vor.u32 %v2566, 8388608
      %v2568 = vsub.s32 0, %v2567
      %v2569 = vadd.s32 %v2564, 1
      %vm2570 = vcmp.gt.s32.totalorder %v2569, 0
      %v2571 = vsel %vm2570, %v2569, 0
      %v2572 = vshrl.u32 %v2571, 5
      %v2573 = vand.u32 %v2571, 31
      %v2574 = vsub.s32 32, %v2573
      %v2575 = vshrl.u32 683565275, %v2574
      %v2576 = vshll.u32 683565275, %v2573
      %v2577 = vshrl.u32 2475754826, %v2574
      %v2578 = vor.u32 %v2576, %v2577
      %v2579 = vshll.u32 2475754826, %v2573
      %v2580 = vshrl.u32 2131351028, %v2574
      %v2581 = vor.u32 %v2579, %v2580
      %v2582 = vshll.u32 2131351028, %v2573
      %v2583 = vshrl.u32 2102212464, %v2574
      %v2584 = vor.u32 %v2582, %v2583
      %v2585 = vshll.u32 2102212464, %v2573
      %v2586 = vshrl.u32 920167782, %v2574
      %v2587 = vor.u32 %v2585, %v2586
      %v2588 = vshll.u32 920167782, %v2573
      %v2589 = vshrl.u32 1326507024, %v2574
      %v2590 = vor.u32 %v2588, %v2589
      %vm2591 = vcmp.lt.s32.totalorder %v2572, 1
      %vm2592 = vcmp.lt.s32.totalorder %v2572, 2
      %vm2593 = vcmp.lt.s32.totalorder %v2572, 3
      %vm2594 = vcmp.lt.s32.totalorder %v2572, 4
      %v2595 = vsel %vm2591, %v2575, %v2578
      %v2596 = vsel %vm2594, %v2584, 2102212464
      %v2597 = vsel %vm2593, %v2581, %v2596
      %v2598 = vsel %vm2592, %v2595, %v2597
      %v2599 = vsel %vm2591, %v2578, %v2581
      %v2600 = vsel %vm2594, %v2587, 920167782
      %v2601 = vsel %vm2593, %v2584, %v2600
      %v2602 = vsel %vm2592, %v2599, %v2601
      %v2603 = vsel %vm2591, %v2581, %v2584
      %v2604 = vsel %vm2594, %v2590, 1326507024
      %v2605 = vsel %vm2593, %v2587, %v2604
      %v2606 = vsel %vm2592, %v2603, %v2605
      %v2607 = vshll.u32 %v2567, 8
      %v2608 = vand.u32 %v2607, 65535
      %v2609 = vshrl.u32 %v2607, 16
      %v2610 = vand.u32 %v2606, 65535
      %v2611 = vshrl.u32 %v2606, 16
      %v2612 = vmul.u32 %v2608, %v2610
      %v2613 = vmul.u32 %v2608, %v2611
      %v2614 = vmul.u32 %v2609, %v2610
      %v2615 = vmul.u32 %v2609, %v2611
      %v2616 = vshll.u32 %v2613, 16
      %v2617 = vshrl.u32 %v2613, 16
      %v2618 = vshll.u32 %v2614, 16
      %v2619 = vshrl.u32 %v2614, 16
      %vm2620 = vc.u32 %v2612, %v2616
      %v2621 = vsel %vm2620, 1, 0
      %v2622 = vadd.s32 %v2612, %v2616
      %v2623 = vadd.s32 %v2615, %v2621
      %vm2624 = vc.u32 %v2622, %v2618
      %v2625 = vsel %vm2624, 1, 0
      %v2626 = vadd.s32 %v2622, %v2618
      %v2627 = vadd.s32 %v2623, %v2625
      %v2628 = vadd.s32 %v2627, %v2617
      %v2629 = vadd.s32 %v2628, %v2619
      %v2630 = vand.u32 %v2607, 65535
      %v2631 = vshrl.u32 %v2607, 16
      %v2632 = vand.u32 %v2602, 65535
      %v2633 = vshrl.u32 %v2602, 16
      %v2634 = vmul.u32 %v2630, %v2632
      %v2635 = vmul.u32 %v2630, %v2633
      %v2636 = vmul.u32 %v2631, %v2632
      %v2637 = vmul.u32 %v2631, %v2633
      %v2638 = vshll.u32 %v2635, 16
      %v2639 = vshrl.u32 %v2635, 16
      %v2640 = vshll.u32 %v2636, 16
      %v2641 = vshrl.u32 %v2636, 16
      %vm2642 = vc.u32 %v2634, %v2638
      %v2643 = vsel %vm2642, 1, 0
      %v2644 = vadd.s32 %v2634, %v2638
      %v2645 = vadd.s32 %v2637, %v2643
      %vm2646 = vc.u32 %v2644, %v2640
      %v2647 = vsel %vm2646, 1, 0
      %v2648 = vadd.s32 %v2644, %v2640
      %v2649 = vadd.s32 %v2645, %v2647
      %v2650 = vadd.s32 %v2649, %v2639
      %v2651 = vadd.s32 %v2650, %v2641
      %v2652 = vmul.u32 %v2607, %v2598
      %v2653 = vadd.s32 %v2629, %v2648
      %vm2654 = vc.u32 %v2629, %v2648
      %v2655 = vadd.s32 %v2651, 1
      %v2656 = vsel %vm2654, %v2655, %v2651
      %v2657 = vadd.s32 %v2652, %v2656
      %v2658 = vadd.s32 %v2657, 536870912
      %v2659 = vshrl.u32 %v2658, 30
      %v2660 = vshll.u32 %v2659, 30
      %v2661 = vsub.s32 %v2657, %v2660
      %vm2662 = vcmp.lt.s32.totalorder %v2661, 0
      %v2663 = vsub.s32 0, %v2661
      %v2664 = vsel %vm2662, %v2663, %v2661
      %v2665 = vclz %v2664
      %v2666 = vsub.s32 %v2665, 2
      %vm2667 = vcmp.gt.s32.totalorder 0, %v2666
      %v2668 = vsel %vm2667, 0, %v2666
      %v2669 = vsub.s32 32, %v2668
      %v2670 = vshll.u32 %v2661, %v2668
      %v2671 = vshrl.u32 %v2653, %v2669
      %v2672 = vor.u32 %v2670, %v2671
      %v2673 = vsub.s32 4294967266, %v2668
      %v2674 = vadd.s32 %v2673, 127
      %v2675 = vshll.u32 %v2674, 23
      %v2676 = vor.u32 4788187, %v2675
      %v2677 = vand.u32 2147483647, %v2676
      %v2679 = vcvt.s32.f32 %v2672
      %v2680 = vmul.f32 %v2679, %v2677
      %v2681 = vxor.u32 %v2680, 2147483648
      %v2682 = vsel %vm2561, %v2681, %v2680
      %v2683 = vsub.s32 4, %v2659
      %v2684 = vsel %vm2561, %v2683, %v2659
      %v2685 = vsel %vm2560, %v233, %v2682
      %v2686 = vsel %vm2560, 0, %v2684
      %v2687 = vmul.f32 %v2685, %v2685
      %v2688 = vmul.f32 %v2687, -0.001358992
      %v2689 = vadd.f32 %v2688, 0.041655596
      %v2690 = vmul.f32 %v2687, %v2689
      %v2691 = vadd.f32 %v2690, -0.4999988
      %v2692 = vmul.f32 %v2687, %v2691
      %v2693 = vadd.f32 1.0, %v2692
      %v2694 = vmul.f32 %v2685, %v2685
      %v2695 = vmul.f32 %v2694, -0.00019511016
      %v2696 = vadd.f32 %v2695, 0.008332121
      %v2697 = vmul.f32 %v2694, %v2696
      %v2698 = vadd.f32 %v2697, -0.16666654
      %v2699 = vmul.f32 %v2694, %v2698
      %v2700 = vadd.f32 %v2699, 1.0
      %v2701 = vmul.f32 %v2700, %v2685
      %vm2702 = vweird.f32 %v233
      %v2703 = vadd.s32 %v2686, 3
      %v2704 = vand.u32 %v2703, 3
      %vm2705 = vcmp.lt.s32.totalorder %v2704, 2
      %vm2706 = vcmp.eq.s32.totalorder %v2704, 0
      %v2707 = vxor.u32 %v2701, 2147483648
      %v2708 = vsel %vm2706, %v2693, %v2707
      %vm2709 = vcmp.eq.s32.totalorder %v2704, 2
      %v2710 = vxor.u32 %v2693, 2147483648
      %v2711 = vsel %vm2709, %v2710, %v2701
      %v2712 = vsel %vm2705, %v2708, %v2711
      %v2713 = vsel %vm2702, nan, %v2712
      %v2714 = vmul.f32 %v218, %v1628
      %v2715 = vmul.f32 %v219, %v1783
      %v2716 = vmul.f32 %v220, %v1938
      %v2717 = vmul.f32 %v221, %v2093
      %v2718 = vmul.f32 %v222, %v2248
      %v2719 = vmul.f32 %v223, %v2403
      %v2720 = vmul.f32 %v224, %v2558
      %v2721 = vmul.f32 %v225, %v2713
      %v2722 = vld [vmem:[%s2] sm:$0xff]
      %v2723 = vld [vmem:[%s2 + $0x8] sm:$0xff]
      %v2724 = vld [vmem:[%s2 + $0x10] sm:$0xff]
      %v2725 = vld [vmem:[%s2 + $0x18] sm:$0xff]
      %v2726 = vld [vmem:[%s2 + $0x20] sm:$0xff]
      %v2727 = vld [vmem:[%s2 + $0x28] sm:$0xff]
      %v2728 = vld [vmem:[%s2 + $0x30] sm:$0xff]
      %v2729 = vld [vmem:[%s2 + $0x38] sm:$0xff]
      %v2730 = vld [vmem:[%s2 + $0x40] sm:$0xff]
      %v2731 = vld [vmem:[%s2 + $0x48] sm:$0xff]
      %v2732 = vld [vmem:[%s2 + $0x50] sm:$0xff]
      %v2733 = vld [vmem:[%s2 + $0x58] sm:$0xff]
      %v2734 = vld [vmem:[%s2 + $0x60] sm:$0xff]
      %v2735 = vld [vmem:[%s2 + $0x68] sm:$0xff]
      %v2736 = vld [vmem:[%s2 + $0x70] sm:$0xff]
      %v2737 = vld [vmem:[%s2 + $0x78] sm:$0xff]
      %v2738 = vld [vmem:[%s2 + $0x80] sm:$0xff]
      %v2739 = vld [vmem:[%s2 + $0x88] sm:$0xff]
      %v2740 = vld [vmem:[%s2 + $0x90] sm:$0xff]
      %v2741 = vld [vmem:[%s2 + $0x98] sm:$0xff]
      %v2742 = vld [vmem:[%s2 + $0xa0] sm:$0xff]
      %v2743 = vld [vmem:[%s2 + $0xa8] sm:$0xff]
      %v2744 = vld [vmem:[%s2 + $0xb0] sm:$0xff]
      %v2745 = vld [vmem:[%s2 + $0xb8] sm:$0xff]
      %v2746 = vld [vmem:[%s2 + $0xc0] sm:$0xff]
      %v2747 = vld [vmem:[%s2 + $0xc8] sm:$0xff]
      %v2748 = vld [vmem:[%s2 + $0xd0] sm:$0xff]
      %v2749 = vld [vmem:[%s2 + $0xd8] sm:$0xff]
      %v2750 = vld [vmem:[%s2 + $0xe0] sm:$0xff]
      %v2751 = vld [vmem:[%s2 + $0xe8] sm:$0xff]
      %v2752 = vld [vmem:[%s2 + $0xf0] sm:$0xff]
      %v2753 = vld [vmem:[%s2 + $0xf8] sm:$0xff]
      %v2754 = vld [vmem:[%s2 + $0x100] sm:$0xff]
      %v2755 = vld [vmem:[%s2 + $0x108] sm:$0xff]
      %v2756 = vld [vmem:[%s2 + $0x110] sm:$0xff]
      %v2757 = vld [vmem:[%s2 + $0x118] sm:$0xff]
      %v2758 = vld [vmem:[%s2 + $0x120] sm:$0xff]
      %v2759 = vld [vmem:[%s2 + $0x128] sm:$0xff]
      %v2760 = vld [vmem:[%s2 + $0x130] sm:$0xff]
      %v2761 = vld [vmem:[%s2 + $0x138] sm:$0xff]
      %v2762 = vld [vmem:[%s2 + $0x140] sm:$0xff]
      %v2763 = vld [vmem:[%s2 + $0x148] sm:$0xff]
      %v2764 = vld [vmem:[%s2 + $0x150] sm:$0xff]
      %v2765 = vld [vmem:[%s2 + $0x158] sm:$0xff]
      %v2766 = vld [vmem:[%s2 + $0x160] sm:$0xff]
      %v2767 = vld [vmem:[%s2 + $0x168] sm:$0xff]
      %v2768 = vld [vmem:[%s2 + $0x170] sm:$0xff]
      %v2769 = vld [vmem:[%s2 + $0x178] sm:$0xff]
      %v2770 = vld [vmem:[%s2 + $0x180] sm:$0xff]
      %v2771 = vld [vmem:[%s2 + $0x188] sm:$0xff]
      %v2772 = vld [vmem:[%s2 + $0x190] sm:$0xff]
      %v2773 = vld [vmem:[%s2 + $0x198] sm:$0xff]
      %v2774 = vld [vmem:[%s2 + $0x1a0] sm:$0xff]
      %v2775 = vld [vmem:[%s2 + $0x1a8] sm:$0xff]
      %v2776 = vld [vmem:[%s2 + $0x1b0] sm:$0xff]
      %v2777 = vld [vmem:[%s2 + $0x1b8] sm:$0xff]
      %v2778 = vld [vmem:[%s2 + $0x1c0] sm:$0xff]
      %v2779 = vld [vmem:[%s2 + $0x1c8] sm:$0xff]
      %v2780 = vld [vmem:[%s2 + $0x1d0] sm:$0xff]
      %v2781 = vld [vmem:[%s2 + $0x1d8] sm:$0xff]
      %v2782 = vld [vmem:[%s2 + $0x1e0] sm:$0xff]
      %v2783 = vld [vmem:[%s2 + $0x1e8] sm:$0xff]
      %v2784 = vld [vmem:[%s2 + $0x1f0] sm:$0xff]
      %v2785 = vld [vmem:[%s2 + $0x1f8] sm:$0xff]
      %v2786 = vld [vmem:[%s2 + $0x200] sm:$0xff]
      %v2787 = vld [vmem:[%s2 + $0x208] sm:$0xff]
      %v2788 = vld [vmem:[%s2 + $0x210] sm:$0xff]
      %v2789 = vld [vmem:[%s2 + $0x218] sm:$0xff]
      %v2790 = vld [vmem:[%s2 + $0x220] sm:$0xff]
      %v2791 = vld [vmem:[%s2 + $0x228] sm:$0xff]
      %v2792 = vld [vmem:[%s2 + $0x230] sm:$0xff]
      %v2793 = vld [vmem:[%s2 + $0x238] sm:$0xff]
      %v2794 = vld [vmem:[%s2 + $0x240] sm:$0xff]
      %v2795 = vld [vmem:[%s2 + $0x248] sm:$0xff]
      %v2796 = vld [vmem:[%s2 + $0x250] sm:$0xff]
      %v2797 = vld [vmem:[%s2 + $0x258] sm:$0xff]
      %v2798 = vld [vmem:[%s2 + $0x260] sm:$0xff]
      %v2799 = vld [vmem:[%s2 + $0x268] sm:$0xff]
      %v2800 = vld [vmem:[%s2 + $0x270] sm:$0xff]
      %v2801 = vld [vmem:[%s2 + $0x278] sm:$0xff]
      %v2802 = vld [vmem:[%s2 + $0x280] sm:$0xff]
      %v2803 = vld [vmem:[%s2 + $0x288] sm:$0xff]
      %v2804 = vld [vmem:[%s2 + $0x290] sm:$0xff]
      %v2805 = vld [vmem:[%s2 + $0x298] sm:$0xff]
      %v2806 = vld [vmem:[%s2 + $0x2a0] sm:$0xff]
      %v2807 = vld [vmem:[%s2 + $0x2a8] sm:$0xff]
      %v2808 = vld [vmem:[%s2 + $0x2b0] sm:$0xff]
      %v2809 = vld [vmem:[%s2 + $0x2b8] sm:$0xff]
      %v2810 = vld [vmem:[%s2 + $0x2c0] sm:$0xff]
      %v2811 = vld [vmem:[%s2 + $0x2c8] sm:$0xff]
      %v2812 = vld [vmem:[%s2 + $0x2d0] sm:$0xff]
      %v2813 = vld [vmem:[%s2 + $0x2d8] sm:$0xff]
      %v2814 = vld [vmem:[%s2 + $0x2e0] sm:$0xff]
      %v2815 = vld [vmem:[%s2 + $0x2e8] sm:$0xff]
      %v2816 = vld [vmem:[%s2 + $0x2f0] sm:$0xff]
      %v2817 = vld [vmem:[%s2 + $0x2f8] sm:$0xff]
      %v2818 = vld [vmem:[%s2 + $0x300] sm:$0xff]
      %v2819 = vld [vmem:[%s2 + $0x308] sm:$0xff]
      %v2820 = vld [vmem:[%s2 + $0x310] sm:$0xff]
      %v2821 = vld [vmem:[%s2 + $0x318] sm:$0xff]
      %v2822 = vld [vmem:[%s2 + $0x320] sm:$0xff]
      %v2823 = vld [vmem:[%s2 + $0x328] sm:$0xff]
      %v2824 = vld [vmem:[%s2 + $0x330] sm:$0xff]
      %v2825 = vld [vmem:[%s2 + $0x338] sm:$0xff]
      %v2826 = vld [vmem:[%s2 + $0x340] sm:$0xff]
      %v2827 = vld [vmem:[%s2 + $0x348] sm:$0xff]
      %v2828 = vld [vmem:[%s2 + $0x350] sm:$0xff]
      %v2829 = vld [vmem:[%s2 + $0x358] sm:$0xff]
      %v2830 = vld [vmem:[%s2 + $0x360] sm:$0xff]
      %v2831 = vld [vmem:[%s2 + $0x368] sm:$0xff]
      %v2832 = vld [vmem:[%s2 + $0x370] sm:$0xff]
      %v2833 = vld [vmem:[%s2 + $0x378] sm:$0xff]
      %v2834 = vld [vmem:[%s2 + $0x380] sm:$0xff]
      %v2835 = vld [vmem:[%s2 + $0x388] sm:$0xff]
      %v2836 = vld [vmem:[%s2 + $0x390] sm:$0xff]
      %v2837 = vld [vmem:[%s2 + $0x398] sm:$0xff]
      %v2838 = vld [vmem:[%s2 + $0x3a0] sm:$0xff]
      %v2839 = vld [vmem:[%s2 + $0x3a8] sm:$0xff]
      %v2840 = vld [vmem:[%s2 + $0x3b0] sm:$0xff]
      %v2841 = vld [vmem:[%s2 + $0x3b8] sm:$0xff]
      %v2842 = vld [vmem:[%s2 + $0x3c0] sm:$0xff]
      %v2843 = vld [vmem:[%s2 + $0x3c8] sm:$0xff]
      %v2844 = vld [vmem:[%s2 + $0x3d0] sm:$0xff]
      %v2845 = vld [vmem:[%s2 + $0x3d8] sm:$0xff]
      %v2846 = vld [vmem:[%s2 + $0x3e0] sm:$0xff]
      %v2847 = vld [vmem:[%s2 + $0x3e8] sm:$0xff]
      %v2848 = vld [vmem:[%s2 + $0x3f0] sm:$0xff]
      %v2849 = vld [vmem:[%s2 + $0x3f8] sm:$0xff]
      %v2850 = vld [vmem:[%s2 + $0x400] sm:$0xff]
      %v2851 = vld [vmem:[%s2 + $0x408] sm:$0xff]
      %v2852 = vld [vmem:[%s2 + $0x410] sm:$0xff]
      %v2853 = vld [vmem:[%s2 + $0x418] sm:$0xff]
      %v2854 = vld [vmem:[%s2 + $0x420] sm:$0xff]
      %v2855 = vld [vmem:[%s2 + $0x428] sm:$0xff]
      %v2856 = vld [vmem:[%s2 + $0x430] sm:$0xff]
      %v2857 = vld [vmem:[%s2 + $0x438] sm:$0xff]
      %v2858 = vld [vmem:[%s2 + $0x440] sm:$0xff]
      %v2859 = vld [vmem:[%s2 + $0x448] sm:$0xff]
      %v2860 = vld [vmem:[%s2 + $0x450] sm:$0xff]
      %v2861 = vld [vmem:[%s2 + $0x458] sm:$0xff]
      %v2862 = vld [vmem:[%s2 + $0x460] sm:$0xff]
      %v2863 = vld [vmem:[%s2 + $0x468] sm:$0xff]
      %v2864 = vld [vmem:[%s2 + $0x470] sm:$0xff]
      %v2865 = vld [vmem:[%s2 + $0x478] sm:$0xff]
      %v2866 = vld [vmem:[%s2 + $0x480] sm:$0xff]
      %v2867 = vld [vmem:[%s2 + $0x488] sm:$0xff]
      %v2868 = vld [vmem:[%s2 + $0x490] sm:$0xff]
      %v2869 = vld [vmem:[%s2 + $0x498] sm:$0xff]
      %v2870 = vld [vmem:[%s2 + $0x4a0] sm:$0xff]
      %v2871 = vld [vmem:[%s2 + $0x4a8] sm:$0xff]
      %v2872 = vld [vmem:[%s2 + $0x4b0] sm:$0xff]
      %v2873 = vld [vmem:[%s2 + $0x4b8] sm:$0xff]
      %v2874 = vld [vmem:[%s2 + $0x4c0] sm:$0xff]
      %v2875 = vld [vmem:[%s2 + $0x4c8] sm:$0xff]
      %v2876 = vld [vmem:[%s2 + $0x4d0] sm:$0xff]
      %v2877 = vld [vmem:[%s2 + $0x4d8] sm:$0xff]
      %v2878 = vld [vmem:[%s2 + $0x4e0] sm:$0xff]
      %v2879 = vld [vmem:[%s2 + $0x4e8] sm:$0xff]
      %v2880 = vld [vmem:[%s2 + $0x4f0] sm:$0xff]
      %v2881 = vld [vmem:[%s2 + $0x4f8] sm:$0xff]
      %v2882 = vld [vmem:[%s2 + $0x500] sm:$0xff]
      %v2883 = vld [vmem:[%s2 + $0x508] sm:$0xff]
      %v2884 = vld [vmem:[%s2 + $0x510] sm:$0xff]
      %v2885 = vld [vmem:[%s2 + $0x518] sm:$0xff]
      %v2886 = vld [vmem:[%s2 + $0x520] sm:$0xff]
      %v2887 = vld [vmem:[%s2 + $0x528] sm:$0xff]
      %v2888 = vld [vmem:[%s2 + $0x530] sm:$0xff]
      %v2889 = vld [vmem:[%s2 + $0x538] sm:$0xff]
      %v2890 = vld [vmem:[%s2 + $0x540] sm:$0xff]
      %v2891 = vld [vmem:[%s2 + $0x548] sm:$0xff]
      %v2892 = vld [vmem:[%s2 + $0x550] sm:$0xff]
      %v2893 = vld [vmem:[%s2 + $0x558] sm:$0xff]
      %v2894 = vld [vmem:[%s2 + $0x560] sm:$0xff]
      %v2895 = vld [vmem:[%s2 + $0x568] sm:$0xff]
      %v2896 = vld [vmem:[%s2 + $0x570] sm:$0xff]
      %v2897 = vld [vmem:[%s2 + $0x578] sm:$0xff]
      %v2898 = vld [vmem:[%s2 + $0x580] sm:$0xff]
      %v2899 = vld [vmem:[%s2 + $0x588] sm:$0xff]
      %v2900 = vld [vmem:[%s2 + $0x590] sm:$0xff]
      %v2901 = vld [vmem:[%s2 + $0x598] sm:$0xff]
      %v2902 = vld [vmem:[%s2 + $0x5a0] sm:$0xff]
      %v2903 = vld [vmem:[%s2 + $0x5a8] sm:$0xff]
      %v2904 = vld [vmem:[%s2 + $0x5b0] sm:$0xff]
      %v2905 = vld [vmem:[%s2 + $0x5b8] sm:$0xff]
      %v2906 = vld [vmem:[%s2 + $0x5c0] sm:$0xff]
      %v2907 = vld [vmem:[%s2 + $0x5c8] sm:$0xff]
      %v2908 = vld [vmem:[%s2 + $0x5d0] sm:$0xff]
      %v2909 = vld [vmem:[%s2 + $0x5d8] sm:$0xff]
      %v2910 = vld [vmem:[%s2 + $0x5e0] sm:$0xff]
      %v2911 = vld [vmem:[%s2 + $0x5e8] sm:$0xff]
      %v2912 = vld [vmem:[%s2 + $0x5f0] sm:$0xff]
      %v2913 = vld [vmem:[%s2 + $0x5f8] sm:$0xff]
      %v2914 = vld [vmem:[%s2 + $0x600] sm:$0xff]
      %v2915 = vld [vmem:[%s2 + $0x608] sm:$0xff]
      %v2916 = vld [vmem:[%s2 + $0x610] sm:$0xff]
      %v2917 = vld [vmem:[%s2 + $0x618] sm:$0xff]
      %v2918 = vld [vmem:[%s2 + $0x620] sm:$0xff]
      %v2919 = vld [vmem:[%s2 + $0x628] sm:$0xff]
      %v2920 = vld [vmem:[%s2 + $0x630] sm:$0xff]
      %v2921 = vld [vmem:[%s2 + $0x638] sm:$0xff]
      %v2922 = vld [vmem:[%s2 + $0x640] sm:$0xff]
      %v2923 = vld [vmem:[%s2 + $0x648] sm:$0xff]
      %v2924 = vld [vmem:[%s2 + $0x650] sm:$0xff]
      %v2925 = vld [vmem:[%s2 + $0x658] sm:$0xff]
      %v2926 = vld [vmem:[%s2 + $0x660] sm:$0xff]
      %v2927 = vld [vmem:[%s2 + $0x668] sm:$0xff]
      %v2928 = vld [vmem:[%s2 + $0x670] sm:$0xff]
      %v2929 = vld [vmem:[%s2 + $0x678] sm:$0xff]
      %v2930 = vld [vmem:[%s2 + $0x680] sm:$0xff]
      %v2931 = vld [vmem:[%s2 + $0x688] sm:$0xff]
      %v2932 = vld [vmem:[%s2 + $0x690] sm:$0xff]
      %v2933 = vld [vmem:[%s2 + $0x698] sm:$0xff]
      %v2934 = vld [vmem:[%s2 + $0x6a0] sm:$0xff]
      %v2935 = vld [vmem:[%s2 + $0x6a8] sm:$0xff]
      %v2936 = vld [vmem:[%s2 + $0x6b0] sm:$0xff]
      %v2937 = vld [vmem:[%s2 + $0x6b8] sm:$0xff]
      %v2938 = vld [vmem:[%s2 + $0x6c0] sm:$0xff]
      %v2939 = vld [vmem:[%s2 + $0x6c8] sm:$0xff]
      %v2940 = vld [vmem:[%s2 + $0x6d0] sm:$0xff]
      %v2941 = vld [vmem:[%s2 + $0x6d8] sm:$0xff]
      %v2942 = vld [vmem:[%s2 + $0x6e0] sm:$0xff]
      %v2943 = vld [vmem:[%s2 + $0x6e8] sm:$0xff]
      %v2944 = vld [vmem:[%s2 + $0x6f0] sm:$0xff]
      %v2945 = vld [vmem:[%s2 + $0x6f8] sm:$0xff]
      %v2946 = vld [vmem:[%s2 + $0x700] sm:$0xff]
      %v2947 = vld [vmem:[%s2 + $0x708] sm:$0xff]
      %v2948 = vld [vmem:[%s2 + $0x710] sm:$0xff]
      %v2949 = vld [vmem:[%s2 + $0x718] sm:$0xff]
      %v2950 = vld [vmem:[%s2 + $0x720] sm:$0xff]
      %v2951 = vld [vmem:[%s2 + $0x728] sm:$0xff]
      %v2952 = vld [vmem:[%s2 + $0x730] sm:$0xff]
      %v2953 = vld [vmem:[%s2 + $0x738] sm:$0xff]
      %v2954 = vld [vmem:[%s2 + $0x740] sm:$0xff]
      %v2955 = vld [vmem:[%s2 + $0x748] sm:$0xff]
      %v2956 = vld [vmem:[%s2 + $0x750] sm:$0xff]
      %v2957 = vld [vmem:[%s2 + $0x758] sm:$0xff]
      %v2958 = vld [vmem:[%s2 + $0x760] sm:$0xff]
      %v2959 = vld [vmem:[%s2 + $0x768] sm:$0xff]
      %v2960 = vld [vmem:[%s2 + $0x770] sm:$0xff]
      %v2961 = vld [vmem:[%s2 + $0x778] sm:$0xff]
      %v2962 = vld [vmem:[%s2 + $0x780] sm:$0xff]
      %v2963 = vld [vmem:[%s2 + $0x788] sm:$0xff]
      %v2964 = vld [vmem:[%s2 + $0x790] sm:$0xff]
      %v2965 = vld [vmem:[%s2 + $0x798] sm:$0xff]
      %v2966 = vld [vmem:[%s2 + $0x7a0] sm:$0xff]
      %v2967 = vld [vmem:[%s2 + $0x7a8] sm:$0xff]
      %v2968 = vld [vmem:[%s2 + $0x7b0] sm:$0xff]
      %v2969 = vld [vmem:[%s2 + $0x7b8] sm:$0xff]
      %v2970 = vld [vmem:[%s2 + $0x7c0] sm:$0xff]
      %v2971 = vld [vmem:[%s2 + $0x7c8] sm:$0xff]
      %v2972 = vld [vmem:[%s2 + $0x7d0] sm:$0xff]
      %v2973 = vld [vmem:[%s2 + $0x7d8] sm:$0xff]
      %v2974 = vld [vmem:[%s2 + $0x7e0] sm:$0xff]
      %v2975 = vld [vmem:[%s2 + $0x7e8] sm:$0xff]
      %v2976 = vld [vmem:[%s2 + $0x7f0] sm:$0xff]
      %v2977 = vld [vmem:[%s2 + $0x7f8] sm:$0xff]
      %v2978 = vld [vmem:[%s2 + $0x800] sm:$0xff]
      %v2979 = vld [vmem:[%s2 + $0x808] sm:$0xff]
      %v2980 = vld [vmem:[%s2 + $0x810] sm:$0xff]
      %v2981 = vld [vmem:[%s2 + $0x818] sm:$0xff]
      %v2982 = vld [vmem:[%s2 + $0x820] sm:$0xff]
      %v2983 = vld [vmem:[%s2 + $0x828] sm:$0xff]
      %v2984 = vld [vmem:[%s2 + $0x830] sm:$0xff]
      %v2985 = vld [vmem:[%s2 + $0x838] sm:$0xff]
      %v2986 = vld [vmem:[%s2 + $0x840] sm:$0xff]
      %v2987 = vld [vmem:[%s2 + $0x848] sm:$0xff]
      %v2988 = vld [vmem:[%s2 + $0x850] sm:$0xff]
      %v2989 = vld [vmem:[%s2 + $0x858] sm:$0xff]
      %v2990 = vld [vmem:[%s2 + $0x860] sm:$0xff]
      %v2991 = vld [vmem:[%s2 + $0x868] sm:$0xff]
      %v2992 = vld [vmem:[%s2 + $0x870] sm:$0xff]
      %v2993 = vld [vmem:[%s2 + $0x878] sm:$0xff]
      %v2994 = vld [vmem:[%s2 + $0x880] sm:$0xff]
      %v2995 = vld [vmem:[%s2 + $0x888] sm:$0xff]
      %v2996 = vld [vmem:[%s2 + $0x890] sm:$0xff]
      %v2997 = vld [vmem:[%s2 + $0x898] sm:$0xff]
      %v2998 = vld [vmem:[%s2 + $0x8a0] sm:$0xff]
      %v2999 = vld [vmem:[%s2 + $0x8a8] sm:$0xff]
      %v3000 = vld [vmem:[%s2 + $0x8b0] sm:$0xff]
      %v3001 = vld [vmem:[%s2 + $0x8b8] sm:$0xff]
      %v3002 = vld [vmem:[%s2 + $0x8c0] sm:$0xff]
      %v3003 = vld [vmem:[%s2 + $0x8c8] sm:$0xff]
      %v3004 = vld [vmem:[%s2 + $0x8d0] sm:$0xff]
      %v3005 = vld [vmem:[%s2 + $0x8d8] sm:$0xff]
      %v3006 = vld [vmem:[%s2 + $0x8e0] sm:$0xff]
      %v3007 = vld [vmem:[%s2 + $0x8e8] sm:$0xff]
      %v3008 = vld [vmem:[%s2 + $0x8f0] sm:$0xff]
      %v3009 = vld [vmem:[%s2 + $0x8f8] sm:$0xff]
      %v3010 = vld [vmem:[%s2 + $0x900] sm:$0xff]
      %v3011 = vld [vmem:[%s2 + $0x908] sm:$0xff]
      %v3012 = vld [vmem:[%s2 + $0x910] sm:$0xff]
      %v3013 = vld [vmem:[%s2 + $0x918] sm:$0xff]
      %v3014 = vld [vmem:[%s2 + $0x920] sm:$0xff]
      %v3015 = vld [vmem:[%s2 + $0x928] sm:$0xff]
      %v3016 = vld [vmem:[%s2 + $0x930] sm:$0xff]
      %v3017 = vld [vmem:[%s2 + $0x938] sm:$0xff]
      %v3018 = vld [vmem:[%s2 + $0x940] sm:$0xff]
      %v3019 = vld [vmem:[%s2 + $0x948] sm:$0xff]
      %v3020 = vld [vmem:[%s2 + $0x950] sm:$0xff]
      %v3021 = vld [vmem:[%s2 + $0x958] sm:$0xff]
      %v3022 = vld [vmem:[%s2 + $0x960] sm:$0xff]
      %v3023 = vld [vmem:[%s2 + $0x968] sm:$0xff]
      %v3024 = vld [vmem:[%s2 + $0x970] sm:$0xff]
      %v3025 = vld [vmem:[%s2 + $0x978] sm:$0xff]
      %v3026 = vld [vmem:[%s2 + $0x980] sm:$0xff]
      %v3027 = vld [vmem:[%s2 + $0x988] sm:$0xff]
      %v3028 = vld [vmem:[%s2 + $0x990] sm:$0xff]
      %v3029 = vld [vmem:[%s2 + $0x998] sm:$0xff]
      %v3030 = vld [vmem:[%s2 + $0x9a0] sm:$0xff]
      %v3031 = vld [vmem:[%s2 + $0x9a8] sm:$0xff]
      %v3032 = vld [vmem:[%s2 + $0x9b0] sm:$0xff]
      %v3033 = vld [vmem:[%s2 + $0x9b8] sm:$0xff]
      %v3034 = vld [vmem:[%s2 + $0x9c0] sm:$0xff]
      %v3035 = vld [vmem:[%s2 + $0x9c8] sm:$0xff]
      %v3036 = vld [vmem:[%s2 + $0x9d0] sm:$0xff]
      %v3037 = vld [vmem:[%s2 + $0x9d8] sm:$0xff]
      %v3038 = vld [vmem:[%s2 + $0x9e0] sm:$0xff]
      %v3039 = vld [vmem:[%s2 + $0x9e8] sm:$0xff]
      %v3040 = vld [vmem:[%s2 + $0x9f0] sm:$0xff]
      %v3041 = vld [vmem:[%s2 + $0x9f8] sm:$0xff]
      %v3042 = vld [vmem:[%s2 + $0xa00] sm:$0xff]
      %v3043 = vld [vmem:[%s2 + $0xa08] sm:$0xff]
      %v3044 = vld [vmem:[%s2 + $0xa10] sm:$0xff]
      %v3045 = vld [vmem:[%s2 + $0xa18] sm:$0xff]
      %v3046 = vld [vmem:[%s2 + $0xa20] sm:$0xff]
      %v3047 = vld [vmem:[%s2 + $0xa28] sm:$0xff]
      %v3048 = vld [vmem:[%s2 + $0xa30] sm:$0xff]
      %v3049 = vld [vmem:[%s2 + $0xa38] sm:$0xff]
      %v3050 = vld [vmem:[%s2 + $0xa40] sm:$0xff]
      %v3051 = vld [vmem:[%s2 + $0xa48] sm:$0xff]
      %v3052 = vld [vmem:[%s2 + $0xa50] sm:$0xff]
      %v3053 = vld [vmem:[%s2 + $0xa58] sm:$0xff]
      %v3054 = vld [vmem:[%s2 + $0xa60] sm:$0xff]
      %v3055 = vld [vmem:[%s2 + $0xa68] sm:$0xff]
      %v3056 = vld [vmem:[%s2 + $0xa70] sm:$0xff]
      %v3057 = vld [vmem:[%s2 + $0xa78] sm:$0xff]
      %v3058 = vld [vmem:[%s2 + $0xa80] sm:$0xff]
      %v3059 = vld [vmem:[%s2 + $0xa88] sm:$0xff]
      %v3060 = vld [vmem:[%s2 + $0xa90] sm:$0xff]
      %v3061 = vld [vmem:[%s2 + $0xa98] sm:$0xff]
      %v3062 = vld [vmem:[%s2 + $0xaa0] sm:$0xff]
      %v3063 = vld [vmem:[%s2 + $0xaa8] sm:$0xff]
      %v3064 = vld [vmem:[%s2 + $0xab0] sm:$0xff]
      %v3065 = vld [vmem:[%s2 + $0xab8] sm:$0xff]
      %v3066 = vld [vmem:[%s2 + $0xac0] sm:$0xff]
      %v3067 = vld [vmem:[%s2 + $0xac8] sm:$0xff]
      %v3068 = vld [vmem:[%s2 + $0xad0] sm:$0xff]
      %v3069 = vld [vmem:[%s2 + $0xad8] sm:$0xff]
      %v3070 = vld [vmem:[%s2 + $0xae0] sm:$0xff]
      %v3071 = vld [vmem:[%s2 + $0xae8] sm:$0xff]
      %v3072 = vld [vmem:[%s2 + $0xaf0] sm:$0xff]
      %v3073 = vld [vmem:[%s2 + $0xaf8] sm:$0xff]
      %v3074 = vld [vmem:[%s2 + $0xb00] sm:$0xff]
      %v3075 = vld [vmem:[%s2 + $0xb08] sm:$0xff]
      %v3076 = vld [vmem:[%s2 + $0xb10] sm:$0xff]
      %v3077 = vld [vmem:[%s2 + $0xb18] sm:$0xff]
      %v3078 = vld [vmem:[%s2 + $0xb20] sm:$0xff]
      %v3079 = vld [vmem:[%s2 + $0xb28] sm:$0xff]
      %v3080 = vld [vmem:[%s2 + $0xb30] sm:$0xff]
      %v3081 = vld [vmem:[%s2 + $0xb38] sm:$0xff]
      %v3082 = vld [vmem:[%s2 + $0xb40] sm:$0xff]
      %v3083 = vld [vmem:[%s2 + $0xb48] sm:$0xff]
      %v3084 = vld [vmem:[%s2 + $0xb50] sm:$0xff]
      %v3085 = vld [vmem:[%s2 + $0xb58] sm:$0xff]
      %v3086 = vld [vmem:[%s2 + $0xb60] sm:$0xff]
      %v3087 = vld [vmem:[%s2 + $0xb68] sm:$0xff]
      %v3088 = vld [vmem:[%s2 + $0xb70] sm:$0xff]
      %v3089 = vld [vmem:[%s2 + $0xb78] sm:$0xff]
      %v3090 = vld [vmem:[%s2 + $0xb80] sm:$0xff]
      %v3091 = vld [vmem:[%s2 + $0xb88] sm:$0xff]
      %v3092 = vld [vmem:[%s2 + $0xb90] sm:$0xff]
      %v3093 = vld [vmem:[%s2 + $0xb98] sm:$0xff]
      %v3094 = vld [vmem:[%s2 + $0xba0] sm:$0xff]
      %v3095 = vld [vmem:[%s2 + $0xba8] sm:$0xff]
      %v3096 = vld [vmem:[%s2 + $0xbb0] sm:$0xff]
      %v3097 = vld [vmem:[%s2 + $0xbb8] sm:$0xff]
      %v3098 = vld [vmem:[%s2 + $0xbc0] sm:$0xff]
      %v3099 = vld [vmem:[%s2 + $0xbc8] sm:$0xff]
      %v3100 = vld [vmem:[%s2 + $0xbd0] sm:$0xff]
      %v3101 = vld [vmem:[%s2 + $0xbd8] sm:$0xff]
      %v3102 = vld [vmem:[%s2 + $0xbe0] sm:$0xff]
      %v3103 = vld [vmem:[%s2 + $0xbe8] sm:$0xff]
      %v3104 = vld [vmem:[%s2 + $0xbf0] sm:$0xff]
      %v3105 = vld [vmem:[%s2 + $0xbf8] sm:$0xff]
      %v3106 = vld [vmem:[%s2 + $0xc00] sm:$0xff]
      %v3107 = vld [vmem:[%s2 + $0xc08] sm:$0xff]
      %v3108 = vld [vmem:[%s2 + $0xc10] sm:$0xff]
      %v3109 = vld [vmem:[%s2 + $0xc18] sm:$0xff]
      %v3110 = vld [vmem:[%s2 + $0xc20] sm:$0xff]
      %v3111 = vld [vmem:[%s2 + $0xc28] sm:$0xff]
      %v3112 = vld [vmem:[%s2 + $0xc30] sm:$0xff]
      %v3113 = vld [vmem:[%s2 + $0xc38] sm:$0xff]
      %v3114 = vld [vmem:[%s2 + $0xc40] sm:$0xff]
      %v3115 = vld [vmem:[%s2 + $0xc48] sm:$0xff]
      %v3116 = vld [vmem:[%s2 + $0xc50] sm:$0xff]
      %v3117 = vld [vmem:[%s2 + $0xc58] sm:$0xff]
      %v3118 = vld [vmem:[%s2 + $0xc60] sm:$0xff]
      %v3119 = vld [vmem:[%s2 + $0xc68] sm:$0xff]
      %v3120 = vld [vmem:[%s2 + $0xc70] sm:$0xff]
      %v3121 = vld [vmem:[%s2 + $0xc78] sm:$0xff]
      %v3122 = vld [vmem:[%s2 + $0xc80] sm:$0xff]
      %v3123 = vld [vmem:[%s2 + $0xc88] sm:$0xff]
      %v3124 = vld [vmem:[%s2 + $0xc90] sm:$0xff]
      %v3125 = vld [vmem:[%s2 + $0xc98] sm:$0xff]
      %v3126 = vld [vmem:[%s2 + $0xca0] sm:$0xff]
      %v3127 = vld [vmem:[%s2 + $0xca8] sm:$0xff]
      %v3128 = vld [vmem:[%s2 + $0xcb0] sm:$0xff]
      %v3129 = vld [vmem:[%s2 + $0xcb8] sm:$0xff]
      %v3130 = vld [vmem:[%s2 + $0xcc0] sm:$0xff]
      %v3131 = vld [vmem:[%s2 + $0xcc8] sm:$0xff]
      %v3132 = vld [vmem:[%s2 + $0xcd0] sm:$0xff]
      %v3133 = vld [vmem:[%s2 + $0xcd8] sm:$0xff]
      %v3134 = vld [vmem:[%s2 + $0xce0] sm:$0xff]
      %v3135 = vld [vmem:[%s2 + $0xce8] sm:$0xff]
      %v3136 = vld [vmem:[%s2 + $0xcf0] sm:$0xff]
      %v3137 = vld [vmem:[%s2 + $0xcf8] sm:$0xff]
      %v3138 = vld [vmem:[%s2 + $0xd00] sm:$0xff]
      %v3139 = vld [vmem:[%s2 + $0xd08] sm:$0xff]
      %v3140 = vld [vmem:[%s2 + $0xd10] sm:$0xff]
      %v3141 = vld [vmem:[%s2 + $0xd18] sm:$0xff]
      %v3142 = vld [vmem:[%s2 + $0xd20] sm:$0xff]
      %v3143 = vld [vmem:[%s2 + $0xd28] sm:$0xff]
      %v3144 = vld [vmem:[%s2 + $0xd30] sm:$0xff]
      %v3145 = vld [vmem:[%s2 + $0xd38] sm:$0xff]
      %v3146 = vld [vmem:[%s2 + $0xd40] sm:$0xff]
      %v3147 = vld [vmem:[%s2 + $0xd48] sm:$0xff]
      %v3148 = vld [vmem:[%s2 + $0xd50] sm:$0xff]
      %v3149 = vld [vmem:[%s2 + $0xd58] sm:$0xff]
      %v3150 = vld [vmem:[%s2 + $0xd60] sm:$0xff]
      %v3151 = vld [vmem:[%s2 + $0xd68] sm:$0xff]
      %v3152 = vld [vmem:[%s2 + $0xd70] sm:$0xff]
      %v3153 = vld [vmem:[%s2 + $0xd78] sm:$0xff]
      %v3154 = vld [vmem:[%s2 + $0xd80] sm:$0xff]
      %v3155 = vld [vmem:[%s2 + $0xd88] sm:$0xff]
      %v3156 = vld [vmem:[%s2 + $0xd90] sm:$0xff]
      %v3157 = vld [vmem:[%s2 + $0xd98] sm:$0xff]
      %v3158 = vld [vmem:[%s2 + $0xda0] sm:$0xff]
      %v3159 = vld [vmem:[%s2 + $0xda8] sm:$0xff]
      %v3160 = vld [vmem:[%s2 + $0xdb0] sm:$0xff]
      %v3161 = vld [vmem:[%s2 + $0xdb8] sm:$0xff]
      %v3162 = vld [vmem:[%s2 + $0xdc0] sm:$0xff]
      %v3163 = vld [vmem:[%s2 + $0xdc8] sm:$0xff]
      %v3164 = vld [vmem:[%s2 + $0xdd0] sm:$0xff]
      %v3165 = vld [vmem:[%s2 + $0xdd8] sm:$0xff]
      %v3166 = vld [vmem:[%s2 + $0xde0] sm:$0xff]
      %v3167 = vld [vmem:[%s2 + $0xde8] sm:$0xff]
      %v3168 = vld [vmem:[%s2 + $0xdf0] sm:$0xff]
      %v3169 = vld [vmem:[%s2 + $0xdf8] sm:$0xff]
      %v3170 = vld [vmem:[%s2 + $0xe00] sm:$0xff]
      %v3171 = vld [vmem:[%s2 + $0xe08] sm:$0xff]
      %v3172 = vld [vmem:[%s2 + $0xe10] sm:$0xff]
      %v3173 = vld [vmem:[%s2 + $0xe18] sm:$0xff]
      %v3174 = vld [vmem:[%s2 + $0xe20] sm:$0xff]
      %v3175 = vld [vmem:[%s2 + $0xe28] sm:$0xff]
      %v3176 = vld [vmem:[%s2 + $0xe30] sm:$0xff]
      %v3177 = vld [vmem:[%s2 + $0xe38] sm:$0xff]
      %v3178 = vld [vmem:[%s2 + $0xe40] sm:$0xff]
      %v3179 = vld [vmem:[%s2 + $0xe48] sm:$0xff]
      %v3180 = vld [vmem:[%s2 + $0xe50] sm:$0xff]
      %v3181 = vld [vmem:[%s2 + $0xe58] sm:$0xff]
      %v3182 = vld [vmem:[%s2 + $0xe60] sm:$0xff]
      %v3183 = vld [vmem:[%s2 + $0xe68] sm:$0xff]
      %v3184 = vld [vmem:[%s2 + $0xe70] sm:$0xff]
      %v3185 = vld [vmem:[%s2 + $0xe78] sm:$0xff]
      %v3186 = vld [vmem:[%s2 + $0xe80] sm:$0xff]
      %v3187 = vld [vmem:[%s2 + $0xe88] sm:$0xff]
      %v3188 = vld [vmem:[%s2 + $0xe90] sm:$0xff]
      %v3189 = vld [vmem:[%s2 + $0xe98] sm:$0xff]
      %v3190 = vld [vmem:[%s2 + $0xea0] sm:$0xff]
      %v3191 = vld [vmem:[%s2 + $0xea8] sm:$0xff]
      %v3192 = vld [vmem:[%s2 + $0xeb0] sm:$0xff]
      %v3193 = vld [vmem:[%s2 + $0xeb8] sm:$0xff]
      %v3194 = vld [vmem:[%s2 + $0xec0] sm:$0xff]
      %v3195 = vld [vmem:[%s2 + $0xec8] sm:$0xff]
      %v3196 = vld [vmem:[%s2 + $0xed0] sm:$0xff]
      %v3197 = vld [vmem:[%s2 + $0xed8] sm:$0xff]
      %v3198 = vld [vmem:[%s2 + $0xee0] sm:$0xff]
      %v3199 = vld [vmem:[%s2 + $0xee8] sm:$0xff]
      %v3200 = vld [vmem:[%s2 + $0xef0] sm:$0xff]
      %v3201 = vld [vmem:[%s2 + $0xef8] sm:$0xff]
      %v3202 = vld [vmem:[%s2 + $0xf00] sm:$0xff]
      %v3203 = vld [vmem:[%s2 + $0xf08] sm:$0xff]
      %v3204 = vld [vmem:[%s2 + $0xf10] sm:$0xff]
      %v3205 = vld [vmem:[%s2 + $0xf18] sm:$0xff]
      %v3206 = vld [vmem:[%s2 + $0xf20] sm:$0xff]
      %v3207 = vld [vmem:[%s2 + $0xf28] sm:$0xff]
      %v3208 = vld [vmem:[%s2 + $0xf30] sm:$0xff]
      %v3209 = vld [vmem:[%s2 + $0xf38] sm:$0xff]
      %v3210 = vld [vmem:[%s2 + $0xf40] sm:$0xff]
      %v3211 = vld [vmem:[%s2 + $0xf48] sm:$0xff]
      %v3212 = vld [vmem:[%s2 + $0xf50] sm:$0xff]
      %v3213 = vld [vmem:[%s2 + $0xf58] sm:$0xff]
      %v3214 = vld [vmem:[%s2 + $0xf60] sm:$0xff]
      %v3215 = vld [vmem:[%s2 + $0xf68] sm:$0xff]
      %v3216 = vld [vmem:[%s2 + $0xf70] sm:$0xff]
      %v3217 = vld [vmem:[%s2 + $0xf78] sm:$0xff]
      %v3218 = vld [vmem:[%s2 + $0xf80] sm:$0xff]
      %v3219 = vld [vmem:[%s2 + $0xf88] sm:$0xff]
      %v3220 = vld [vmem:[%s2 + $0xf90] sm:$0xff]
      %v3221 = vld [vmem:[%s2 + $0xf98] sm:$0xff]
      %v3222 = vld [vmem:[%s2 + $0xfa0] sm:$0xff]
      %v3223 = vld [vmem:[%s2 + $0xfa8] sm:$0xff]
      %v3224 = vld [vmem:[%s2 + $0xfb0] sm:$0xff]
      %v3225 = vld [vmem:[%s2 + $0xfb8] sm:$0xff]
      %v3226 = vld [vmem:[%s2 + $0xfc0] sm:$0xff]
      %v3227 = vld [vmem:[%s2 + $0xfc8] sm:$0xff]
      %v3228 = vld [vmem:[%s2 + $0xfd0] sm:$0xff]
      %v3229 = vld [vmem:[%s2 + $0xfd8] sm:$0xff]
      %v3230 = vld [vmem:[%s2 + $0xfe0] sm:$0xff]
      %v3231 = vld [vmem:[%s2 + $0xfe8] sm:$0xff]
      %v3232 = vld [vmem:[%s2 + $0xff0] sm:$0xff]
      %v3233 = vld [vmem:[%s2 + $0xff8] sm:$0xff]
      %v3234 = vld [vmem:[%s2 + $0x1000] sm:$0xff]
      %v3235 = vld [vmem:[%s2 + $0x1008] sm:$0xff]
      %v3236 = vld [vmem:[%s2 + $0x1010] sm:$0xff]
      %v3237 = vld [vmem:[%s2 + $0x1018] sm:$0xff]
      %v3238 = vld [vmem:[%s2 + $0x1020] sm:$0xff]
      %v3239 = vld [vmem:[%s2 + $0x1028] sm:$0xff]
      %v3240 = vld [vmem:[%s2 + $0x1030] sm:$0xff]
      %v3241 = vld [vmem:[%s2 + $0x1038] sm:$0xff]
      %v3242 = vld [vmem:[%s2 + $0x1040] sm:$0xff]
      %v3243 = vld [vmem:[%s2 + $0x1048] sm:$0xff]
      %v3244 = vld [vmem:[%s2 + $0x1050] sm:$0xff]
      %v3245 = vld [vmem:[%s2 + $0x1058] sm:$0xff]
      %v3246 = vld [vmem:[%s2 + $0x1060] sm:$0xff]
      %v3247 = vld [vmem:[%s2 + $0x1068] sm:$0xff]
      %v3248 = vld [vmem:[%s2 + $0x1070] sm:$0xff]
      %v3249 = vld [vmem:[%s2 + $0x1078] sm:$0xff]
      %v3250 = vld [vmem:[%s2 + $0x1080] sm:$0xff]
      %v3251 = vld [vmem:[%s2 + $0x1088] sm:$0xff]
      %v3252 = vld [vmem:[%s2 + $0x1090] sm:$0xff]
      %v3253 = vld [vmem:[%s2 + $0x1098] sm:$0xff]
      %v3254 = vld [vmem:[%s2 + $0x10a0] sm:$0xff]
      %v3255 = vld [vmem:[%s2 + $0x10a8] sm:$0xff]
      %v3256 = vld [vmem:[%s2 + $0x10b0] sm:$0xff]
      %v3257 = vld [vmem:[%s2 + $0x10b8] sm:$0xff]
      %v3258 = vld [vmem:[%s2 + $0x10c0] sm:$0xff]
      %v3259 = vld [vmem:[%s2 + $0x10c8] sm:$0xff]
      %v3260 = vld [vmem:[%s2 + $0x10d0] sm:$0xff]
      %v3261 = vld [vmem:[%s2 + $0x10d8] sm:$0xff]
      %v3262 = vld [vmem:[%s2 + $0x10e0] sm:$0xff]
      %v3263 = vld [vmem:[%s2 + $0x10e8] sm:$0xff]
      %v3264 = vld [vmem:[%s2 + $0x10f0] sm:$0xff]
      %v3265 = vld [vmem:[%s2 + $0x10f8] sm:$0xff]
      %v3266 = vld [vmem:[%s2 + $0x1100] sm:$0xff]
      %v3267 = vld [vmem:[%s2 + $0x1108] sm:$0xff]
      %v3268 = vld [vmem:[%s2 + $0x1110] sm:$0xff]
      %v3269 = vld [vmem:[%s2 + $0x1118] sm:$0xff]
      %v3270 = vld [vmem:[%s2 + $0x1120] sm:$0xff]
      %v3271 = vld [vmem:[%s2 + $0x1128] sm:$0xff]
      %v3272 = vld [vmem:[%s2 + $0x1130] sm:$0xff]
      %v3273 = vld [vmem:[%s2 + $0x1138] sm:$0xff]
      %v3274 = vld [vmem:[%s2 + $0x1140] sm:$0xff]
      %v3275 = vld [vmem:[%s2 + $0x1148] sm:$0xff]
      %v3276 = vld [vmem:[%s2 + $0x1150] sm:$0xff]
      %v3277 = vld [vmem:[%s2 + $0x1158] sm:$0xff]
      %v3278 = vld [vmem:[%s2 + $0x1160] sm:$0xff]
      %v3279 = vld [vmem:[%s2 + $0x1168] sm:$0xff]
      %v3280 = vld [vmem:[%s2 + $0x1170] sm:$0xff]
      %v3281 = vld [vmem:[%s2 + $0x1178] sm:$0xff]
      %v3282 = vld [vmem:[%s2 + $0x1180] sm:$0xff]
      %v3283 = vld [vmem:[%s2 + $0x1188] sm:$0xff]
      %v3284 = vld [vmem:[%s2 + $0x1190] sm:$0xff]
      %v3285 = vld [vmem:[%s2 + $0x1198] sm:$0xff]
      %v3286 = vld [vmem:[%s2 + $0x11a0] sm:$0xff]
      %v3287 = vld [vmem:[%s2 + $0x11a8] sm:$0xff]
      %v3288 = vld [vmem:[%s2 + $0x11b0] sm:$0xff]
      %v3289 = vld [vmem:[%s2 + $0x11b8] sm:$0xff]
      %v3290 = vld [vmem:[%s2 + $0x11c0] sm:$0xff]
      %v3291 = vld [vmem:[%s2 + $0x11c8] sm:$0xff]
      %v3292 = vld [vmem:[%s2 + $0x11d0] sm:$0xff]
      %v3293 = vld [vmem:[%s2 + $0x11d8] sm:$0xff]
      %v3294 = vld [vmem:[%s2 + $0x11e0] sm:$0xff]
      %v3295 = vld [vmem:[%s2 + $0x11e8] sm:$0xff]
      %v3296 = vld [vmem:[%s2 + $0x11f0] sm:$0xff]
      %v3297 = vld [vmem:[%s2 + $0x11f8] sm:$0xff]
      %v3298 = vld [vmem:[%s2 + $0x1200] sm:$0xff]
      %v3299 = vld [vmem:[%s2 + $0x1208] sm:$0xff]
      %v3300 = vld [vmem:[%s2 + $0x1210] sm:$0xff]
      %v3301 = vld [vmem:[%s2 + $0x1218] sm:$0xff]
      %v3302 = vld [vmem:[%s2 + $0x1220] sm:$0xff]
      %v3303 = vld [vmem:[%s2 + $0x1228] sm:$0xff]
      %v3304 = vld [vmem:[%s2 + $0x1230] sm:$0xff]
      %v3305 = vld [vmem:[%s2 + $0x1238] sm:$0xff]
      %v3306 = vld [vmem:[%s2 + $0x1240] sm:$0xff]
      %v3307 = vld [vmem:[%s2 + $0x1248] sm:$0xff]
      %v3308 = vld [vmem:[%s2 + $0x1250] sm:$0xff]
      %v3309 = vld [vmem:[%s2 + $0x1258] sm:$0xff]
      %v3310 = vld [vmem:[%s2 + $0x1260] sm:$0xff]
      %v3311 = vld [vmem:[%s2 + $0x1268] sm:$0xff]
      %v3312 = vld [vmem:[%s2 + $0x1270] sm:$0xff]
      %v3313 = vld [vmem:[%s2 + $0x1278] sm:$0xff]
      %v3314 = vld [vmem:[%s2 + $0x1280] sm:$0xff]
      %v3315 = vld [vmem:[%s2 + $0x1288] sm:$0xff]
      %v3316 = vld [vmem:[%s2 + $0x1290] sm:$0xff]
      %v3317 = vld [vmem:[%s2 + $0x1298] sm:$0xff]
      %v3318 = vld [vmem:[%s2 + $0x12a0] sm:$0xff]
      %v3319 = vld [vmem:[%s2 + $0x12a8] sm:$0xff]
      %v3320 = vld [vmem:[%s2 + $0x12b0] sm:$0xff]
      %v3321 = vld [vmem:[%s2 + $0x12b8] sm:$0xff]
      %v3322 = vld [vmem:[%s2 + $0x12c0] sm:$0xff]
      %v3323 = vld [vmem:[%s2 + $0x12c8] sm:$0xff]
      %v3324 = vld [vmem:[%s2 + $0x12d0] sm:$0xff]
      %v3325 = vld [vmem:[%s2 + $0x12d8] sm:$0xff]
      %v3326 = vld [vmem:[%s2 + $0x12e0] sm:$0xff]
      %v3327 = vld [vmem:[%s2 + $0x12e8] sm:$0xff]
      %v3328 = vld [vmem:[%s2 + $0x12f0] sm:$0xff]
      %v3329 = vld [vmem:[%s2 + $0x12f8] sm:$0xff]
      %v3330 = vld [vmem:[%s2 + $0x1300] sm:$0xff]
      %v3331 = vld [vmem:[%s2 + $0x1308] sm:$0xff]
      %v3332 = vld [vmem:[%s2 + $0x1310] sm:$0xff]
      %v3333 = vld [vmem:[%s2 + $0x1318] sm:$0xff]
      %v3334 = vld [vmem:[%s2 + $0x1320] sm:$0xff]
      %v3335 = vld [vmem:[%s2 + $0x1328] sm:$0xff]
      %v3336 = vld [vmem:[%s2 + $0x1330] sm:$0xff]
      %v3337 = vld [vmem:[%s2 + $0x1338] sm:$0xff]
      %v3338 = vld [vmem:[%s2 + $0x1340] sm:$0xff]
      %v3339 = vld [vmem:[%s2 + $0x1348] sm:$0xff]
      %v3340 = vld [vmem:[%s2 + $0x1350] sm:$0xff]
      %v3341 = vld [vmem:[%s2 + $0x1358] sm:$0xff]
      %v3342 = vld [vmem:[%s2 + $0x1360] sm:$0xff]
      %v3343 = vld [vmem:[%s2 + $0x1368] sm:$0xff]
      %v3344 = vld [vmem:[%s2 + $0x1370] sm:$0xff]
      %v3345 = vld [vmem:[%s2 + $0x1378] sm:$0xff]
      %v3346 = vld [vmem:[%s2 + $0x1380] sm:$0xff]
      %v3347 = vld [vmem:[%s2 + $0x1388] sm:$0xff]
      %v3348 = vld [vmem:[%s2 + $0x1390] sm:$0xff]
      %v3349 = vld [vmem:[%s2 + $0x1398] sm:$0xff]
      %v3350 = vld [vmem:[%s2 + $0x13a0] sm:$0xff]
      %v3351 = vld [vmem:[%s2 + $0x13a8] sm:$0xff]
      %v3352 = vld [vmem:[%s2 + $0x13b0] sm:$0xff]
      %v3353 = vld [vmem:[%s2 + $0x13b8] sm:$0xff]
      %v3354 = vld [vmem:[%s2 + $0x13c0] sm:$0xff]
      %v3355 = vld [vmem:[%s2 + $0x13c8] sm:$0xff]
      %v3356 = vld [vmem:[%s2 + $0x13d0] sm:$0xff]
      %v3357 = vld [vmem:[%s2 + $0x13d8] sm:$0xff]
      %v3358 = vld [vmem:[%s2 + $0x13e0] sm:$0xff]
      %v3359 = vld [vmem:[%s2 + $0x13e8] sm:$0xff]
      %v3360 = vld [vmem:[%s2 + $0x13f0] sm:$0xff]
      %v3361 = vld [vmem:[%s2 + $0x13f8] sm:$0xff]
      %v3362 = vld [vmem:[%s2 + $0x1400] sm:$0xff]
      %v3363 = vld [vmem:[%s2 + $0x1408] sm:$0xff]
      %v3364 = vld [vmem:[%s2 + $0x1410] sm:$0xff]
      %v3365 = vld [vmem:[%s2 + $0x1418] sm:$0xff]
      %v3366 = vld [vmem:[%s2 + $0x1420] sm:$0xff]
      %v3367 = vld [vmem:[%s2 + $0x1428] sm:$0xff]
      %v3368 = vld [vmem:[%s2 + $0x1430] sm:$0xff]
      %v3369 = vld [vmem:[%s2 + $0x1438] sm:$0xff]
      %v3370 = vld [vmem:[%s2 + $0x1440] sm:$0xff]
      %v3371 = vld [vmem:[%s2 + $0x1448] sm:$0xff]
      %v3372 = vld [vmem:[%s2 + $0x1450] sm:$0xff]
      %v3373 = vld [vmem:[%s2 + $0x1458] sm:$0xff]
      %v3374 = vld [vmem:[%s2 + $0x1460] sm:$0xff]
      %v3375 = vld [vmem:[%s2 + $0x1468] sm:$0xff]
      %v3376 = vld [vmem:[%s2 + $0x1470] sm:$0xff]
      %v3377 = vld [vmem:[%s2 + $0x1478] sm:$0xff]
      %v3378 = vld [vmem:[%s2 + $0x1480] sm:$0xff]
      %v3379 = vld [vmem:[%s2 + $0x1488] sm:$0xff]
      %v3380 = vld [vmem:[%s2 + $0x1490] sm:$0xff]
      %v3381 = vld [vmem:[%s2 + $0x1498] sm:$0xff]
      %v3382 = vld [vmem:[%s2 + $0x14a0] sm:$0xff]
      %v3383 = vld [vmem:[%s2 + $0x14a8] sm:$0xff]
      %v3384 = vld [vmem:[%s2 + $0x14b0] sm:$0xff]
      %v3385 = vld [vmem:[%s2 + $0x14b8] sm:$0xff]
      %v3386 = vld [vmem:[%s2 + $0x14c0] sm:$0xff]
      %v3387 = vld [vmem:[%s2 + $0x14c8] sm:$0xff]
      %v3388 = vld [vmem:[%s2 + $0x14d0] sm:$0xff]
      %v3389 = vld [vmem:[%s2 + $0x14d8] sm:$0xff]
      %v3390 = vld [vmem:[%s2 + $0x14e0] sm:$0xff]
      %v3391 = vld [vmem:[%s2 + $0x14e8] sm:$0xff]
      %v3392 = vld [vmem:[%s2 + $0x14f0] sm:$0xff]
      %v3393 = vld [vmem:[%s2 + $0x14f8] sm:$0xff]
      %v3394 = vld [vmem:[%s2 + $0x1500] sm:$0xff]
      %v3395 = vld [vmem:[%s2 + $0x1508] sm:$0xff]
      %v3396 = vld [vmem:[%s2 + $0x1510] sm:$0xff]
      %v3397 = vld [vmem:[%s2 + $0x1518] sm:$0xff]
      %v3398 = vld [vmem:[%s2 + $0x1520] sm:$0xff]
      %v3399 = vld [vmem:[%s2 + $0x1528] sm:$0xff]
      %v3400 = vld [vmem:[%s2 + $0x1530] sm:$0xff]
      %v3401 = vld [vmem:[%s2 + $0x1538] sm:$0xff]
      %v3402 = vld [vmem:[%s2 + $0x1540] sm:$0xff]
      %v3403 = vld [vmem:[%s2 + $0x1548] sm:$0xff]
      %v3404 = vld [vmem:[%s2 + $0x1550] sm:$0xff]
      %v3405 = vld [vmem:[%s2 + $0x1558] sm:$0xff]
      %v3406 = vld [vmem:[%s2 + $0x1560] sm:$0xff]
      %v3407 = vld [vmem:[%s2 + $0x1568] sm:$0xff]
      %v3408 = vld [vmem:[%s2 + $0x1570] sm:$0xff]
      %v3409 = vld [vmem:[%s2 + $0x1578] sm:$0xff]
      %v3410 = vld [vmem:[%s2 + $0x1580] sm:$0xff]
      %v3411 = vld [vmem:[%s2 + $0x1588] sm:$0xff]
      %v3412 = vld [vmem:[%s2 + $0x1590] sm:$0xff]
      %v3413 = vld [vmem:[%s2 + $0x1598] sm:$0xff]
      %v3414 = vld [vmem:[%s2 + $0x15a0] sm:$0xff]
      %v3415 = vld [vmem:[%s2 + $0x15a8] sm:$0xff]
      %v3416 = vld [vmem:[%s2 + $0x15b0] sm:$0xff]
      %v3417 = vld [vmem:[%s2 + $0x15b8] sm:$0xff]
      %v3418 = vld [vmem:[%s2 + $0x15c0] sm:$0xff]
      %v3419 = vld [vmem:[%s2 + $0x15c8] sm:$0xff]
      %v3420 = vld [vmem:[%s2 + $0x15d0] sm:$0xff]
      %v3421 = vld [vmem:[%s2 + $0x15d8] sm:$0xff]
      %v3422 = vld [vmem:[%s2 + $0x15e0] sm:$0xff]
      %v3423 = vld [vmem:[%s2 + $0x15e8] sm:$0xff]
      %v3424 = vld [vmem:[%s2 + $0x15f0] sm:$0xff]
      %v3425 = vld [vmem:[%s2 + $0x15f8] sm:$0xff]
      %v3426 = vld [vmem:[%s2 + $0x1600] sm:$0xff]
      %v3427 = vld [vmem:[%s2 + $0x1608] sm:$0xff]
      %v3428 = vld [vmem:[%s2 + $0x1610] sm:$0xff]
      %v3429 = vld [vmem:[%s2 + $0x1618] sm:$0xff]
      %v3430 = vld [vmem:[%s2 + $0x1620] sm:$0xff]
      %v3431 = vld [vmem:[%s2 + $0x1628] sm:$0xff]
      %v3432 = vld [vmem:[%s2 + $0x1630] sm:$0xff]
      %v3433 = vld [vmem:[%s2 + $0x1638] sm:$0xff]
      %v3434 = vld [vmem:[%s2 + $0x1640] sm:$0xff]
      %v3435 = vld [vmem:[%s2 + $0x1648] sm:$0xff]
      %v3436 = vld [vmem:[%s2 + $0x1650] sm:$0xff]
      %v3437 = vld [vmem:[%s2 + $0x1658] sm:$0xff]
      %v3438 = vld [vmem:[%s2 + $0x1660] sm:$0xff]
      %v3439 = vld [vmem:[%s2 + $0x1668] sm:$0xff]
      %v3440 = vld [vmem:[%s2 + $0x1670] sm:$0xff]
      %v3441 = vld [vmem:[%s2 + $0x1678] sm:$0xff]
      %v3442 = vld [vmem:[%s2 + $0x1680] sm:$0xff]
      %v3443 = vld [vmem:[%s2 + $0x1688] sm:$0xff]
      %v3444 = vld [vmem:[%s2 + $0x1690] sm:$0xff]
      %v3445 = vld [vmem:[%s2 + $0x1698] sm:$0xff]
      %v3446 = vld [vmem:[%s2 + $0x16a0] sm:$0xff]
      %v3447 = vld [vmem:[%s2 + $0x16a8] sm:$0xff]
      %v3448 = vld [vmem:[%s2 + $0x16b0] sm:$0xff]
      %v3449 = vld [vmem:[%s2 + $0x16b8] sm:$0xff]
      %v3450 = vld [vmem:[%s2 + $0x16c0] sm:$0xff]
      %v3451 = vld [vmem:[%s2 + $0x16c8] sm:$0xff]
      %v3452 = vld [vmem:[%s2 + $0x16d0] sm:$0xff]
      %v3453 = vld [vmem:[%s2 + $0x16d8] sm:$0xff]
      %v3454 = vld [vmem:[%s2 + $0x16e0] sm:$0xff]
      %v3455 = vld [vmem:[%s2 + $0x16e8] sm:$0xff]
      %v3456 = vld [vmem:[%s2 + $0x16f0] sm:$0xff]
      %v3457 = vld [vmem:[%s2 + $0x16f8] sm:$0xff]
      %v3458 = vld [vmem:[%s2 + $0x1700] sm:$0xff]
      %v3459 = vld [vmem:[%s2 + $0x1708] sm:$0xff]
      %v3460 = vld [vmem:[%s2 + $0x1710] sm:$0xff]
      %v3461 = vld [vmem:[%s2 + $0x1718] sm:$0xff]
      %v3462 = vld [vmem:[%s2 + $0x1720] sm:$0xff]
      %v3463 = vld [vmem:[%s2 + $0x1728] sm:$0xff]
      %v3464 = vld [vmem:[%s2 + $0x1730] sm:$0xff]
      %v3465 = vld [vmem:[%s2 + $0x1738] sm:$0xff]
      %v3466 = vld [vmem:[%s2 + $0x1740] sm:$0xff]
      %v3467 = vld [vmem:[%s2 + $0x1748] sm:$0xff]
      %v3468 = vld [vmem:[%s2 + $0x1750] sm:$0xff]
      %v3469 = vld [vmem:[%s2 + $0x1758] sm:$0xff]
      %v3470 = vld [vmem:[%s2 + $0x1760] sm:$0xff]
      %v3471 = vld [vmem:[%s2 + $0x1768] sm:$0xff]
      %v3472 = vld [vmem:[%s2 + $0x1770] sm:$0xff]
      %v3473 = vld [vmem:[%s2 + $0x1778] sm:$0xff]
      %v3474 = vld [vmem:[%s2 + $0x1780] sm:$0xff]
      %v3475 = vld [vmem:[%s2 + $0x1788] sm:$0xff]
      %v3476 = vld [vmem:[%s2 + $0x1790] sm:$0xff]
      %v3477 = vld [vmem:[%s2 + $0x1798] sm:$0xff]
      %v3478 = vld [vmem:[%s2 + $0x17a0] sm:$0xff]
      %v3479 = vld [vmem:[%s2 + $0x17a8] sm:$0xff]
      %v3480 = vld [vmem:[%s2 + $0x17b0] sm:$0xff]
      %v3481 = vld [vmem:[%s2 + $0x17b8] sm:$0xff]
      %v3482 = vld [vmem:[%s2 + $0x17c0] sm:$0xff]
      %v3483 = vld [vmem:[%s2 + $0x17c8] sm:$0xff]
      %v3484 = vld [vmem:[%s2 + $0x17d0] sm:$0xff]
      %v3485 = vld [vmem:[%s2 + $0x17d8] sm:$0xff]
      %v3486 = vld [vmem:[%s2 + $0x17e0] sm:$0xff]
      %v3487 = vld [vmem:[%s2 + $0x17e8] sm:$0xff]
      %v3488 = vld [vmem:[%s2 + $0x17f0] sm:$0xff]
      %v3489 = vld [vmem:[%s2 + $0x17f8] sm:$0xff]
      %v3490 = vld [vmem:[%s2 + $0x1800] sm:$0xff]
      %v3491 = vld [vmem:[%s2 + $0x1808] sm:$0xff]
      %v3492 = vld [vmem:[%s2 + $0x1810] sm:$0xff]
      %v3493 = vld [vmem:[%s2 + $0x1818] sm:$0xff]
      %v3494 = vld [vmem:[%s2 + $0x1820] sm:$0xff]
      %v3495 = vld [vmem:[%s2 + $0x1828] sm:$0xff]
      %v3496 = vld [vmem:[%s2 + $0x1830] sm:$0xff]
      %v3497 = vld [vmem:[%s2 + $0x1838] sm:$0xff]
      %v3498 = vld [vmem:[%s2 + $0x1840] sm:$0xff]
      %v3499 = vld [vmem:[%s2 + $0x1848] sm:$0xff]
      %v3500 = vld [vmem:[%s2 + $0x1850] sm:$0xff]
      %v3501 = vld [vmem:[%s2 + $0x1858] sm:$0xff]
      %v3502 = vld [vmem:[%s2 + $0x1860] sm:$0xff]
      %v3503 = vld [vmem:[%s2 + $0x1868] sm:$0xff]
      %v3504 = vld [vmem:[%s2 + $0x1870] sm:$0xff]
      %v3505 = vld [vmem:[%s2 + $0x1878] sm:$0xff]
      %v3506 = vld [vmem:[%s2 + $0x1880] sm:$0xff]
      %v3507 = vld [vmem:[%s2 + $0x1888] sm:$0xff]
      %v3508 = vld [vmem:[%s2 + $0x1890] sm:$0xff]
      %v3509 = vld [vmem:[%s2 + $0x1898] sm:$0xff]
      %v3510 = vld [vmem:[%s2 + $0x18a0] sm:$0xff]
      %v3511 = vld [vmem:[%s2 + $0x18a8] sm:$0xff]
      %v3512 = vld [vmem:[%s2 + $0x18b0] sm:$0xff]
      %v3513 = vld [vmem:[%s2 + $0x18b8] sm:$0xff]
      %v3514 = vld [vmem:[%s2 + $0x18c0] sm:$0xff]
      %v3515 = vld [vmem:[%s2 + $0x18c8] sm:$0xff]
      %v3516 = vld [vmem:[%s2 + $0x18d0] sm:$0xff]
      %v3517 = vld [vmem:[%s2 + $0x18d8] sm:$0xff]
      %v3518 = vld [vmem:[%s2 + $0x18e0] sm:$0xff]
      %v3519 = vld [vmem:[%s2 + $0x18e8] sm:$0xff]
      %v3520 = vld [vmem:[%s2 + $0x18f0] sm:$0xff]
      %v3521 = vld [vmem:[%s2 + $0x18f8] sm:$0xff]
      %v3522 = vld [vmem:[%s2 + $0x1900] sm:$0xff]
      %v3523 = vld [vmem:[%s2 + $0x1908] sm:$0xff]
      %v3524 = vld [vmem:[%s2 + $0x1910] sm:$0xff]
      %v3525 = vld [vmem:[%s2 + $0x1918] sm:$0xff]
      %v3526 = vld [vmem:[%s2 + $0x1920] sm:$0xff]
      %v3527 = vld [vmem:[%s2 + $0x1928] sm:$0xff]
      %v3528 = vld [vmem:[%s2 + $0x1930] sm:$0xff]
      %v3529 = vld [vmem:[%s2 + $0x1938] sm:$0xff]
      %v3530 = vld [vmem:[%s2 + $0x1940] sm:$0xff]
      %v3531 = vld [vmem:[%s2 + $0x1948] sm:$0xff]
      %v3532 = vld [vmem:[%s2 + $0x1950] sm:$0xff]
      %v3533 = vld [vmem:[%s2 + $0x1958] sm:$0xff]
      %v3534 = vld [vmem:[%s2 + $0x1960] sm:$0xff]
      %v3535 = vld [vmem:[%s2 + $0x1968] sm:$0xff]
      %v3536 = vld [vmem:[%s2 + $0x1970] sm:$0xff]
      %v3537 = vld [vmem:[%s2 + $0x1978] sm:$0xff]
      %v3538 = vld [vmem:[%s2 + $0x1980] sm:$0xff]
      %v3539 = vld [vmem:[%s2 + $0x1988] sm:$0xff]
      %v3540 = vld [vmem:[%s2 + $0x1990] sm:$0xff]
      %v3541 = vld [vmem:[%s2 + $0x1998] sm:$0xff]
      %v3542 = vld [vmem:[%s2 + $0x19a0] sm:$0xff]
      %v3543 = vld [vmem:[%s2 + $0x19a8] sm:$0xff]
      %v3544 = vld [vmem:[%s2 + $0x19b0] sm:$0xff]
      %v3545 = vld [vmem:[%s2 + $0x19b8] sm:$0xff]
      %v3546 = vld [vmem:[%s2 + $0x19c0] sm:$0xff]
      %v3547 = vld [vmem:[%s2 + $0x19c8] sm:$0xff]
      %v3548 = vld [vmem:[%s2 + $0x19d0] sm:$0xff]
      %v3549 = vld [vmem:[%s2 + $0x19d8] sm:$0xff]
      %v3550 = vld [vmem:[%s2 + $0x19e0] sm:$0xff]
      %v3551 = vld [vmem:[%s2 + $0x19e8] sm:$0xff]
      %v3552 = vld [vmem:[%s2 + $0x19f0] sm:$0xff]
      %v3553 = vld [vmem:[%s2 + $0x19f8] sm:$0xff]
      %v3554 = vld [vmem:[%s2 + $0x1a00] sm:$0xff]
      %v3555 = vld [vmem:[%s2 + $0x1a08] sm:$0xff]
      %v3556 = vld [vmem:[%s2 + $0x1a10] sm:$0xff]
      %v3557 = vld [vmem:[%s2 + $0x1a18] sm:$0xff]
      %v3558 = vld [vmem:[%s2 + $0x1a20] sm:$0xff]
      %v3559 = vld [vmem:[%s2 + $0x1a28] sm:$0xff]
      %v3560 = vld [vmem:[%s2 + $0x1a30] sm:$0xff]
      %v3561 = vld [vmem:[%s2 + $0x1a38] sm:$0xff]
      %v3562 = vld [vmem:[%s2 + $0x1a40] sm:$0xff]
      %v3563 = vld [vmem:[%s2 + $0x1a48] sm:$0xff]
      %v3564 = vld [vmem:[%s2 + $0x1a50] sm:$0xff]
      %v3565 = vld [vmem:[%s2 + $0x1a58] sm:$0xff]
      %v3566 = vld [vmem:[%s2 + $0x1a60] sm:$0xff]
      %v3567 = vld [vmem:[%s2 + $0x1a68] sm:$0xff]
      %v3568 = vld [vmem:[%s2 + $0x1a70] sm:$0xff]
      %v3569 = vld [vmem:[%s2 + $0x1a78] sm:$0xff]
      %v3570 = vld [vmem:[%s2 + $0x1a80] sm:$0xff]
      %v3571 = vld [vmem:[%s2 + $0x1a88] sm:$0xff]
      %v3572 = vld [vmem:[%s2 + $0x1a90] sm:$0xff]
      %v3573 = vld [vmem:[%s2 + $0x1a98] sm:$0xff]
      %v3574 = vld [vmem:[%s2 + $0x1aa0] sm:$0xff]
      %v3575 = vld [vmem:[%s2 + $0x1aa8] sm:$0xff]
      %v3576 = vld [vmem:[%s2 + $0x1ab0] sm:$0xff]
      %v3577 = vld [vmem:[%s2 + $0x1ab8] sm:$0xff]
      %v3578 = vld [vmem:[%s2 + $0x1ac0] sm:$0xff]
      %v3579 = vld [vmem:[%s2 + $0x1ac8] sm:$0xff]
      %v3580 = vld [vmem:[%s2 + $0x1ad0] sm:$0xff]
      %v3581 = vld [vmem:[%s2 + $0x1ad8] sm:$0xff]
      %v3582 = vld [vmem:[%s2 + $0x1ae0] sm:$0xff]
      %v3583 = vld [vmem:[%s2 + $0x1ae8] sm:$0xff]
      %v3584 = vld [vmem:[%s2 + $0x1af0] sm:$0xff]
      %v3585 = vld [vmem:[%s2 + $0x1af8] sm:$0xff]
      %v3586 = vld [vmem:[%s2 + $0x1b00] sm:$0xff]
      %v3587 = vld [vmem:[%s2 + $0x1b08] sm:$0xff]
      %v3588 = vld [vmem:[%s2 + $0x1b10] sm:$0xff]
      %v3589 = vld [vmem:[%s2 + $0x1b18] sm:$0xff]
      %v3590 = vld [vmem:[%s2 + $0x1b20] sm:$0xff]
      %v3591 = vld [vmem:[%s2 + $0x1b28] sm:$0xff]
      %v3592 = vld [vmem:[%s2 + $0x1b30] sm:$0xff]
      %v3593 = vld [vmem:[%s2 + $0x1b38] sm:$0xff]
      %v3594 = vld [vmem:[%s2 + $0x1b40] sm:$0xff]
      %v3595 = vld [vmem:[%s2 + $0x1b48] sm:$0xff]
      %v3596 = vld [vmem:[%s2 + $0x1b50] sm:$0xff]
      %v3597 = vld [vmem:[%s2 + $0x1b58] sm:$0xff]
      %v3598 = vld [vmem:[%s2 + $0x1b60] sm:$0xff]
      %v3599 = vld [vmem:[%s2 + $0x1b68] sm:$0xff]
      %v3600 = vld [vmem:[%s2 + $0x1b70] sm:$0xff]
      %v3601 = vld [vmem:[%s2 + $0x1b78] sm:$0xff]
      %v3602 = vld [vmem:[%s2 + $0x1b80] sm:$0xff]
      %v3603 = vld [vmem:[%s2 + $0x1b88] sm:$0xff]
      %v3604 = vld [vmem:[%s2 + $0x1b90] sm:$0xff]
      %v3605 = vld [vmem:[%s2 + $0x1b98] sm:$0xff]
      %v3606 = vld [vmem:[%s2 + $0x1ba0] sm:$0xff]
      %v3607 = vld [vmem:[%s2 + $0x1ba8] sm:$0xff]
      %v3608 = vld [vmem:[%s2 + $0x1bb0] sm:$0xff]
      %v3609 = vld [vmem:[%s2 + $0x1bb8] sm:$0xff]
      %v3610 = vld [vmem:[%s2 + $0x1bc0] sm:$0xff]
      %v3611 = vld [vmem:[%s2 + $0x1bc8] sm:$0xff]
      %v3612 = vld [vmem:[%s2 + $0x1bd0] sm:$0xff]
      %v3613 = vld [vmem:[%s2 + $0x1bd8] sm:$0xff]
      %v3614 = vld [vmem:[%s2 + $0x1be0] sm:$0xff]
      %v3615 = vld [vmem:[%s2 + $0x1be8] sm:$0xff]
      %v3616 = vld [vmem:[%s2 + $0x1bf0] sm:$0xff]
      %v3617 = vld [vmem:[%s2 + $0x1bf8] sm:$0xff]
      %3618 = vmatpush.msra.mxu0 %v2827
      %3619 = vmatpush.msra.mxu0 %v2820
      %3620 = vmatpush.msra.mxu0 %v2813
      %3621 = vmatpush.msra.mxu0 %v2806
      %3622 = vmatpush.msra.mxu0 %v2799
      %3623 = vmatpush.msra.mxu0 %v2792
      %3624 = vmatpush.msra.mxu0 %v2785
      %3625 = vmatpush.msra.mxu0 %v2778
      %3626 = vmatpush.msra.mxu0 %v2771
      %3627 = vmatpush.msra.mxu0 %v2764
      %3628 = vmatpush.msra.mxu0 %v2757
      %3629 = vmatpush.msra.mxu0 %v2750
      %3630 = vmatpush.msra.mxu0 %v2743
      %3631 = vmatpush.msra.mxu0 %v2736
      %3632 = vmatpush.msra.mxu0 %v2729
      %3633 = vmatpush.msra.mxu0 %v2722
      %3634 = vmatmul.f32.gmra.mxu0 %v1466
      %v3635 = vpop.f32.mrf.mxu0
      %v3636 = vadd.f32 0.0, %v3635
      %3637 = vmatmul.f32.gmra.mxu0 %v1470
      %v3638 = vpop.f32.mrf.mxu0
      %v3639 = vadd.f32 0.0, %v3638
      %3640 = vdwg.mxu0
      %3641 = vmatpush.msra.mxu0 %v2939
      %3642 = vmatpush.msra.mxu0 %v2932
      %3643 = vmatpush.msra.mxu0 %v2925
      %3644 = vmatpush.msra.mxu0 %v2918
      %3645 = vmatpush.msra.mxu0 %v2911
      %3646 = vmatpush.msra.mxu0 %v2904
      %3647 = vmatpush.msra.mxu0 %v2897
      %3648 = vmatpush.msra.mxu0 %v2890
      %3649 = vmatpush.msra.mxu0 %v2883
      %3650 = vmatpush.msra.mxu0 %v2876
      %3651 = vmatpush.msra.mxu0 %v2869
      %3652 = vmatpush.msra.mxu0 %v2862
      %3653 = vmatpush.msra.mxu0 %v2855
      %3654 = vmatpush.msra.mxu0 %v2848
      %3655 = vmatpush.msra.mxu0 %v2841
      %3656 = vmatpush.msra.mxu0 %v2834
      %3657 = vmatmul.f32.gmra.mxu0 %v1467
      %v3658 = vpop.f32.mrf.mxu0
      %v3659 = vadd.f32 %v3636, %v3658
      %3660 = vmatmul.f32.gmra.mxu0 %v1471
      %v3661 = vpop.f32.mrf.mxu0
      %v3662 = vadd.f32 %v3639, %v3661
      %3663 = vdwg.mxu0
      %3664 = vmatpush.msra.mxu0 %v3051
      %3665 = vmatpush.msra.mxu0 %v3044
      %3666 = vmatpush.msra.mxu0 %v3037
      %3667 = vmatpush.msra.mxu0 %v3030
      %3668 = vmatpush.msra.mxu0 %v3023
      %3669 = vmatpush.msra.mxu0 %v3016
      %3670 = vmatpush.msra.mxu0 %v3009
      %3671 = vmatpush.msra.mxu0 %v3002
      %3672 = vmatpush.msra.mxu0 %v2995
      %3673 = vmatpush.msra.mxu0 %v2988
      %3674 = vmatpush.msra.mxu0 %v2981
      %3675 = vmatpush.msra.mxu0 %v2974
      %3676 = vmatpush.msra.mxu0 %v2967
      %3677 = vmatpush.msra.mxu0 %v2960
      %3678 = vmatpush.msra.mxu0 %v2953
      %3679 = vmatpush.msra.mxu0 %v2946
      %3680 = vmatmul.f32.gmra.mxu0 %v1468
      %v3681 = vpop.f32.mrf.mxu0
      %v3682 = vadd.f32 %v3659, %v3681
      %3683 = vmatmul.f32.gmra.mxu0 %v1472
      %v3684 = vpop.f32.mrf.mxu0
      %v3685 = vadd.f32 %v3662, %v3684
      %3686 = vdwg.mxu0
      %3687 = vmatpush.msra.mxu0 %v3163
      %3688 = vmatpush.msra.mxu0 %v3156
      %3689 = vmatpush.msra.mxu0 %v3149
      %3690 = vmatpush.msra.mxu0 %v3142
      %3691 = vmatpush.msra.mxu0 %v3135
      %3692 = vmatpush.msra.mxu0 %v3128
      %3693 = vmatpush.msra.mxu0 %v3121
      %3694 = vmatpush.msra.mxu0 %v3114
      %3695 = vmatpush.msra.mxu0 %v3107
      %3696 = vmatpush.msra.mxu0 %v3100
      %3697 = vmatpush.msra.mxu0 %v3093
      %3698 = vmatpush.msra.mxu0 %v3086
      %3699 = vmatpush.msra.mxu0 %v3079
      %3700 = vmatpush.msra.mxu0 %v3072
      %3701 = vmatpush.msra.mxu0 %v3065
      %3702 = vmatpush.msra.mxu0 %v3058
      %3703 = vmatmul.f32.gmra.mxu0 %v1469
      %v3704 = vpop.f32.mrf.mxu0
      %v3705 = vadd.f32 %v3682, %v3704
      %3706 = vmatmul.f32.gmra.mxu0 %v1473
      %v3707 = vpop.f32.mrf.mxu0
      %v3708 = vadd.f32 %v3685, %v3707
      %3709 = vdwg.mxu0
      %3710 = vmatpush.msra.mxu0 %v3275
      %3711 = vmatpush.msra.mxu0 %v3268
      %3712 = vmatpush.msra.mxu0 %v3261
      %3713 = vmatpush.msra.mxu0 %v3254
      %3714 = vmatpush.msra.mxu0 %v3247
      %3715 = vmatpush.msra.mxu0 %v3240
      %3716 = vmatpush.msra.mxu0 %v3233
      %3717 = vmatpush.msra.mxu0 %v3226
      %3718 = vmatpush.msra.mxu0 %v3219
      %3719 = vmatpush.msra.mxu0 %v3212
      %3720 = vmatpush.msra.mxu0 %v3205
      %3721 = vmatpush.msra.mxu0 %v3198
      %3722 = vmatpush.msra.mxu0 %v3191
      %3723 = vmatpush.msra.mxu0 %v3184
      %3724 = vmatpush.msra.mxu0 %v3177
      %3725 = vmatpush.msra.mxu0 %v3170
      %3726 = vmatmul.f32.gmra.mxu0 %v2714
      %v3727 = vpop.f32.mrf.mxu0
      %v3728 = vadd.f32 %v3705, %v3727
      %3729 = vmatmul.f32.gmra.mxu0 %v2718
      %v3730 = vpop.f32.mrf.mxu0
      %v3731 = vadd.f32 %v3708, %v3730
      %3732 = vdwg.mxu0
      %3733 = vmatpush.msra.mxu0 %v3387
      %3734 = vmatpush.msra.mxu0 %v3380
      %3735 = vmatpush.msra.mxu0 %v3373
      %3736 = vmatpush.msra.mxu0 %v3366
      %3737 = vmatpush.msra.mxu0 %v3359
      %3738 = vmatpush.msra.mxu0 %v3352
      %3739 = vmatpush.msra.mxu0 %v3345
      %3740 = vmatpush.msra.mxu0 %v3338
      %3741 = vmatpush.msra.mxu0 %v3331
      %3742 = vmatpush.msra.mxu0 %v3324
      %3743 = vmatpush.msra.mxu0 %v3317
      %3744 = vmatpush.msra.mxu0 %v3310
      %3745 = vmatpush.msra.mxu0 %v3303
      %3746 = vmatpush.msra.mxu0 %v3296
      %3747 = vmatpush.msra.mxu0 %v3289
      %3748 = vmatpush.msra.mxu0 %v3282
      %3749 = vmatmul.f32.gmra.mxu0 %v2715
      %v3750 = vpop.f32.mrf.mxu0
      %v3751 = vadd.f32 %v3728, %v3750
      %3752 = vmatmul.f32.gmra.mxu0 %v2719
      %v3753 = vpop.f32.mrf.mxu0
      %v3754 = vadd.f32 %v3731, %v3753
      %3755 = vdwg.mxu0
      %3756 = vmatpush.msra.mxu0 %v3499
      %3757 = vmatpush.msra.mxu0 %v3492
      %3758 = vmatpush.msra.mxu0 %v3485
      %3759 = vmatpush.msra.mxu0 %v3478
      %3760 = vmatpush.msra.mxu0 %v3471
      %3761 = vmatpush.msra.mxu0 %v3464
      %3762 = vmatpush.msra.mxu0 %v3457
      %3763 = vmatpush.msra.mxu0 %v3450
      %3764 = vmatpush.msra.mxu0 %v3443
      %3765 = vmatpush.msra.mxu0 %v3436
      %3766 = vmatpush.msra.mxu0 %v3429
      %3767 = vmatpush.msra.mxu0 %v3422
      %3768 = vmatpush.msra.mxu0 %v3415
      %3769 = vmatpush.msra.mxu0 %v3408
      %3770 = vmatpush.msra.mxu0 %v3401
      %3771 = vmatpush.msra.mxu0 %v3394
      %3772 = vmatmul.f32.gmra.mxu0 %v2716
      %v3773 = vpop.f32.mrf.mxu0
      %v3774 = vadd.f32 %v3751, %v3773
      %3775 = vmatmul.f32.gmra.mxu0 %v2720
      %v3776 = vpop.f32.mrf.mxu0
      %v3777 = vadd.f32 %v3754, %v3776
      %3778 = vdwg.mxu0
      %3779 = vmatpush.msra.mxu0 %v3611
      %3780 = vmatpush.msra.mxu0 %v3604
      %3781 = vmatpush.msra.mxu0 %v3597
      %3782 = vmatpush.msra.mxu0 %v3590
      %3783 = vmatpush.msra.mxu0 %v3583
      %3784 = vmatpush.msra.mxu0 %v3576
      %3785 = vmatpush.msra.mxu0 %v3569
      %3786 = vmatpush.msra.mxu0 %v3562
      %3787 = vmatpush.msra.mxu0 %v3555
      %3788 = vmatpush.msra.mxu0 %v3548
      %3789 = vmatpush.msra.mxu0 %v3541
      %3790 = vmatpush.msra.mxu0 %v3534
      %3791 = vmatpush.msra.mxu0 %v3527
      %3792 = vmatpush.msra.mxu0 %v3520
      %3793 = vmatpush.msra.mxu0 %v3513
      %3794 = vmatpush.msra.mxu0 %v3506
      %3795 = vmatmul.f32.gmra.mxu0 %v2717
      %v3796 = vpop.f32.mrf.mxu0
      %v3797 = vadd.f32 %v3774, %v3796
      %3798 = vmatmul.f32.gmra.mxu0 %v2721
      %v3799 = vpop.f32.mrf.mxu0
      %v3800 = vadd.f32 %v3777, %v3799
      %3801 = vdwg.mxu0
      %3802 = vmatpush.msra.mxu0 %v2828
      %3803 = vmatpush.msra.mxu0 %v2821
      %3804 = vmatpush.msra.mxu0 %v2814
      %3805 = vmatpush.msra.mxu0 %v2807
      %3806 = vmatpush.msra.mxu0 %v2800
      %3807 = vmatpush.msra.mxu0 %v2793
      %3808 = vmatpush.msra.mxu0 %v2786
      %3809 = vmatpush.msra.mxu0 %v2779
      %3810 = vmatpush.msra.mxu0 %v2772
      %3811 = vmatpush.msra.mxu0 %v2765
      %3812 = vmatpush.msra.mxu0 %v2758
      %3813 = vmatpush.msra.mxu0 %v2751
      %3814 = vmatpush.msra.mxu0 %v2744
      %3815 = vmatpush.msra.mxu0 %v2737
      %3816 = vmatpush.msra.mxu0 %v2730
      %3817 = vmatpush.msra.mxu0 %v2723
      %3818 = vmatmul.f32.gmra.mxu0 %v1466
      %v3819 = vpop.f32.mrf.mxu0
      %v3820 = vadd.f32 0.0, %v3819
      %3821 = vmatmul.f32.gmra.mxu0 %v1470
      %v3822 = vpop.f32.mrf.mxu0
      %v3823 = vadd.f32 0.0, %v3822
      %3824 = vdwg.mxu0
      %3825 = vmatpush.msra.mxu0 %v2940
      %3826 = vmatpush.msra.mxu0 %v2933
      %3827 = vmatpush.msra.mxu0 %v2926
      %3828 = vmatpush.msra.mxu0 %v2919
      %3829 = vmatpush.msra.mxu0 %v2912
      %3830 = vmatpush.msra.mxu0 %v2905
      %3831 = vmatpush.msra.mxu0 %v2898
      %3832 = vmatpush.msra.mxu0 %v2891
      %3833 = vmatpush.msra.mxu0 %v2884
      %3834 = vmatpush.msra.mxu0 %v2877
      %3835 = vmatpush.msra.mxu0 %v2870
      %3836 = vmatpush.msra.mxu0 %v2863
      %3837 = vmatpush.msra.mxu0 %v2856
      %3838 = vmatpush.msra.mxu0 %v2849
      %3839 = vmatpush.msra.mxu0 %v2842
      %3840 = vmatpush.msra.mxu0 %v2835
      %3841 = vmatmul.f32.gmra.mxu0 %v1467
      %v3842 = vpop.f32.mrf.mxu0
      %v3843 = vadd.f32 %v3820, %v3842
      %3844 = vmatmul.f32.gmra.mxu0 %v1471
      %v3845 = vpop.f32.mrf.mxu0
      %v3846 = vadd.f32 %v3823, %v3845
      %3847 = vdwg.mxu0
      %3848 = vmatpush.msra.mxu0 %v3052
      %3849 = vmatpush.msra.mxu0 %v3045
      %3850 = vmatpush.msra.mxu0 %v3038
      %3851 = vmatpush.msra.mxu0 %v3031
      %3852 = vmatpush.msra.mxu0 %v3024
      %3853 = vmatpush.msra.mxu0 %v3017
      %3854 = vmatpush.msra.mxu0 %v3010
      %3855 = vmatpush.msra.mxu0 %v3003
      %3856 = vmatpush.msra.mxu0 %v2996
      %3857 = vmatpush.msra.mxu0 %v2989
      %3858 = vmatpush.msra.mxu0 %v2982
      %3859 = vmatpush.msra.mxu0 %v2975
      %3860 = vmatpush.msra.mxu0 %v2968
      %3861 = vmatpush.msra.mxu0 %v2961
      %3862 = vmatpush.msra.mxu0 %v2954
      %3863 = vmatpush.msra.mxu0 %v2947
      %3864 = vmatmul.f32.gmra.mxu0 %v1468
      %v3865 = vpop.f32.mrf.mxu0
      %v3866 = vadd.f32 %v3843, %v3865
      %3867 = vmatmul.f32.gmra.mxu0 %v1472
      %v3868 = vpop.f32.mrf.mxu0
      %v3869 = vadd.f32 %v3846, %v3868
      %3870 = vdwg.mxu0
      %3871 = vmatpush.msra.mxu0 %v3164
      %3872 = vmatpush.msra.mxu0 %v3157
      %3873 = vmatpush.msra.mxu0 %v3150
      %3874 = vmatpush.msra.mxu0 %v3143
      %3875 = vmatpush.msra.mxu0 %v3136
      %3876 = vmatpush.msra.mxu0 %v3129
      %3877 = vmatpush.msra.mxu0 %v3122
      %3878 = vmatpush.msra.mxu0 %v3115
      %3879 = vmatpush.msra.mxu0 %v3108
      %3880 = vmatpush.msra.mxu0 %v3101
      %3881 = vmatpush.msra.mxu0 %v3094
      %3882 = vmatpush.msra.mxu0 %v3087
      %3883 = vmatpush.msra.mxu0 %v3080
      %3884 = vmatpush.msra.mxu0 %v3073
      %3885 = vmatpush.msra.mxu0 %v3066
      %3886 = vmatpush.msra.mxu0 %v3059
      %3887 = vmatmul.f32.gmra.mxu0 %v1469
      %v3888 = vpop.f32.mrf.mxu0
      %v3889 = vadd.f32 %v3866, %v3888
      %3890 = vmatmul.f32.gmra.mxu0 %v1473
      %v3891 = vpop.f32.mrf.mxu0
      %v3892 = vadd.f32 %v3869, %v3891
      %3893 = vdwg.mxu0
      %3894 = vmatpush.msra.mxu0 %v3276
      %3895 = vmatpush.msra.mxu0 %v3269
      %3896 = vmatpush.msra.mxu0 %v3262
      %3897 = vmatpush.msra.mxu0 %v3255
      %3898 = vmatpush.msra.mxu0 %v3248
      %3899 = vmatpush.msra.mxu0 %v3241
      %3900 = vmatpush.msra.mxu0 %v3234
      %3901 = vmatpush.msra.mxu0 %v3227
      %3902 = vmatpush.msra.mxu0 %v3220
      %3903 = vmatpush.msra.mxu0 %v3213
      %3904 = vmatpush.msra.mxu0 %v3206
      %3905 = vmatpush.msra.mxu0 %v3199
      %3906 = vmatpush.msra.mxu0 %v3192
      %3907 = vmatpush.msra.mxu0 %v3185
      %3908 = vmatpush.msra.mxu0 %v3178
      %3909 = vmatpush.msra.mxu0 %v3171
      %3910 = vmatmul.f32.gmra.mxu0 %v2714
      %v3911 = vpop.f32.mrf.mxu0
      %v3912 = vadd.f32 %v3889, %v3911
      %3913 = vmatmul.f32.gmra.mxu0 %v2718
      %v3914 = vpop.f32.mrf.mxu0
      %v3915 = vadd.f32 %v3892, %v3914
      %3916 = vdwg.mxu0
      %3917 = vmatpush.msra.mxu0 %v3388
      %3918 = vmatpush.msra.mxu0 %v3381
      %3919 = vmatpush.msra.mxu0 %v3374
      %3920 = vmatpush.msra.mxu0 %v3367
      %3921 = vmatpush.msra.mxu0 %v3360
      %3922 = vmatpush.msra.mxu0 %v3353
      %3923 = vmatpush.msra.mxu0 %v3346
      %3924 = vmatpush.msra.mxu0 %v3339
      %3925 = vmatpush.msra.mxu0 %v3332
      %3926 = vmatpush.msra.mxu0 %v3325
      %3927 = vmatpush.msra.mxu0 %v3318
      %3928 = vmatpush.msra.mxu0 %v3311
      %3929 = vmatpush.msra.mxu0 %v3304
      %3930 = vmatpush.msra.mxu0 %v3297
      %3931 = vmatpush.msra.mxu0 %v3290
      %3932 = vmatpush.msra.mxu0 %v3283
      %3933 = vmatmul.f32.gmra.mxu0 %v2715
      %v3934 = vpop.f32.mrf.mxu0
      %v3935 = vadd.f32 %v3912, %v3934
      %3936 = vmatmul.f32.gmra.mxu0 %v2719
      %v3937 = vpop.f32.mrf.mxu0
      %v3938 = vadd.f32 %v3915, %v3937
      %3939 = vdwg.mxu0
      %3940 = vmatpush.msra.mxu0 %v3500
      %3941 = vmatpush.msra.mxu0 %v3493
      %3942 = vmatpush.msra.mxu0 %v3486
      %3943 = vmatpush.msra.mxu0 %v3479
      %3944 = vmatpush.msra.mxu0 %v3472
      %3945 = vmatpush.msra.mxu0 %v3465
      %3946 = vmatpush.msra.mxu0 %v3458
      %3947 = vmatpush.msra.mxu0 %v3451
      %3948 = vmatpush.msra.mxu0 %v3444
      %3949 = vmatpush.msra.mxu0 %v3437
      %3950 = vmatpush.msra.mxu0 %v3430
      %3951 = vmatpush.msra.mxu0 %v3423
      %3952 = vmatpush.msra.mxu0 %v3416
      %3953 = vmatpush.msra.mxu0 %v3409
      %3954 = vmatpush.msra.mxu0 %v3402
      %3955 = vmatpush.msra.mxu0 %v3395
      %3956 = vmatmul.f32.gmra.mxu0 %v2716
      %v3957 = vpop.f32.mrf.mxu0
      %v3958 = vadd.f32 %v3935, %v3957
      %3959 = vmatmul.f32.gmra.mxu0 %v2720
      %v3960 = vpop.f32.mrf.mxu0
      %v3961 = vadd.f32 %v3938, %v3960
      %3962 = vdwg.mxu0
      %3963 = vmatpush.msra.mxu0 %v3612
      %3964 = vmatpush.msra.mxu0 %v3605
      %3965 = vmatpush.msra.mxu0 %v3598
      %3966 = vmatpush.msra.mxu0 %v3591
      %3967 = vmatpush.msra.mxu0 %v3584
      %3968 = vmatpush.msra.mxu0 %v3577
      %3969 = vmatpush.msra.mxu0 %v3570
      %3970 = vmatpush.msra.mxu0 %v3563
      %3971 = vmatpush.msra.mxu0 %v3556
      %3972 = vmatpush.msra.mxu0 %v3549
      %3973 = vmatpush.msra.mxu0 %v3542
      %3974 = vmatpush.msra.mxu0 %v3535
      %3975 = vmatpush.msra.mxu0 %v3528
      %3976 = vmatpush.msra.mxu0 %v3521
      %3977 = vmatpush.msra.mxu0 %v3514
      %3978 = vmatpush.msra.mxu0 %v3507
      %3979 = vmatmul.f32.gmra.mxu0 %v2717
      %v3980 = vpop.f32.mrf.mxu0
      %v3981 = vadd.f32 %v3958, %v3980
      %3982 = vmatmul.f32.gmra.mxu0 %v2721
      %v3983 = vpop.f32.mrf.mxu0
      %v3984 = vadd.f32 %v3961, %v3983
      %3985 = vdwg.mxu0
      %3986 = vmatpush.msra.mxu0 %v2829
      %3987 = vmatpush.msra.mxu0 %v2822
      %3988 = vmatpush.msra.mxu0 %v2815
      %3989 = vmatpush.msra.mxu0 %v2808
      %3990 = vmatpush.msra.mxu0 %v2801
      %3991 = vmatpush.msra.mxu0 %v2794
      %3992 = vmatpush.msra.mxu0 %v2787
      %3993 = vmatpush.msra.mxu0 %v2780
      %3994 = vmatpush.msra.mxu0 %v2773
      %3995 = vmatpush.msra.mxu0 %v2766
      %3996 = vmatpush.msra.mxu0 %v2759
      %3997 = vmatpush.msra.mxu0 %v2752
      %3998 = vmatpush.msra.mxu0 %v2745
      %3999 = vmatpush.msra.mxu0 %v2738
      %4000 = vmatpush.msra.mxu0 %v2731
      %4001 = vmatpush.msra.mxu0 %v2724
      %4002 = vmatmul.f32.gmra.mxu0 %v1466
      %v4003 = vpop.f32.mrf.mxu0
      %v4004 = vadd.f32 0.0, %v4003
      %4005 = vmatmul.f32.gmra.mxu0 %v1470
      %v4006 = vpop.f32.mrf.mxu0
      %v4007 = vadd.f32 0.0, %v4006
      %4008 = vdwg.mxu0
      %4009 = vmatpush.msra.mxu0 %v2941
      %4010 = vmatpush.msra.mxu0 %v2934
      %4011 = vmatpush.msra.mxu0 %v2927
      %4012 = vmatpush.msra.mxu0 %v2920
      %4013 = vmatpush.msra.mxu0 %v2913
      %4014 = vmatpush.msra.mxu0 %v2906
      %4015 = vmatpush.msra.mxu0 %v2899
      %4016 = vmatpush.msra.mxu0 %v2892
      %4017 = vmatpush.msra.mxu0 %v2885
      %4018 = vmatpush.msra.mxu0 %v2878
      %4019 = vmatpush.msra.mxu0 %v2871
      %4020 = vmatpush.msra.mxu0 %v2864
      %4021 = vmatpush.msra.mxu0 %v2857
      %4022 = vmatpush.msra.mxu0 %v2850
      %4023 = vmatpush.msra.mxu0 %v2843
      %4024 = vmatpush.msra.mxu0 %v2836
      %4025 = vmatmul.f32.gmra.mxu0 %v1467
      %v4026 = vpop.f32.mrf.mxu0
      %v4027 = vadd.f32 %v4004, %v4026
      %4028 = vmatmul.f32.gmra.mxu0 %v1471
      %v4029 = vpop.f32.mrf.mxu0
      %v4030 = vadd.f32 %v4007, %v4029
      %4031 = vdwg.mxu0
      %4032 = vmatpush.msra.mxu0 %v3053
      %4033 = vmatpush.msra.mxu0 %v3046
      %4034 = vmatpush.msra.mxu0 %v3039
      %4035 = vmatpush.msra.mxu0 %v3032
      %4036 = vmatpush.msra.mxu0 %v3025
      %4037 = vmatpush.msra.mxu0 %v3018
      %4038 = vmatpush.msra.mxu0 %v3011
      %4039 = vmatpush.msra.mxu0 %v3004
      %4040 = vmatpush.msra.mxu0 %v2997
      %4041 = vmatpush.msra.mxu0 %v2990
      %4042 = vmatpush.msra.mxu0 %v2983
      %4043 = vmatpush.msra.mxu0 %v2976
      %4044 = vmatpush.msra.mxu0 %v2969
      %4045 = vmatpush.msra.mxu0 %v2962
      %4046 = vmatpush.msra.mxu0 %v2955
      %4047 = vmatpush.msra.mxu0 %v2948
      %4048 = vmatmul.f32.gmra.mxu0 %v1468
      %v4049 = vpop.f32.mrf.mxu0
      %v4050 = vadd.f32 %v4027, %v4049
      %4051 = vmatmul.f32.gmra.mxu0 %v1472
      %v4052 = vpop.f32.mrf.mxu0
      %v4053 = vadd.f32 %v4030, %v4052
      %4054 = vdwg.mxu0
      %4055 = vmatpush.msra.mxu0 %v3165
      %4056 = vmatpush.msra.mxu0 %v3158
      %4057 = vmatpush.msra.mxu0 %v3151
      %4058 = vmatpush.msra.mxu0 %v3144
      %4059 = vmatpush.msra.mxu0 %v3137
      %4060 = vmatpush.msra.mxu0 %v3130
      %4061 = vmatpush.msra.mxu0 %v3123
      %4062 = vmatpush.msra.mxu0 %v3116
      %4063 = vmatpush.msra.mxu0 %v3109
      %4064 = vmatpush.msra.mxu0 %v3102
      %4065 = vmatpush.msra.mxu0 %v3095
      %4066 = vmatpush.msra.mxu0 %v3088
      %4067 = vmatpush.msra.mxu0 %v3081
      %4068 = vmatpush.msra.mxu0 %v3074
      %4069 = vmatpush.msra.mxu0 %v3067
      %4070 = vmatpush.msra.mxu0 %v3060
      %4071 = vmatmul.f32.gmra.mxu0 %v1469
      %v4072 = vpop.f32.mrf.mxu0
      %v4073 = vadd.f32 %v4050, %v4072
      %4074 = vmatmul.f32.gmra.mxu0 %v1473
      %v4075 = vpop.f32.mrf.mxu0
      %v4076 = vadd.f32 %v4053, %v4075
      %4077 = vdwg.mxu0
      %4078 = vmatpush.msra.mxu0 %v3277
      %4079 = vmatpush.msra.mxu0 %v3270
      %4080 = vmatpush.msra.mxu0 %v3263
      %4081 = vmatpush.msra.mxu0 %v3256
      %4082 = vmatpush.msra.mxu0 %v3249
      %4083 = vmatpush.msra.mxu0 %v3242
      %4084 = vmatpush.msra.mxu0 %v3235
      %4085 = vmatpush.msra.mxu0 %v3228
      %4086 = vmatpush.msra.mxu0 %v3221
      %4087 = vmatpush.msra.mxu0 %v3214
      %4088 = vmatpush.msra.mxu0 %v3207
      %4089 = vmatpush.msra.mxu0 %v3200
      %4090 = vmatpush.msra.mxu0 %v3193
      %4091 = vmatpush.msra.mxu0 %v3186
      %4092 = vmatpush.msra.mxu0 %v3179
      %4093 = vmatpush.msra.mxu0 %v3172
      %4094 = vmatmul.f32.gmra.mxu0 %v2714
      %v4095 = vpop.f32.mrf.mxu0
      %v4096 = vadd.f32 %v4073, %v4095
      %4097 = vmatmul.f32.gmra.mxu0 %v2718
      %v4098 = vpop.f32.mrf.mxu0
      %v4099 = vadd.f32 %v4076, %v4098
      %4100 = vdwg.mxu0
      %4101 = vmatpush.msra.mxu0 %v3389
      %4102 = vmatpush.msra.mxu0 %v3382
      %4103 = vmatpush.msra.mxu0 %v3375
      %4104 = vmatpush.msra.mxu0 %v3368
      %4105 = vmatpush.msra.mxu0 %v3361
      %4106 = vmatpush.msra.mxu0 %v3354
      %4107 = vmatpush.msra.mxu0 %v3347
      %4108 = vmatpush.msra.mxu0 %v3340
      %4109 = vmatpush.msra.mxu0 %v3333
      %4110 = vmatpush.msra.mxu0 %v3326
      %4111 = vmatpush.msra.mxu0 %v3319
      %4112 = vmatpush.msra.mxu0 %v3312
      %4113 = vmatpush.msra.mxu0 %v3305
      %4114 = vmatpush.msra.mxu0 %v3298
      %4115 = vmatpush.msra.mxu0 %v3291
      %4116 = vmatpush.msra.mxu0 %v3284
      %4117 = vmatmul.f32.gmra.mxu0 %v2715
      %v4118 = vpop.f32.mrf.mxu0
      %v4119 = vadd.f32 %v4096, %v4118
      %4120 = vmatmul.f32.gmra.mxu0 %v2719
      %v4121 = vpop.f32.mrf.mxu0
      %v4122 = vadd.f32 %v4099, %v4121
      %4123 = vdwg.mxu0
      %4124 = vmatpush.msra.mxu0 %v3501
      %4125 = vmatpush.msra.mxu0 %v3494
      %4126 = vmatpush.msra.mxu0 %v3487
      %4127 = vmatpush.msra.mxu0 %v3480
      %4128 = vmatpush.msra.mxu0 %v3473
      %4129 = vmatpush.msra.mxu0 %v3466
      %4130 = vmatpush.msra.mxu0 %v3459
      %4131 = vmatpush.msra.mxu0 %v3452
      %4132 = vmatpush.msra.mxu0 %v3445
      %4133 = vmatpush.msra.mxu0 %v3438
      %4134 = vmatpush.msra.mxu0 %v3431
      %4135 = vmatpush.msra.mxu0 %v3424
      %4136 = vmatpush.msra.mxu0 %v3417
      %4137 = vmatpush.msra.mxu0 %v3410
      %4138 = vmatpush.msra.mxu0 %v3403
      %4139 = vmatpush.msra.mxu0 %v3396
      %4140 = vmatmul.f32.gmra.mxu0 %v2716
      %v4141 = vpop.f32.mrf.mxu0
      %v4142 = vadd.f32 %v4119, %v4141
      %4143 = vmatmul.f32.gmra.mxu0 %v2720
      %v4144 = vpop.f32.mrf.mxu0
      %v4145 = vadd.f32 %v4122, %v4144
      %4146 = vdwg.mxu0
      %4147 = vmatpush.msra.mxu0 %v3613
      %4148 = vmatpush.msra.mxu0 %v3606
      %4149 = vmatpush.msra.mxu0 %v3599
      %4150 = vmatpush.msra.mxu0 %v3592
      %4151 = vmatpush.msra.mxu0 %v3585
      %4152 = vmatpush.msra.mxu0 %v3578
      %4153 = vmatpush.msra.mxu0 %v3571
      %4154 = vmatpush.msra.mxu0 %v3564
      %4155 = vmatpush.msra.mxu0 %v3557
      %4156 = vmatpush.msra.mxu0 %v3550
      %4157 = vmatpush.msra.mxu0 %v3543
      %4158 = vmatpush.msra.mxu0 %v3536
      %4159 = vmatpush.msra.mxu0 %v3529
      %4160 = vmatpush.msra.mxu0 %v3522
      %4161 = vmatpush.msra.mxu0 %v3515
      %4162 = vmatpush.msra.mxu0 %v3508
      %4163 = vmatmul.f32.gmra.mxu0 %v2717
      %v4164 = vpop.f32.mrf.mxu0
      %v4165 = vadd.f32 %v4142, %v4164
      %4166 = vmatmul.f32.gmra.mxu0 %v2721
      %v4167 = vpop.f32.mrf.mxu0
      %v4168 = vadd.f32 %v4145, %v4167
      %4169 = vdwg.mxu0
      %4170 = vmatpush.msra.mxu0 %v2830
      %4171 = vmatpush.msra.mxu0 %v2823
      %4172 = vmatpush.msra.mxu0 %v2816
      %4173 = vmatpush.msra.mxu0 %v2809
      %4174 = vmatpush.msra.mxu0 %v2802
      %4175 = vmatpush.msra.mxu0 %v2795
      %4176 = vmatpush.msra.mxu0 %v2788
      %4177 = vmatpush.msra.mxu0 %v2781
      %4178 = vmatpush.msra.mxu0 %v2774
      %4179 = vmatpush.msra.mxu0 %v2767
      %4180 = vmatpush.msra.mxu0 %v2760
      %4181 = vmatpush.msra.mxu0 %v2753
      %4182 = vmatpush.msra.mxu0 %v2746
      %4183 = vmatpush.msra.mxu0 %v2739
      %4184 = vmatpush.msra.mxu0 %v2732
      %4185 = vmatpush.msra.mxu0 %v2725
      %4186 = vmatmul.f32.gmra.mxu0 %v1466
      %v4187 = vpop.f32.mrf.mxu0
      %v4188 = vadd.f32 0.0, %v4187
      %4189 = vmatmul.f32.gmra.mxu0 %v1470
      %v4190 = vpop.f32.mrf.mxu0
      %v4191 = vadd.f32 0.0, %v4190
      %4192 = vdwg.mxu0
      %4193 = vmatpush.msra.mxu0 %v2942
      %4194 = vmatpush.msra.mxu0 %v2935
      %4195 = vmatpush.msra.mxu0 %v2928
      %4196 = vmatpush.msra.mxu0 %v2921
      %4197 = vmatpush.msra.mxu0 %v2914
      %4198 = vmatpush.msra.mxu0 %v2907
      %4199 = vmatpush.msra.mxu0 %v2900
      %4200 = vmatpush.msra.mxu0 %v2893
      %4201 = vmatpush.msra.mxu0 %v2886
      %4202 = vmatpush.msra.mxu0 %v2879
      %4203 = vmatpush.msra.mxu0 %v2872
      %4204 = vmatpush.msra.mxu0 %v2865
      %4205 = vmatpush.msra.mxu0 %v2858
      %4206 = vmatpush.msra.mxu0 %v2851
      %4207 = vmatpush.msra.mxu0 %v2844
      %4208 = vmatpush.msra.mxu0 %v2837
      %4209 = vmatmul.f32.gmra.mxu0 %v1467
      %v4210 = vpop.f32.mrf.mxu0
      %v4211 = vadd.f32 %v4188, %v4210
      %4212 = vmatmul.f32.gmra.mxu0 %v1471
      %v4213 = vpop.f32.mrf.mxu0
      %v4214 = vadd.f32 %v4191, %v4213
      %4215 = vdwg.mxu0
      %4216 = vmatpush.msra.mxu0 %v3054
      %4217 = vmatpush.msra.mxu0 %v3047
      %4218 = vmatpush.msra.mxu0 %v3040
      %4219 = vmatpush.msra.mxu0 %v3033
      %4220 = vmatpush.msra.mxu0 %v3026
      %4221 = vmatpush.msra.mxu0 %v3019
      %4222 = vmatpush.msra.mxu0 %v3012
      %4223 = vmatpush.msra.mxu0 %v3005
      %4224 = vmatpush.msra.mxu0 %v2998
      %4225 = vmatpush.msra.mxu0 %v2991
      %4226 = vmatpush.msra.mxu0 %v2984
      %4227 = vmatpush.msra.mxu0 %v2977
      %4228 = vmatpush.msra.mxu0 %v2970
      %4229 = vmatpush.msra.mxu0 %v2963
      %4230 = vmatpush.msra.mxu0 %v2956
      %4231 = vmatpush.msra.mxu0 %v2949
      %4232 = vmatmul.f32.gmra.mxu0 %v1468
      %v4233 = vpop.f32.mrf.mxu0
      %v4234 = vadd.f32 %v4211, %v4233
      %4235 = vmatmul.f32.gmra.mxu0 %v1472
      %v4236 = vpop.f32.mrf.mxu0
      %v4237 = vadd.f32 %v4214, %v4236
      %4238 = vdwg.mxu0
      %4239 = vmatpush.msra.mxu0 %v3166
      %4240 = vmatpush.msra.mxu0 %v3159
      %4241 = vmatpush.msra.mxu0 %v3152
      %4242 = vmatpush.msra.mxu0 %v3145
      %4243 = vmatpush.msra.mxu0 %v3138
      %4244 = vmatpush.msra.mxu0 %v3131
      %4245 = vmatpush.msra.mxu0 %v3124
      %4246 = vmatpush.msra.mxu0 %v3117
      %4247 = vmatpush.msra.mxu0 %v3110
      %4248 = vmatpush.msra.mxu0 %v3103
      %4249 = vmatpush.msra.mxu0 %v3096
      %4250 = vmatpush.msra.mxu0 %v3089
      %4251 = vmatpush.msra.mxu0 %v3082
      %4252 = vmatpush.msra.mxu0 %v3075
      %4253 = vmatpush.msra.mxu0 %v3068
      %4254 = vmatpush.msra.mxu0 %v3061
      %4255 = vmatmul.f32.gmra.mxu0 %v1469
      %v4256 = vpop.f32.mrf.mxu0
      %v4257 = vadd.f32 %v4234, %v4256
      %4258 = vmatmul.f32.gmra.mxu0 %v1473
      %v4259 = vpop.f32.mrf.mxu0
      %v4260 = vadd.f32 %v4237, %v4259
      %4261 = vdwg.mxu0
      %4262 = vmatpush.msra.mxu0 %v3278
      %4263 = vmatpush.msra.mxu0 %v3271
      %4264 = vmatpush.msra.mxu0 %v3264
      %4265 = vmatpush.msra.mxu0 %v3257
      %4266 = vmatpush.msra.mxu0 %v3250
      %4267 = vmatpush.msra.mxu0 %v3243
      %4268 = vmatpush.msra.mxu0 %v3236
      %4269 = vmatpush.msra.mxu0 %v3229
      %4270 = vmatpush.msra.mxu0 %v3222
      %4271 = vmatpush.msra.mxu0 %v3215
      %4272 = vmatpush.msra.mxu0 %v3208
      %4273 = vmatpush.msra.mxu0 %v3201
      %4274 = vmatpush.msra.mxu0 %v3194
      %4275 = vmatpush.msra.mxu0 %v3187
      %4276 = vmatpush.msra.mxu0 %v3180
      %4277 = vmatpush.msra.mxu0 %v3173
      %4278 = vmatmul.f32.gmra.mxu0 %v2714
      %v4279 = vpop.f32.mrf.mxu0
      %v4280 = vadd.f32 %v4257, %v4279
      %4281 = vmatmul.f32.gmra.mxu0 %v2718
      %v4282 = vpop.f32.mrf.mxu0
      %v4283 = vadd.f32 %v4260, %v4282
      %4284 = vdwg.mxu0
      %4285 = vmatpush.msra.mxu0 %v3390
      %4286 = vmatpush.msra.mxu0 %v3383
      %4287 = vmatpush.msra.mxu0 %v3376
      %4288 = vmatpush.msra.mxu0 %v3369
      %4289 = vmatpush.msra.mxu0 %v3362
      %4290 = vmatpush.msra.mxu0 %v3355
      %4291 = vmatpush.msra.mxu0 %v3348
      %4292 = vmatpush.msra.mxu0 %v3341
      %4293 = vmatpush.msra.mxu0 %v3334
      %4294 = vmatpush.msra.mxu0 %v3327
      %4295 = vmatpush.msra.mxu0 %v3320
      %4296 = vmatpush.msra.mxu0 %v3313
      %4297 = vmatpush.msra.mxu0 %v3306
      %4298 = vmatpush.msra.mxu0 %v3299
      %4299 = vmatpush.msra.mxu0 %v3292
      %4300 = vmatpush.msra.mxu0 %v3285
      %4301 = vmatmul.f32.gmra.mxu0 %v2715
      %v4302 = vpop.f32.mrf.mxu0
      %v4303 = vadd.f32 %v4280, %v4302
      %4304 = vmatmul.f32.gmra.mxu0 %v2719
      %v4305 = vpop.f32.mrf.mxu0
      %v4306 = vadd.f32 %v4283, %v4305
      %4307 = vdwg.mxu0
      %4308 = vmatpush.msra.mxu0 %v3502
      %4309 = vmatpush.msra.mxu0 %v3495
      %4310 = vmatpush.msra.mxu0 %v3488
      %4311 = vmatpush.msra.mxu0 %v3481
      %4312 = vmatpush.msra.mxu0 %v3474
      %4313 = vmatpush.msra.mxu0 %v3467
      %4314 = vmatpush.msra.mxu0 %v3460
      %4315 = vmatpush.msra.mxu0 %v3453
      %4316 = vmatpush.msra.mxu0 %v3446
      %4317 = vmatpush.msra.mxu0 %v3439
      %4318 = vmatpush.msra.mxu0 %v3432
      %4319 = vmatpush.msra.mxu0 %v3425
      %4320 = vmatpush.msra.mxu0 %v3418
      %4321 = vmatpush.msra.mxu0 %v3411
      %4322 = vmatpush.msra.mxu0 %v3404
      %4323 = vmatpush.msra.mxu0 %v3397
      %4324 = vmatmul.f32.gmra.mxu0 %v2716
      %v4325 = vpop.f32.mrf.mxu0
      %v4326 = vadd.f32 %v4303, %v4325
      %4327 = vmatmul.f32.gmra.mxu0 %v2720
      %v4328 = vpop.f32.mrf.mxu0
      %v4329 = vadd.f32 %v4306, %v4328
      %4330 = vdwg.mxu0
      %4331 = vmatpush.msra.mxu0 %v3614
      %4332 = vmatpush.msra.mxu0 %v3607
      %4333 = vmatpush.msra.mxu0 %v3600
      %4334 = vmatpush.msra.mxu0 %v3593
      %4335 = vmatpush.msra.mxu0 %v3586
      %4336 = vmatpush.msra.mxu0 %v3579
      %4337 = vmatpush.msra.mxu0 %v3572
      %4338 = vmatpush.msra.mxu0 %v3565
      %4339 = vmatpush.msra.mxu0 %v3558
      %4340 = vmatpush.msra.mxu0 %v3551
      %4341 = vmatpush.msra.mxu0 %v3544
      %4342 = vmatpush.msra.mxu0 %v3537
      %4343 = vmatpush.msra.mxu0 %v3530
      %4344 = vmatpush.msra.mxu0 %v3523
      %4345 = vmatpush.msra.mxu0 %v3516
      %4346 = vmatpush.msra.mxu0 %v3509
      %4347 = vmatmul.f32.gmra.mxu0 %v2717
      %v4348 = vpop.f32.mrf.mxu0
      %v4349 = vadd.f32 %v4326, %v4348
      %4350 = vmatmul.f32.gmra.mxu0 %v2721
      %v4351 = vpop.f32.mrf.mxu0
      %v4352 = vadd.f32 %v4329, %v4351
      %4353 = vdwg.mxu0
      %4354 = vmatpush.msra.mxu0 %v2831
      %4355 = vmatpush.msra.mxu0 %v2824
      %4356 = vmatpush.msra.mxu0 %v2817
      %4357 = vmatpush.msra.mxu0 %v2810
      %4358 = vmatpush.msra.mxu0 %v2803
      %4359 = vmatpush.msra.mxu0 %v2796
      %4360 = vmatpush.msra.mxu0 %v2789
      %4361 = vmatpush.msra.mxu0 %v2782
      %4362 = vmatpush.msra.mxu0 %v2775
      %4363 = vmatpush.msra.mxu0 %v2768
      %4364 = vmatpush.msra.mxu0 %v2761
      %4365 = vmatpush.msra.mxu0 %v2754
      %4366 = vmatpush.msra.mxu0 %v2747
      %4367 = vmatpush.msra.mxu0 %v2740
      %4368 = vmatpush.msra.mxu0 %v2733
      %4369 = vmatpush.msra.mxu0 %v2726
      %4370 = vmatmul.f32.gmra.mxu0 %v1466
      %v4371 = vpop.f32.mrf.mxu0
      %v4372 = vadd.f32 0.0, %v4371
      %4373 = vmatmul.f32.gmra.mxu0 %v1470
      %v4374 = vpop.f32.mrf.mxu0
      %v4375 = vadd.f32 0.0, %v4374
      %4376 = vdwg.mxu0
      %4377 = vmatpush.msra.mxu0 %v2943
      %4378 = vmatpush.msra.mxu0 %v2936
      %4379 = vmatpush.msra.mxu0 %v2929
      %4380 = vmatpush.msra.mxu0 %v2922
      %4381 = vmatpush.msra.mxu0 %v2915
      %4382 = vmatpush.msra.mxu0 %v2908
      %4383 = vmatpush.msra.mxu0 %v2901
      %4384 = vmatpush.msra.mxu0 %v2894
      %4385 = vmatpush.msra.mxu0 %v2887
      %4386 = vmatpush.msra.mxu0 %v2880
      %4387 = vmatpush.msra.mxu0 %v2873
      %4388 = vmatpush.msra.mxu0 %v2866
      %4389 = vmatpush.msra.mxu0 %v2859
      %4390 = vmatpush.msra.mxu0 %v2852
      %4391 = vmatpush.msra.mxu0 %v2845
      %4392 = vmatpush.msra.mxu0 %v2838
      %4393 = vmatmul.f32.gmra.mxu0 %v1467
      %v4394 = vpop.f32.mrf.mxu0
      %v4395 = vadd.f32 %v4372, %v4394
      %4396 = vmatmul.f32.gmra.mxu0 %v1471
      %v4397 = vpop.f32.mrf.mxu0
      %v4398 = vadd.f32 %v4375, %v4397
      %4399 = vdwg.mxu0
      %4400 = vmatpush.msra.mxu0 %v3055
      %4401 = vmatpush.msra.mxu0 %v3048
      %4402 = vmatpush.msra.mxu0 %v3041
      %4403 = vmatpush.msra.mxu0 %v3034
      %4404 = vmatpush.msra.mxu0 %v3027
      %4405 = vmatpush.msra.mxu0 %v3020
      %4406 = vmatpush.msra.mxu0 %v3013
      %4407 = vmatpush.msra.mxu0 %v3006
      %4408 = vmatpush.msra.mxu0 %v2999
      %4409 = vmatpush.msra.mxu0 %v2992
      %4410 = vmatpush.msra.mxu0 %v2985
      %4411 = vmatpush.msra.mxu0 %v2978
      %4412 = vmatpush.msra.mxu0 %v2971
      %4413 = vmatpush.msra.mxu0 %v2964
      %4414 = vmatpush.msra.mxu0 %v2957
      %4415 = vmatpush.msra.mxu0 %v2950
      %4416 = vmatmul.f32.gmra.mxu0 %v1468
      %v4417 = vpop.f32.mrf.mxu0
      %v4418 = vadd.f32 %v4395, %v4417
      %4419 = vmatmul.f32.gmra.mxu0 %v1472
      %v4420 = vpop.f32.mrf.mxu0
      %v4421 = vadd.f32 %v4398, %v4420
      %4422 = vdwg.mxu0
      %4423 = vmatpush.msra.mxu0 %v3167
      %4424 = vmatpush.msra.mxu0 %v3160
      %4425 = vmatpush.msra.mxu0 %v3153
      %4426 = vmatpush.msra.mxu0 %v3146
      %4427 = vmatpush.msra.mxu0 %v3139
      %4428 = vmatpush.msra.mxu0 %v3132
      %4429 = vmatpush.msra.mxu0 %v3125
      %4430 = vmatpush.msra.mxu0 %v3118
      %4431 = vmatpush.msra.mxu0 %v3111
      %4432 = vmatpush.msra.mxu0 %v3104
      %4433 = vmatpush.msra.mxu0 %v3097
      %4434 = vmatpush.msra.mxu0 %v3090
      %4435 = vmatpush.msra.mxu0 %v3083
      %4436 = vmatpush.msra.mxu0 %v3076
      %4437 = vmatpush.msra.mxu0 %v3069
      %4438 = vmatpush.msra.mxu0 %v3062
      %4439 = vmatmul.f32.gmra.mxu0 %v1469
      %v4440 = vpop.f32.mrf.mxu0
      %v4441 = vadd.f32 %v4418, %v4440
      %4442 = vmatmul.f32.gmra.mxu0 %v1473
      %v4443 = vpop.f32.mrf.mxu0
      %v4444 = vadd.f32 %v4421, %v4443
      %4445 = vdwg.mxu0
      %4446 = vmatpush.msra.mxu0 %v3279
      %4447 = vmatpush.msra.mxu0 %v3272
      %4448 = vmatpush.msra.mxu0 %v3265
      %4449 = vmatpush.msra.mxu0 %v3258
      %4450 = vmatpush.msra.mxu0 %v3251
      %4451 = vmatpush.msra.mxu0 %v3244
      %4452 = vmatpush.msra.mxu0 %v3237
      %4453 = vmatpush.msra.mxu0 %v3230
      %4454 = vmatpush.msra.mxu0 %v3223
      %4455 = vmatpush.msra.mxu0 %v3216
      %4456 = vmatpush.msra.mxu0 %v3209
      %4457 = vmatpush.msra.mxu0 %v3202
      %4458 = vmatpush.msra.mxu0 %v3195
      %4459 = vmatpush.msra.mxu0 %v3188
      %4460 = vmatpush.msra.mxu0 %v3181
      %4461 = vmatpush.msra.mxu0 %v3174
      %4462 = vmatmul.f32.gmra.mxu0 %v2714
      %v4463 = vpop.f32.mrf.mxu0
      %v4464 = vadd.f32 %v4441, %v4463
      %4465 = vmatmul.f32.gmra.mxu0 %v2718
      %v4466 = vpop.f32.mrf.mxu0
      %v4467 = vadd.f32 %v4444, %v4466
      %4468 = vdwg.mxu0
      %4469 = vmatpush.msra.mxu0 %v3391
      %4470 = vmatpush.msra.mxu0 %v3384
      %4471 = vmatpush.msra.mxu0 %v3377
      %4472 = vmatpush.msra.mxu0 %v3370
      %4473 = vmatpush.msra.mxu0 %v3363
      %4474 = vmatpush.msra.mxu0 %v3356
      %4475 = vmatpush.msra.mxu0 %v3349
      %4476 = vmatpush.msra.mxu0 %v3342
      %4477 = vmatpush.msra.mxu0 %v3335
      %4478 = vmatpush.msra.mxu0 %v3328
      %4479 = vmatpush.msra.mxu0 %v3321
      %4480 = vmatpush.msra.mxu0 %v3314
      %4481 = vmatpush.msra.mxu0 %v3307
      %4482 = vmatpush.msra.mxu0 %v3300
      %4483 = vmatpush.msra.mxu0 %v3293
      %4484 = vmatpush.msra.mxu0 %v3286
      %4485 = vmatmul.f32.gmra.mxu0 %v2715
      %v4486 = vpop.f32.mrf.mxu0
      %v4487 = vadd.f32 %v4464, %v4486
      %4488 = vmatmul.f32.gmra.mxu0 %v2719
      %v4489 = vpop.f32.mrf.mxu0
      %v4490 = vadd.f32 %v4467, %v4489
      %4491 = vdwg.mxu0
      %4492 = vmatpush.msra.mxu0 %v3503
      %4493 = vmatpush.msra.mxu0 %v3496
      %4494 = vmatpush.msra.mxu0 %v3489
      %4495 = vmatpush.msra.mxu0 %v3482
      %4496 = vmatpush.msra.mxu0 %v3475
      %4497 = vmatpush.msra.mxu0 %v3468
      %4498 = vmatpush.msra.mxu0 %v3461
      %4499 = vmatpush.msra.mxu0 %v3454
      %4500 = vmatpush.msra.mxu0 %v3447
      %4501 = vmatpush.msra.mxu0 %v3440
      %4502 = vmatpush.msra.mxu0 %v3433
      %4503 = vmatpush.msra.mxu0 %v3426
      %4504 = vmatpush.msra.mxu0 %v3419
      %4505 = vmatpush.msra.mxu0 %v3412
      %4506 = vmatpush.msra.mxu0 %v3405
      %4507 = vmatpush.msra.mxu0 %v3398
      %4508 = vmatmul.f32.gmra.mxu0 %v2716
      %v4509 = vpop.f32.mrf.mxu0
      %v4510 = vadd.f32 %v4487, %v4509
      %4511 = vmatmul.f32.gmra.mxu0 %v2720
      %v4512 = vpop.f32.mrf.mxu0
      %v4513 = vadd.f32 %v4490, %v4512
      %4514 = vdwg.mxu0
      %4515 = vmatpush.msra.mxu0 %v3615
      %4516 = vmatpush.msra.mxu0 %v3608
      %4517 = vmatpush.msra.mxu0 %v3601
      %4518 = vmatpush.msra.mxu0 %v3594
      %4519 = vmatpush.msra.mxu0 %v3587
      %4520 = vmatpush.msra.mxu0 %v3580
      %4521 = vmatpush.msra.mxu0 %v3573
      %4522 = vmatpush.msra.mxu0 %v3566
      %4523 = vmatpush.msra.mxu0 %v3559
      %4524 = vmatpush.msra.mxu0 %v3552
      %4525 = vmatpush.msra.mxu0 %v3545
      %4526 = vmatpush.msra.mxu0 %v3538
      %4527 = vmatpush.msra.mxu0 %v3531
      %4528 = vmatpush.msra.mxu0 %v3524
      %4529 = vmatpush.msra.mxu0 %v3517
      %4530 = vmatpush.msra.mxu0 %v3510
      %4531 = vmatmul.f32.gmra.mxu0 %v2717
      %v4532 = vpop.f32.mrf.mxu0
      %v4533 = vadd.f32 %v4510, %v4532
      %4534 = vmatmul.f32.gmra.mxu0 %v2721
      %v4535 = vpop.f32.mrf.mxu0
      %v4536 = vadd.f32 %v4513, %v4535
      %4537 = vdwg.mxu0
      %4538 = vmatpush.msra.mxu0 %v2832
      %4539 = vmatpush.msra.mxu0 %v2825
      %4540 = vmatpush.msra.mxu0 %v2818
      %4541 = vmatpush.msra.mxu0 %v2811
      %4542 = vmatpush.msra.mxu0 %v2804
      %4543 = vmatpush.msra.mxu0 %v2797
      %4544 = vmatpush.msra.mxu0 %v2790
      %4545 = vmatpush.msra.mxu0 %v2783
      %4546 = vmatpush.msra.mxu0 %v2776
      %4547 = vmatpush.msra.mxu0 %v2769
      %4548 = vmatpush.msra.mxu0 %v2762
      %4549 = vmatpush.msra.mxu0 %v2755
      %4550 = vmatpush.msra.mxu0 %v2748
      %4551 = vmatpush.msra.mxu0 %v2741
      %4552 = vmatpush.msra.mxu0 %v2734
      %4553 = vmatpush.msra.mxu0 %v2727
      %4554 = vmatmul.f32.gmra.mxu0 %v1466
      %v4555 = vpop.f32.mrf.mxu0
      %v4556 = vadd.f32 0.0, %v4555
      %4557 = vmatmul.f32.gmra.mxu0 %v1470
      %v4558 = vpop.f32.mrf.mxu0
      %v4559 = vadd.f32 0.0, %v4558
      %4560 = vdwg.mxu0
      %4561 = vmatpush.msra.mxu0 %v2944
      %4562 = vmatpush.msra.mxu0 %v2937
      %4563 = vmatpush.msra.mxu0 %v2930
      %4564 = vmatpush.msra.mxu0 %v2923
      %4565 = vmatpush.msra.mxu0 %v2916
      %4566 = vmatpush.msra.mxu0 %v2909
      %4567 = vmatpush.msra.mxu0 %v2902
      %4568 = vmatpush.msra.mxu0 %v2895
      %4569 = vmatpush.msra.mxu0 %v2888
      %4570 = vmatpush.msra.mxu0 %v2881
      %4571 = vmatpush.msra.mxu0 %v2874
      %4572 = vmatpush.msra.mxu0 %v2867
      %4573 = vmatpush.msra.mxu0 %v2860
      %4574 = vmatpush.msra.mxu0 %v2853
      %4575 = vmatpush.msra.mxu0 %v2846
      %4576 = vmatpush.msra.mxu0 %v2839
      %4577 = vmatmul.f32.gmra.mxu0 %v1467
      %v4578 = vpop.f32.mrf.mxu0
      %v4579 = vadd.f32 %v4556, %v4578
      %4580 = vmatmul.f32.gmra.mxu0 %v1471
      %v4581 = vpop.f32.mrf.mxu0
      %v4582 = vadd.f32 %v4559, %v4581
      %4583 = vdwg.mxu0
      %4584 = vmatpush.msra.mxu0 %v3056
      %4585 = vmatpush.msra.mxu0 %v3049
      %4586 = vmatpush.msra.mxu0 %v3042
      %4587 = vmatpush.msra.mxu0 %v3035
      %4588 = vmatpush.msra.mxu0 %v3028
      %4589 = vmatpush.msra.mxu0 %v3021
      %4590 = vmatpush.msra.mxu0 %v3014
      %4591 = vmatpush.msra.mxu0 %v3007
      %4592 = vmatpush.msra.mxu0 %v3000
      %4593 = vmatpush.msra.mxu0 %v2993
      %4594 = vmatpush.msra.mxu0 %v2986
      %4595 = vmatpush.msra.mxu0 %v2979
      %4596 = vmatpush.msra.mxu0 %v2972
      %4597 = vmatpush.msra.mxu0 %v2965
      %4598 = vmatpush.msra.mxu0 %v2958
      %4599 = vmatpush.msra.mxu0 %v2951
      %4600 = vmatmul.f32.gmra.mxu0 %v1468
      %v4601 = vpop.f32.mrf.mxu0
      %v4602 = vadd.f32 %v4579, %v4601
      %4603 = vmatmul.f32.gmra.mxu0 %v1472
      %v4604 = vpop.f32.mrf.mxu0
      %v4605 = vadd.f32 %v4582, %v4604
      %4606 = vdwg.mxu0
      %4607 = vmatpush.msra.mxu0 %v3168
      %4608 = vmatpush.msra.mxu0 %v3161
      %4609 = vmatpush.msra.mxu0 %v3154
      %4610 = vmatpush.msra.mxu0 %v3147
      %4611 = vmatpush.msra.mxu0 %v3140
      %4612 = vmatpush.msra.mxu0 %v3133
      %4613 = vmatpush.msra.mxu0 %v3126
      %4614 = vmatpush.msra.mxu0 %v3119
      %4615 = vmatpush.msra.mxu0 %v3112
      %4616 = vmatpush.msra.mxu0 %v3105
      %4617 = vmatpush.msra.mxu0 %v3098
      %4618 = vmatpush.msra.mxu0 %v3091
      %4619 = vmatpush.msra.mxu0 %v3084
      %4620 = vmatpush.msra.mxu0 %v3077
      %4621 = vmatpush.msra.mxu0 %v3070
      %4622 = vmatpush.msra.mxu0 %v3063
      %4623 = vmatmul.f32.gmra.mxu0 %v1469
      %v4624 = vpop.f32.mrf.mxu0
      %v4625 = vadd.f32 %v4602, %v4624
      %4626 = vmatmul.f32.gmra.mxu0 %v1473
      %v4627 = vpop.f32.mrf.mxu0
      %v4628 = vadd.f32 %v4605, %v4627
      %4629 = vdwg.mxu0
      %4630 = vmatpush.msra.mxu0 %v3280
      %4631 = vmatpush.msra.mxu0 %v3273
      %4632 = vmatpush.msra.mxu0 %v3266
      %4633 = vmatpush.msra.mxu0 %v3259
      %4634 = vmatpush.msra.mxu0 %v3252
      %4635 = vmatpush.msra.mxu0 %v3245
      %4636 = vmatpush.msra.mxu0 %v3238
      %4637 = vmatpush.msra.mxu0 %v3231
      %4638 = vmatpush.msra.mxu0 %v3224
      %4639 = vmatpush.msra.mxu0 %v3217
      %4640 = vmatpush.msra.mxu0 %v3210
      %4641 = vmatpush.msra.mxu0 %v3203
      %4642 = vmatpush.msra.mxu0 %v3196
      %4643 = vmatpush.msra.mxu0 %v3189
      %4644 = vmatpush.msra.mxu0 %v3182
      %4645 = vmatpush.msra.mxu0 %v3175
      %4646 = vmatmul.f32.gmra.mxu0 %v2714
      %v4647 = vpop.f32.mrf.mxu0
      %v4648 = vadd.f32 %v4625, %v4647
      %4649 = vmatmul.f32.gmra.mxu0 %v2718
      %v4650 = vpop.f32.mrf.mxu0
      %v4651 = vadd.f32 %v4628, %v4650
      %4652 = vdwg.mxu0
      %4653 = vmatpush.msra.mxu0 %v3392
      %4654 = vmatpush.msra.mxu0 %v3385
      %4655 = vmatpush.msra.mxu0 %v3378
      %4656 = vmatpush.msra.mxu0 %v3371
      %4657 = vmatpush.msra.mxu0 %v3364
      %4658 = vmatpush.msra.mxu0 %v3357
      %4659 = vmatpush.msra.mxu0 %v3350
      %4660 = vmatpush.msra.mxu0 %v3343
      %4661 = vmatpush.msra.mxu0 %v3336
      %4662 = vmatpush.msra.mxu0 %v3329
      %4663 = vmatpush.msra.mxu0 %v3322
      %4664 = vmatpush.msra.mxu0 %v3315
      %4665 = vmatpush.msra.mxu0 %v3308
      %4666 = vmatpush.msra.mxu0 %v3301
      %4667 = vmatpush.msra.mxu0 %v3294
      %4668 = vmatpush.msra.mxu0 %v3287
      %4669 = vmatmul.f32.gmra.mxu0 %v2715
      %v4670 = vpop.f32.mrf.mxu0
      %v4671 = vadd.f32 %v4648, %v4670
      %4672 = vmatmul.f32.gmra.mxu0 %v2719
      %v4673 = vpop.f32.mrf.mxu0
      %v4674 = vadd.f32 %v4651, %v4673
      %4675 = vdwg.mxu0
      %4676 = vmatpush.msra.mxu0 %v3504
      %4677 = vmatpush.msra.mxu0 %v3497
      %4678 = vmatpush.msra.mxu0 %v3490
      %4679 = vmatpush.msra.mxu0 %v3483
      %4680 = vmatpush.msra.mxu0 %v3476
      %4681 = vmatpush.msra.mxu0 %v3469
      %4682 = vmatpush.msra.mxu0 %v3462
      %4683 = vmatpush.msra.mxu0 %v3455
      %4684 = vmatpush.msra.mxu0 %v3448
      %4685 = vmatpush.msra.mxu0 %v3441
      %4686 = vmatpush.msra.mxu0 %v3434
      %4687 = vmatpush.msra.mxu0 %v3427
      %4688 = vmatpush.msra.mxu0 %v3420
      %4689 = vmatpush.msra.mxu0 %v3413
      %4690 = vmatpush.msra.mxu0 %v3406
      %4691 = vmatpush.msra.mxu0 %v3399
      %4692 = vmatmul.f32.gmra.mxu0 %v2716
      %v4693 = vpop.f32.mrf.mxu0
      %v4694 = vadd.f32 %v4671, %v4693
      %4695 = vmatmul.f32.gmra.mxu0 %v2720
      %v4696 = vpop.f32.mrf.mxu0
      %v4697 = vadd.f32 %v4674, %v4696
      %4698 = vdwg.mxu0
      %4699 = vmatpush.msra.mxu0 %v3616
      %4700 = vmatpush.msra.mxu0 %v3609
      %4701 = vmatpush.msra.mxu0 %v3602
      %4702 = vmatpush.msra.mxu0 %v3595
      %4703 = vmatpush.msra.mxu0 %v3588
      %4704 = vmatpush.msra.mxu0 %v3581
      %4705 = vmatpush.msra.mxu0 %v3574
      %4706 = vmatpush.msra.mxu0 %v3567
      %4707 = vmatpush.msra.mxu0 %v3560
      %4708 = vmatpush.msra.mxu0 %v3553
      %4709 = vmatpush.msra.mxu0 %v3546
      %4710 = vmatpush.msra.mxu0 %v3539
      %4711 = vmatpush.msra.mxu0 %v3532
      %4712 = vmatpush.msra.mxu0 %v3525
      %4713 = vmatpush.msra.mxu0 %v3518
      %4714 = vmatpush.msra.mxu0 %v3511
      %4715 = vmatmul.f32.gmra.mxu0 %v2717
      %v4716 = vpop.f32.mrf.mxu0
      %v4717 = vadd.f32 %v4694, %v4716
      %4718 = vmatmul.f32.gmra.mxu0 %v2721
      %v4719 = vpop.f32.mrf.mxu0
      %v4720 = vadd.f32 %v4697, %v4719
      %4721 = vdwg.mxu0
      %4722 = vmatpush.msra.mxu0 %v2833
      %4723 = vmatpush.msra.mxu0 %v2826
      %4724 = vmatpush.msra.mxu0 %v2819
      %4725 = vmatpush.msra.mxu0 %v2812
      %4726 = vmatpush.msra.mxu0 %v2805
      %4727 = vmatpush.msra.mxu0 %v2798
      %4728 = vmatpush.msra.mxu0 %v2791
      %4729 = vmatpush.msra.mxu0 %v2784
      %4730 = vmatpush.msra.mxu0 %v2777
      %4731 = vmatpush.msra.mxu0 %v2770
      %4732 = vmatpush.msra.mxu0 %v2763
      %4733 = vmatpush.msra.mxu0 %v2756
      %4734 = vmatpush.msra.mxu0 %v2749
      %4735 = vmatpush.msra.mxu0 %v2742
      %4736 = vmatpush.msra.mxu0 %v2735
      %4737 = vmatpush.msra.mxu0 %v2728
      %4738 = vmatmul.f32.gmra.mxu0 %v1466
      %v4739 = vpop.f32.mrf.mxu0
      %v4740 = vadd.f32 0.0, %v4739
      %4741 = vmatmul.f32.gmra.mxu0 %v1470
      %v4742 = vpop.f32.mrf.mxu0
      %v4743 = vadd.f32 0.0, %v4742
      %4744 = vdwg.mxu0
      %4745 = vmatpush.msra.mxu0 %v2945
      %4746 = vmatpush.msra.mxu0 %v2938
      %4747 = vmatpush.msra.mxu0 %v2931
      %4748 = vmatpush.msra.mxu0 %v2924
      %4749 = vmatpush.msra.mxu0 %v2917
      %4750 = vmatpush.msra.mxu0 %v2910
      %4751 = vmatpush.msra.mxu0 %v2903
      %4752 = vmatpush.msra.mxu0 %v2896
      %4753 = vmatpush.msra.mxu0 %v2889
      %4754 = vmatpush.msra.mxu0 %v2882
      %4755 = vmatpush.msra.mxu0 %v2875
      %4756 = vmatpush.msra.mxu0 %v2868
      %4757 = vmatpush.msra.mxu0 %v2861
      %4758 = vmatpush.msra.mxu0 %v2854
      %4759 = vmatpush.msra.mxu0 %v2847
      %4760 = vmatpush.msra.mxu0 %v2840
      %4761 = vmatmul.f32.gmra.mxu0 %v1467
      %v4762 = vpop.f32.mrf.mxu0
      %v4763 = vadd.f32 %v4740, %v4762
      %4764 = vmatmul.f32.gmra.mxu0 %v1471
      %v4765 = vpop.f32.mrf.mxu0
      %v4766 = vadd.f32 %v4743, %v4765
      %4767 = vdwg.mxu0
      %4768 = vmatpush.msra.mxu0 %v3057
      %4769 = vmatpush.msra.mxu0 %v3050
      %4770 = vmatpush.msra.mxu0 %v3043
      %4771 = vmatpush.msra.mxu0 %v3036
      %4772 = vmatpush.msra.mxu0 %v3029
      %4773 = vmatpush.msra.mxu0 %v3022
      %4774 = vmatpush.msra.mxu0 %v3015
      %4775 = vmatpush.msra.mxu0 %v3008
      %4776 = vmatpush.msra.mxu0 %v3001
      %4777 = vmatpush.msra.mxu0 %v2994
      %4778 = vmatpush.msra.mxu0 %v2987
      %4779 = vmatpush.msra.mxu0 %v2980
      %4780 = vmatpush.msra.mxu0 %v2973
      %4781 = vmatpush.msra.mxu0 %v2966
      %4782 = vmatpush.msra.mxu0 %v2959
      %4783 = vmatpush.msra.mxu0 %v2952
      %4784 = vmatmul.f32.gmra.mxu0 %v1468
      %v4785 = vpop.f32.mrf.mxu0
      %v4786 = vadd.f32 %v4763, %v4785
      %4787 = vmatmul.f32.gmra.mxu0 %v1472
      %v4788 = vpop.f32.mrf.mxu0
      %v4789 = vadd.f32 %v4766, %v4788
      %4790 = vdwg.mxu0
      %4791 = vmatpush.msra.mxu0 %v3169
      %4792 = vmatpush.msra.mxu0 %v3162
      %4793 = vmatpush.msra.mxu0 %v3155
      %4794 = vmatpush.msra.mxu0 %v3148
      %4795 = vmatpush.msra.mxu0 %v3141
      %4796 = vmatpush.msra.mxu0 %v3134
      %4797 = vmatpush.msra.mxu0 %v3127
      %4798 = vmatpush.msra.mxu0 %v3120
      %4799 = vmatpush.msra.mxu0 %v3113
      %4800 = vmatpush.msra.mxu0 %v3106
      %4801 = vmatpush.msra.mxu0 %v3099
      %4802 = vmatpush.msra.mxu0 %v3092
      %4803 = vmatpush.msra.mxu0 %v3085
      %4804 = vmatpush.msra.mxu0 %v3078
      %4805 = vmatpush.msra.mxu0 %v3071
      %4806 = vmatpush.msra.mxu0 %v3064
      %4807 = vmatmul.f32.gmra.mxu0 %v1469
      %v4808 = vpop.f32.mrf.mxu0
      %v4809 = vadd.f32 %v4786, %v4808
      %4810 = vmatmul.f32.gmra.mxu0 %v1473
      %v4811 = vpop.f32.mrf.mxu0
      %v4812 = vadd.f32 %v4789, %v4811
      %4813 = vdwg.mxu0
      %4814 = vmatpush.msra.mxu0 %v3281
      %4815 = vmatpush.msra.mxu0 %v3274
      %4816 = vmatpush.msra.mxu0 %v3267
      %4817 = vmatpush.msra.mxu0 %v3260
      %4818 = vmatpush.msra.mxu0 %v3253
      %4819 = vmatpush.msra.mxu0 %v3246
      %4820 = vmatpush.msra.mxu0 %v3239
      %4821 = vmatpush.msra.mxu0 %v3232
      %4822 = vmatpush.msra.mxu0 %v3225
      %4823 = vmatpush.msra.mxu0 %v3218
      %4824 = vmatpush.msra.mxu0 %v3211
      %4825 = vmatpush.msra.mxu0 %v3204
      %4826 = vmatpush.msra.mxu0 %v3197
      %4827 = vmatpush.msra.mxu0 %v3190
      %4828 = vmatpush.msra.mxu0 %v3183
      %4829 = vmatpush.msra.mxu0 %v3176
      %4830 = vmatmul.f32.gmra.mxu0 %v2714
      %v4831 = vpop.f32.mrf.mxu0
      %v4832 = vadd.f32 %v4809, %v4831
      %4833 = vmatmul.f32.gmra.mxu0 %v2718
      %v4834 = vpop.f32.mrf.mxu0
      %v4835 = vadd.f32 %v4812, %v4834
      %4836 = vdwg.mxu0
      %4837 = vmatpush.msra.mxu0 %v3393
      %4838 = vmatpush.msra.mxu0 %v3386
      %4839 = vmatpush.msra.mxu0 %v3379
      %4840 = vmatpush.msra.mxu0 %v3372
      %4841 = vmatpush.msra.mxu0 %v3365
      %4842 = vmatpush.msra.mxu0 %v3358
      %4843 = vmatpush.msra.mxu0 %v3351
      %4844 = vmatpush.msra.mxu0 %v3344
      %4845 = vmatpush.msra.mxu0 %v3337
      %4846 = vmatpush.msra.mxu0 %v3330
      %4847 = vmatpush.msra.mxu0 %v3323
      %4848 = vmatpush.msra.mxu0 %v3316
      %4849 = vmatpush.msra.mxu0 %v3309
      %4850 = vmatpush.msra.mxu0 %v3302
      %4851 = vmatpush.msra.mxu0 %v3295
      %4852 = vmatpush.msra.mxu0 %v3288
      %4853 = vmatmul.f32.gmra.mxu0 %v2715
      %v4854 = vpop.f32.mrf.mxu0
      %v4855 = vadd.f32 %v4832, %v4854
      %4856 = vmatmul.f32.gmra.mxu0 %v2719
      %v4857 = vpop.f32.mrf.mxu0
      %v4858 = vadd.f32 %v4835, %v4857
      %4859 = vdwg.mxu0
      %4860 = vmatpush.msra.mxu0 %v3505
      %4861 = vmatpush.msra.mxu0 %v3498
      %4862 = vmatpush.msra.mxu0 %v3491
      %4863 = vmatpush.msra.mxu0 %v3484
      %4864 = vmatpush.msra.mxu0 %v3477
      %4865 = vmatpush.msra.mxu0 %v3470
      %4866 = vmatpush.msra.mxu0 %v3463
      %4867 = vmatpush.msra.mxu0 %v3456
      %4868 = vmatpush.msra.mxu0 %v3449
      %4869 = vmatpush.msra.mxu0 %v3442
      %4870 = vmatpush.msra.mxu0 %v3435
      %4871 = vmatpush.msra.mxu0 %v3428
      %4872 = vmatpush.msra.mxu0 %v3421
      %4873 = vmatpush.msra.mxu0 %v3414
      %4874 = vmatpush.msra.mxu0 %v3407
      %4875 = vmatpush.msra.mxu0 %v3400
      %4876 = vmatmul.f32.gmra.mxu0 %v2716
      %v4877 = vpop.f32.mrf.mxu0
      %v4878 = vadd.f32 %v4855, %v4877
      %4879 = vmatmul.f32.gmra.mxu0 %v2720
      %v4880 = vpop.f32.mrf.mxu0
      %v4881 = vadd.f32 %v4858, %v4880
      %4882 = vdwg.mxu0
      %4883 = vmatpush.msra.mxu0 %v3617
      %4884 = vmatpush.msra.mxu0 %v3610
      %4885 = vmatpush.msra.mxu0 %v3603
      %4886 = vmatpush.msra.mxu0 %v3596
      %4887 = vmatpush.msra.mxu0 %v3589
      %4888 = vmatpush.msra.mxu0 %v3582
      %4889 = vmatpush.msra.mxu0 %v3575
      %4890 = vmatpush.msra.mxu0 %v3568
      %4891 = vmatpush.msra.mxu0 %v3561
      %4892 = vmatpush.msra.mxu0 %v3554
      %4893 = vmatpush.msra.mxu0 %v3547
      %4894 = vmatpush.msra.mxu0 %v3540
      %4895 = vmatpush.msra.mxu0 %v3533
      %4896 = vmatpush.msra.mxu0 %v3526
      %4897 = vmatpush.msra.mxu0 %v3519
      %4898 = vmatpush.msra.mxu0 %v3512
      %4899 = vmatmul.f32.gmra.mxu0 %v2717
      %v4900 = vpop.f32.mrf.mxu0
      %v4901 = vadd.f32 %v4878, %v4900
      %4902 = vmatmul.f32.gmra.mxu0 %v2721
      %v4903 = vpop.f32.mrf.mxu0
      %v4904 = vadd.f32 %v4881, %v4903
      %4905 = vdwg.mxu0
      %vm4910 = vcmask 1045504
      %v4911 = vrot.slane %v3797, 2
      %v4912 = vrot.slane %v3800, 2
      %v4913 = vsel %vm4910, %v4911, %v4912
      %v4914 = vrot.slane %v3981, 2
      %v4915 = vrot.slane %v3984, 2
      %v4916 = vsel %vm4910, %v4914, %v4915
      %vm4921 = vcmask 1041408
      %v4922 = vsel %vm4921, %v4912, 0.0
      %v4923 = vsel %vm4921, %v4915, 0.0
      %vm4928 = vcmask 1046528
      %v4929 = vrot.slane %v3981, 1
      %v4930 = vrot.slane %v3984, 1
      %v4931 = vsel %vm4928, %v4929, %v4930
      %v4932 = vrot.slane %v4165, 1
      %v4933 = vrot.slane %v4168, 1
      %v4934 = vsel %vm4928, %v4932, %v4933
      %v4935 = vrot.slane %v4349, 1
      %v4936 = vrot.slane %v4352, 1
      %v4937 = vsel %vm4928, %v4935, %v4936
      %4938 = vrot.lane.b32.xlu0 %v4931, 56
      %v4939 = vpop.permute.xlu0 %4938
      %4940 = vrot.lane.b32.xlu0 %v4934, 56
      %v4941 = vpop.permute.xlu0 %4940
      %4942 = vrot.lane.b32.xlu0 %v4937, 56
      %v4943 = vpop.permute.xlu0 %4942
      %4944 = vrot.lane.b32.xlu0 %v4930, 56
      %v4945 = vpop.permute.xlu0 %4944
      %4946 = vrot.lane.b32.xlu0 %v4933, 56
      %v4947 = vpop.permute.xlu0 %4946
      %4948 = vrot.lane.b32.xlu0 %v4936, 56
      %v4949 = vpop.permute.xlu0 %4948
      %vm4950 = vcmask 457728
      %v4951 = vsel %vm4950, %v4939, %v4941
      %v4952 = vsel %vm4950, %v4941, %v4943
      %v4953 = vsel %vm4950, %v4945, %v4947
      %v4954 = vsel %vm4950, %v4947, %v4949
      %v4959 = vadd.f32 %v4913, %v4951
      %v4960 = vadd.f32 %v4916, %v4952
      %v4961 = vadd.f32 %v4922, %v4953
      %v4962 = vadd.f32 %v4923, %v4954
      %4965 = vrot.lane.b32.xlu0 %v4349, 112
      %v4966 = vpop.permute.xlu0 %4965
      %4967 = vrot.lane.b32.xlu0 %v4533, 112
      %v4968 = vpop.permute.xlu0 %4967
      %4969 = vrot.lane.b32.xlu0 %v4352, 112
      %v4970 = vpop.permute.xlu0 %4969
      %4971 = vrot.lane.b32.xlu0 %v4536, 112
      %v4972 = vpop.permute.xlu0 %4971
      %vm4973 = vcmask 916480
      %v4974 = vsel %vm4973, %v4966, %v4968
      %v4975 = vsel %vm4973, %v4970, %v4972
      %v4980 = vadd.f32 %v4959, %v4974
      %v4981 = vadd.f32 %v4960, %v4968
      %v4982 = vadd.f32 %v4961, %v4975
      %v4983 = vadd.f32 %v4962, %v4972
      %vm4988 = vcmask 1040384
      %v4989 = vrot.slane %v4533, 7
      %v4990 = vrot.slane %v4717, 7
      %v4991 = vrot.slane %v4901, 7
      %v4992 = vrot.slane %v4536, 7
      %v4993 = vsel %vm4988, %v4989, %v4992
      %v4994 = vrot.slane %v4720, 7
      %v4995 = vsel %vm4988, %v4990, %v4994
      %v4996 = vrot.slane %v4904, 7
      %v4997 = vsel %vm4988, %v4991, %v4996
      %4998 = vrot.lane.b32.xlu0 %v4989, 40
      %v4999 = vpop.permute.xlu0 %4998
      %5000 = vrot.lane.b32.xlu0 %v4990, 40
      %v5001 = vpop.permute.xlu0 %5000
      %5002 = vrot.lane.b32.xlu0 %v4991, 40
      %v5003 = vpop.permute.xlu0 %5002
      %5004 = vrot.lane.b32.xlu0 %v4993, 40
      %v5005 = vpop.permute.xlu0 %5004
      %5006 = vrot.lane.b32.xlu0 %v4995, 40
      %v5007 = vpop.permute.xlu0 %5006
      %5008 = vrot.lane.b32.xlu0 %v4997, 40
      %v5009 = vpop.permute.xlu0 %5008
      %vm5010 = vcmask 326656
      %v5011 = vsel %vm5010, %v4999, %v5001
      %v5012 = vsel %vm5010, %v5001, %v5003
      %v5013 = vsel %vm5010, %v5005, %v5007
      %v5014 = vsel %vm5010, %v5007, %v5009
      %v5019 = vsel %vm4988, 0.0, %v5011
      %v5020 = vsel %vm4988, 0.0, %v5012
      %v5021 = vadd.f32 %v4980, %v5019
      %v5022 = vadd.f32 %v4981, %v5020
      %v5023 = vadd.f32 %v4982, %v5013
      %v5024 = vadd.f32 %v4983, %v5014
      %v5025 = vld [vmem:[%s3] sm:$0xff]
      %v5026 = vld [vmem:[%s3 + $0x8] sm:$0xff]
      %v5027 = vld [vmem:[%s3 + $0x10] sm:$0x7]
      %v5028 = vld [vmem:[%s3 + $0x18] sm:$0x7]
      %v5029 = vmul.f32 %v5021, %v5025
      %v5030 = vmul.f32 %v5022, %v5026
      %v5031 = vmul.f32 %v5023, %v5027
      %v5032 = vmul.f32 %v5024, %v5028
      %5033 = vst [vmem:[%s217] sm:$0xff] %v5029
      %vm5034 = vcmask 588800
      %5035 = vst.msk [vmem:[%s217 + $0x8] sm:$0xff] %vm5034, %v5030
      %5036 = vst [vmem:[%s217 + $0x10] sm:$0x7] %v5031
      %vm5037 = vcmask 583680
      %5038 = vst.msk [vmem:[%s217 + $0x18] sm:$0x7] %vm5037, %v5032
      %p5039 = scmp.lt.s32.totalorder %s15, 1
      %s5040 = scalar_select %p5039, %s15, 1
      %s5041 = smul.addr %s5040, 4
      %s5042 = smul.addr %s5041, 8
      %s5043 = scalar_lea.vmem %s4, %s5042
      // Predicated region
      $region37: #{tpu_custom_call.1} parent=35 // pred_check
        %p5044 = pneg %p127
      $region38: #{tpu_custom_call.1} parent=35 // pred_check_branch
        %5046 = sbr.rel (%p5044) target = $region40
      $region39: #{tpu_custom_call.1} parent=35 // pred_region
        _
      $region40: #{tpu_custom_call.1} parent=35 // pred_fallthru
        _
    $region36: #{tpu_custom_call.1} parent=5 // pred_fallthru
      _
    %p5047 = scmp.le.s32.totalorder 2, %s10
    // Predicated region
    $region41: #{tpu_custom_call.1} parent=5 // pred_check
      %p5048 = pneg %p5047
    $region42: #{tpu_custom_call.1} parent=5 // pred_check_branch
      %5050 = sbr.rel (%p5048) target = $region44
    $region43: #{tpu_custom_call.1} parent=5 // pred_region
      %s5051 = ssub.s32 %s10, 2
      // Predicated region
      $region45: #{tpu_custom_call.1} parent=43 // pred_check
        %p5052 = pneg %p133
      $region46: #{tpu_custom_call.1} parent=43 // pred_check_branch
        %5054 = sbr.rel (%p5052) target = $region48
      $region47: #{tpu_custom_call.1} parent=43 // pred_region
        %p5055 = scmp.lt.s32.totalorder %s16, 1
        %s5056 = scalar_select %p5055, %s16, 1
        %s5057 = smul.addr %s5056, 4
        %s5058 = smul.addr %s5057, 8
        %s5059 = scalar_lea.vmem %s4, %s5058
      $region48: #{tpu_custom_call.1} parent=43 // pred_fallthru
        _
    $region44: #{tpu_custom_call.1} parent=5 // pred_fallthru
      _
  $region6: #{tpu_custom_call.1} parent=0 // loop_footer
    %s14 = sadd.s32 1, %s10
  $region7: #{tpu_custom_call.1} parent=0 // loop_footer_branch
    %9 = sbr.rel target = $region3
  $region8: #{tpu_custom_call.1} parent=0 // loop_exit
    _

</llo_original>
